<compile_context>
chip_gen: v7x
topology: tpu7x:2x2x1
jax: 0.10.0
libtpu: 0.0.40
codegen_flags: <defaults>
</compile_context>

<pallas_src>
import functools

import jax
import jax.numpy as jnp
from jax.experimental import pallas as pl
from jax.experimental.pallas import tpu as pltpu


_EPS = 1e-5
_ACC_ELEMS = 1 << 19        # target f32 accumulator elements per conv step (~2 MiB)
_APPLY_ELEMS = 1 << 20      # target bf16 elements per IN-apply step (~2 MiB)
_VMEM_FLOOR = 32 * 1024 * 1024
_VMEM_CEIL = 64 * 1024 * 1024   # stay within v7x physical VMEM


def _round_up(x, m):
    return -(-x // m) * m


def _largest_divisor(n, cap, multiple=1):
    """Largest d <= cap with n % d == 0 and d % multiple == 0 (fallback: n)."""
    cap = int(min(cap, n))
    d = cap - cap % multiple
    while d >= multiple:
        if n % d == 0:
            return d
        d -= multiple
    return n


def _conv_vmem_limit(hp, wp, cin, kk, cout, rb, ow, out_itemsize):
    cin_p = _round_up(cin, 128)
    cout_p = _round_up(cout, 128)
    est = (2 * _round_up(hp * wp, 16) * cin_p * 2            # input, double buffered, bf16
           + 2 * _round_up(kk * cin, 16) * cout_p * 2        # resident weights
           + 2 * _round_up(rb * ow, 16) * cout_p * out_itemsize
           + _round_up(rb * ow, 8) * cout_p * 4              # f32 accumulator scratch
           + (8 << 20))                                      # stats + compiler headroom
    return int(min(max(_VMEM_FLOOR, est), _VMEM_CEIL))


# ---------------------------------------------------------------------------
# Pallas kernels
# ---------------------------------------------------------------------------

def _conv_kernel(x_ref, w_ref, b_ref, o_ref, sum_ref, sq_ref, acc_ref,
                 *, kh, kw, rb, ow, cin, cout, activation):
    """Direct 'valid' stride-1 conv over one output-row block of one image.

    x_ref:   (1, Hp, Wp, Cin)   bf16 full padded image (revisited across row blocks)
    w_ref:   (kh*kw, Cin, Cout) bf16 resident weights
    b_ref:   (1, Cout)          f32 bias
    o_ref:   (1, rb, OW, Cout)  bf16/f32 output row block
    sum/sq:  (1, 1, 1, Cout)    f32 partial per-channel InstanceNorm statistics
    acc_ref: (rb*OW, Cout)      f32 scratch accumulator
    """
    row0 = pl.program_id(1) * rb
    for i in range(kh):
        rows = x_ref[0, pl.ds(row0 + i, rb), :, :]                # (rb, Wp, Cin)
        for j in range(kw):
            a = jax.lax.slice_in_dim(rows, j, j + ow, axis=1)     # (rb, OW, Cin)
            a = a.reshape(rb * ow, cin)
            contrib = jnp.dot(a, w_ref[i * kw + j],
                              preferred_element_type=jnp.float32)
            if i == 0 and j == 0:
                acc_ref[...] = contrib
            else:
                acc_ref[...] += contrib

    y = acc_ref[...] + b_ref[...]
    # Fused per-block InstanceNorm statistics (pre-activation, f32).
    sum_ref[...] = jnp.sum(y, axis=0, keepdims=True).reshape(1, 1, 1, cout)
    sq_ref[...] = jnp.sum(y * y, axis=0, keepdims=True).reshape(1, 1, 1, cout)
    if activation == "tanh":
        y = jnp.tanh(y)
    o_ref[...] = y.reshape(1, rb, ow, cout).astype(o_ref.dtype)


def _in_apply_relu_kernel(x_ref, m_ref, r_ref, o_ref):
    # InstanceNorm2d (affine=False, eps=1e-5, biased var) + ReLU, bf16 in/out.
    y = (x_ref[...].astype(jnp.float32) - m_ref[...]) * r_ref[...]
    o_ref[...] = jnp.maximum(y, 0.0).astype(o_ref.dtype)


def _in_apply_add_kernel(x_ref, m_ref, r_ref, res_ref, o_ref):
    # InstanceNorm2d followed by residual add (no activation), bf16 in/out.
    y = (x_ref[...].astype(jnp.float32) - m_ref[...]) * r_ref[...]
    o_ref[...] = (y + res_ref[...].astype(jnp.float32)).astype(o_ref.dtype)


# ---------------------------------------------------------------------------
# Convolution wrappers
# ---------------------------------------------------------------------------

def _direct_conv(x_nhwc, wmat, bias, kh, kw, activation=None,
                 out_dtype=jnp.bfloat16):
    n, hp, wp, cin = x_nhwc.shape
    kk, _, cout = wmat.shape
    oh = hp - kh + 1
    ow = wp - kw + 1
    cap = max(1, _ACC_ELEMS // max(1, ow * _round_up(cout, 128)))
    rb = _largest_divisor(oh, cap)
    nr = oh // rb
    limit = _conv_vmem_limit(hp, wp, cin, kk, cout, rb, ow,
                             jnp.dtype(out_dtype).itemsize)
    kernel = functools.partial(_conv_kernel, kh=kh, kw=kw, rb=rb, ow=ow,
                               cin=cin, cout=cout, activation=activation)
    out, psum, psq = pl.pallas_call(
        kernel,
        out_shape=(jax.ShapeDtypeStruct((n, oh, ow, cout), out_dtype),
                   jax.ShapeDtypeStruct((n, nr, 1, cout), jnp.float32),
                   jax.ShapeDtypeStruct((n, nr, 1, cout), jnp.float32)),
        grid=(n, nr),
        in_specs=[
            pl.BlockSpec((1, hp, wp, cin), lambda b, r: (b, 0, 0, 0)),
            pl.BlockSpec((kk, cin, cout), lambda b, r: (0, 0, 0)),
            pl.BlockSpec((1, cout), lambda b, r: (0, 0)),
        ],
        out_specs=(
            pl.BlockSpec((1, rb, ow, cout), lambda b, r: (b, r, 0, 0)),
            pl.BlockSpec((1, 1, 1, cout), lambda b, r: (b, r, 0, 0)),
            pl.BlockSpec((1, 1, 1, cout), lambda b, r: (b, r, 0, 0)),
        ),
        scratch_shapes=[pltpu.VMEM((rb * ow, cout), jnp.float32)],
        compiler_params=pltpu.CompilerParams(
            dimension_semantics=("parallel", "parallel"),
            vmem_limit_bytes=limit),
    )(x_nhwc.astype(jnp.bfloat16), wmat.astype(jnp.bfloat16),
      bias.reshape(1, cout).astype(jnp.float32))
    return out, psum, psq


def conv2d(x_nhwc, w_oihw, bias, stride=1, activation=None,
           out_dtype=jnp.bfloat16):
    """'Valid' conv on an already-padded NHWC input.

    Returns (output, partial_sum, partial_sumsq) where the partial statistics
    are per-(image, row-block) f32 arrays of shape (N, num_row_blocks, 1, Cout).
    """
    cout, cin, kh, kw = w_oihw.shape
    wmat = jnp.transpose(w_oihw, (2, 3, 1, 0)).reshape(kh * kw, cin, cout)
    if stride == 1:
        return _direct_conv(x_nhwc, wmat, bias, kh, kw, activation, out_dtype)

    # Strided conv: tap-major channel im2col (plain JAX) feeding a 1x1 direct
    # conv (only 2.25x traffic blow-up at k=3, s=2 thanks to the 4x downsample).
    # TODO(synk): fold the stride into the direct kernel via paired-column
    # weights to remove this remaining im2col entirely.
    n, hp, wp, _ = x_nhwc.shape
    oh = (hp - kh) // stride + 1
    ow = (wp - kw) // stride + 1
    xb = x_nhwc.astype(jnp.bfloat16)
    taps = []
    for i in range(kh):
        for j in range(kw):
            taps.append(xb[:, i:i + stride * oh:stride,
                           j:j + stride * ow:stride, :])
    patches = jnp.concatenate(taps, axis=-1)          # (n, oh, ow, kh*kw*cin)
    wmat = wmat.reshape(1, kh * kw * cin, cout)
    return _direct_conv(patches, wmat, bias, 1, 1, activation, out_dtype)


# ---------------------------------------------------------------------------
# InstanceNorm (stats fused into conv; apply pass here)
# ---------------------------------------------------------------------------

def _finish_stats(psum, psq, count, fold=1):
    """Reduce per-block partial stats -> per-channel (mean, rstd), (N,1,C)."""
    s = jnp.sum(psum, axis=(1, 2))
    q = jnp.sum(psq, axis=(1, 2))
    if fold > 1:                                     # fold pixel-shuffle phases
        n, c4 = s.shape
        s = s.reshape(n, fold, c4 // fold).sum(axis=1)
        q = q.reshape(n, fold, c4 // fold).sum(axis=1)
    mean = s / count
    # NOTE: E[x^2]-E[x]^2 in f32 (clamped); Welford if bit parity is required.
    var = jnp.maximum(q / count - mean * mean, 0.0)
    rstd = jax.lax.rsqrt(var + _EPS)
    return mean[:, None, :], rstd[:, None, :]


def instance_norm_apply(x_nhwc, mean, rstd, residual=None):
    n, h, w, c = x_nhwc.shape
    hw = h * w
    x3 = x_nhwc.reshape(n, hw, c)
    cap = max(8, _APPLY_ELEMS // max(1, _round_up(c, 128)))
    thw = _largest_divisor(hw, cap, multiple=8)
    nt = hw // thw
    xspec = pl.BlockSpec((1, thw, c), lambda b, t: (b, t, 0))
    sspec = pl.BlockSpec((1, 1, c), lambda b, t: (b, 0, 0))
    if residual is None:
        kernel, in_specs = _in_apply_relu_kernel, [xspec, sspec, sspec]
        args = (x3, mean, rstd)
    else:
        kernel, in_specs = _in_apply_add_kernel, [xspec, sspec, sspec, xspec]
        args = (x3, mean, rstd, residual.reshape(n, hw, c))
    y = pl.pallas_call(
        kernel,
        out_shape=jax.ShapeDtypeStruct((n, hw, c), jnp.bfloat16),
        grid=(n, nt),
        in_specs=in_specs,
        out_specs=xspec,
        compiler_params=pltpu.CompilerParams(
            dimension_semantics=("parallel", "parallel"),
            vmem_limit_bytes=_VMEM_FLOOR),
    )(*args)
    return y.reshape(n, h, w, c)


# ---------------------------------------------------------------------------
# ConvTranspose2d(k=3, s=2, p=1, output_padding=1)
# ---------------------------------------------------------------------------

def conv_transpose2d_s2(x_nhwc, w_t_iohw, bias):
    """Phase-decomposed transpose conv: one 2x2 conv -> 4*Cout channels, then a
    pixel shuffle.  Returns (shuffled bf16 output, IN mean, IN rstd)."""
    n, h, w, cin = x_nhwc.shape
    cout = w_t_iohw.shape[1]
    wt = jnp.transpose(w_t_iohw, (1, 0, 2, 3))       # (cout, cin, 3, 3)

    wc = jnp.zeros((4, cout, cin, 2, 2), wt.dtype)
    wc = wc.at[0, :, :, 0, 0].set(wt[:, :, 1, 1])    # (even row, even col)
    wc = wc.at[1, :, :, 0, 0].set(wt[:, :, 1, 2])    # (even row, odd col)
    wc = wc.at[1, :, :, 0, 1].set(wt[:, :, 1, 0])
    wc = wc.at[2, :, :, 0, 0].set(wt[:, :, 2, 1])    # (odd row, even col)
    wc = wc.at[2, :, :, 1, 0].set(wt[:, :, 0, 1])
    wc = wc.at[3, :, :, 0, 0].set(wt[:, :, 2, 2])    # (odd row, odd col)
    wc = wc.at[3, :, :, 0, 1].set(wt[:, :, 2, 0])
    wc = wc.at[3, :, :, 1, 0].set(wt[:, :, 0, 2])
    wc = wc.at[3, :, :, 1, 1].set(wt[:, :, 0, 0])
    wc = wc.reshape(4 * cout, cin, 2, 2)
    bc = jnp.concatenate([bias] * 4)

    xp = jnp.pad(x_nhwc, ((0, 0), (0, 1), (0, 1), (0, 0)))
    y, psum, psq = conv2d(xp, wc, bc, stride=1)       # (n, h, w, 4*cout) bf16
    mean, rstd = _finish_stats(psum, psq, 4 * h * w, fold=4)

    # Pixel-shuffle interleave (plain JAX, bf16 so the permute traffic is halved).
    # TODO(synk): fuse this permute into the IN apply kernel's out index_map.
    y = y.reshape(n, h, w, 2, 2, cout)
    y = jnp.transpose(y, (0, 1, 3, 2, 4, 5)).reshape(n, 2 * h, 2 * w, cout)
    return y, mean, rstd


def reflect_pad(x, p):
    return jnp.pad(x, ((0, 0), (p, p), (p, p), (0, 0)), mode="reflect")


def zero_pad(x, p):
    return jnp.pad(x, ((0, 0), (p, p), (p, p), (0, 0)))


# ---------------------------------------------------------------------------
# Generator: parameters + forward
# ---------------------------------------------------------------------------

def init_generator_params(key, in_channels, out_channels, n_feats, n_res_blocks):
    def nrm(k, shape):
        return jax.random.normal(k, shape, jnp.float32) * 0.05

    p = {}
    keys = iter(jax.random.split(key, 64))
    f = n_feats
    p["stem_w"] = nrm(next(keys), (f, in_channels, 7, 7))
    p["stem_b"] = nrm(next(keys), (f,))
    cin = f
    for d in range(2):
        cout = cin * 2
        p[f"down{d}_w"] = nrm(next(keys), (cout, cin, 3, 3))
        p[f"down{d}_b"] = nrm(next(keys), (cout,))
        cin = cout
    for r in range(n_res_blocks):
        p[f"res{r}_w1"] = nrm(next(keys), (cin, cin, 3, 3))
        p[f"res{r}_b1"] = nrm(next(keys), (cin,))
        p[f"res{r}_w2"] = nrm(next(keys), (cin, cin, 3, 3))
        p[f"res{r}_b2"] = nrm(next(keys), (cin,))
    for u in range(2):
        cout = cin // 2
        # ConvTranspose2d weight layout: (in_channels, out_channels, kH, kW)
        p[f"up{u}_w"] = nrm(next(keys), (cin, cout, 3, 3))
        p[f"up{u}_b"] = nrm(next(keys), (cout,))
        cin = cout
    p["head_w"] = nrm(next(keys), (out_channels, cin, 7, 7))
    p["head_b"] = nrm(next(keys), (out_channels,))
    return p


def generator_forward(params, x_nchw, n_res_blocks):
    h = jnp.transpose(x_nchw, (0, 2, 3, 1)).astype(jnp.bfloat16)   # NCHW -> NHWC

    # stem: ReflectionPad2d(3) -> Conv(7) -> IN -> ReLU
    y, ps, pq = conv2d(reflect_pad(h, 3), params["stem_w"], params["stem_b"])
    m, r = _finish_stats(ps, pq, y.shape[1] * y.shape[2])
    h = instance_norm_apply(y, m, r)

    # downsampling: Conv(3, s=2, p=1) -> IN -> ReLU
    for d in range(2):
        y, ps, pq = conv2d(zero_pad(h, 1), params[f"down{d}_w"],
                           params[f"down{d}_b"], stride=2)
        m, r = _finish_stats(ps, pq, y.shape[1] * y.shape[2])
        h = instance_norm_apply(y, m, r)

    # residual blocks
    for i in range(n_res_blocks):
        res = h
        y, ps, pq = conv2d(reflect_pad(h, 1), params[f"res{i}_w1"],
                           params[f"res{i}_b1"])
        m, r = _finish_stats(ps, pq, y.shape[1] * y.shape[2])
        t = instance_norm_apply(y, m, r)
        y, ps, pq = conv2d(reflect_pad(t, 1), params[f"res{i}_w2"],
                           params[f"res{i}_b2"])
        m, r = _finish_stats(ps, pq, y.shape[1] * y.shape[2])
        h = instance_norm_apply(y, m, r, residual=res)

    # upsampling: ConvTranspose(3, s=2, p=1, op=1) -> IN -> ReLU
    for u in range(2):
        y, m, r = conv_transpose2d_s2(h, params[f"up{u}_w"], params[f"up{u}_b"])
        h = instance_norm_apply(y, m, r)

    # head: ReflectionPad2d(3) -> Conv(7) -> Tanh (fused into the conv epilogue)
    y, _, _ = conv2d(reflect_pad(h, 3), params["head_w"], params["head_b"],
                     activation="tanh", out_dtype=jnp.float32)
    return jnp.transpose(y, (0, 3, 1, 2))                          # NHWC -> NCHW


# ---------------------------------------------------------------------------
# Numerical self-checks (Pallas conv paths vs XLA references)
# ---------------------------------------------------------------------------

def _check_against_xla(key):
    k1, k2, k3, k4, k5 = jax.random.split(key, 5)

    def ref_conv(xp, w_oihw, b, stride):
        w = jnp.transpose(w_oihw.astype(jnp.bfloat16).astype(jnp.float32),
                          (2, 3, 1, 0))
        out = jax.lax.conv_general_dilated(
            xp.astype(jnp.bfloat16).astype(jnp.float32), w,
            (stride, stride), "VALID",
            dimension_numbers=("NHWC", "HWIO", "NHWC"))
        return out + b.reshape(1, 1, 1, -1)

    x = jax.random.normal(k1, (1, 9, 7, 5), jnp.float32)      # odd, non-square
    w = jax.random.normal(k2, (6, 5, 3, 3), jnp.float32) * 0.1
    b = jax.random.normal(k3, (6,), jnp.float32) * 0.1

    got, _, _ = conv2d(x, w, b)                                 # stride-1 direct
    assert float(jnp.max(jnp.abs(got.astype(jnp.float32) -
                                 ref_conv(x, w, b, 1)))) < 2e-2

    xp = zero_pad(x, 1)                                         # Conv2d(3, s=2, p=1)
    got, _, _ = conv2d(xp, w, b, stride=2)
    assert float(jnp.max(jnp.abs(got.astype(jnp.float32) -
                                 ref_conv(xp, w, b, 2)))) < 2e-2

    wt = jax.random.normal(k4, (5, 4, 3, 3), jnp.float32) * 0.1  # ConvTranspose2d
    bt = jax.random.normal(k5, (4,), jnp.float32) * 0.1
    got, _, _ = conv_transpose2d_s2(x.astype(jnp.bfloat16), wt, bt)
    w_hwio = jnp.transpose(wt.astype(jnp.bfloat16).astype(jnp.float32),
                           (2, 3, 0, 1))[::-1, ::-1]
    ref = jax.lax.conv_general_dilated(
        x.astype(jnp.bfloat16).astype(jnp.float32), w_hwio, (1, 1),
        ((1, 2), (1, 2)), lhs_dilation=(2, 2),
        dimension_numbers=("NHWC", "HWIO", "NHWC")) + bt.reshape(1, 1, 1, -1)
    assert float(jnp.max(jnp.abs(got.astype(jnp.float32) - ref))) < 2e-2


# ---------------------------------------------------------------------------
# Demo
# ---------------------------------------------------------------------------

if __name__ == "__main__":
    B, IN_CH, OUT_CH, HW = 2, 3, 3, 16
    N_FEATS, N_RES = 8, 2   # small config for the demo (same architecture)

    key = jax.random.PRNGKey(0)
    k_check, k_param, k_x = jax.random.split(key, 3)

    _check_against_xla(k_check)

    params = init_generator_params(k_param, IN_CH, OUT_CH, N_FEATS, N_RES)
    x = jax.random.normal(k_x, (B, IN_CH, HW, HW), jnp.float32)

    fwd = jax.jit(functools.partial(generator_forward, n_res_blocks=N_RES))
    y = jax.block_until_ready(fwd(params, x))

    assert y.shape == (B, OUT_CH, HW, HW), y.shape
    assert bool(jnp.all(jnp.isfinite(y)))
    assert bool(jnp.all(jnp.abs(y) <= 1.0))   # tanh output range
    print("KERNEL_OK")
</pallas_src>

<mosaic_0001>
module attributes {stable_mosaic.version = 11 : i64} {
  func.func @_conv_kernel(%arg0: i32, %arg1: i32, %arg2: memref<1x9x7x5xbf16, #tpu.memory_space<vmem>>, %arg3: memref<9x5x6xbf16, #tpu.memory_space<vmem>>, %arg4: memref<1x6xf32, #tpu.memory_space<vmem>>, %arg5: memref<1x7x5x6xbf16, #tpu.memory_space<vmem>>, %arg6: memref<1x1x1x6xf32, #tpu.memory_space<vmem>>, %arg7: memref<1x1x1x6xf32, #tpu.memory_space<vmem>>, %arg8: memref<35x6xf32, #tpu.memory_space<vmem>>) attributes {dimension_semantics = [#tpu.dimension_semantics<parallel>, #tpu.dimension_semantics<parallel>], iteration_bounds = array<i64: 1, 1>, scalar_prefetch = 0 : i64, scratch_operands = 1 : i64, tpu.core_type = #tpu.core_type<tc>, window_params = [{transform_indices = @transform_0, window_bounds = array<i64: 1, 9, 7, 5>}, {pipeline_mode = #tpu.pipeline_mode<synchronous>, transform_indices = @transform_1, window_bounds = array<i64: 9, 5, 6>}, {pipeline_mode = #tpu.pipeline_mode<synchronous>, transform_indices = @transform_2, window_bounds = array<i64: 1, 6>}, {transform_indices = @transform_3, window_bounds = array<i64: 1, 7, 5, 6>}, {transform_indices = @transform_4, window_bounds = array<i64: 1, 1, 1, 6>}, {transform_indices = @transform_5, window_bounds = array<i64: 1, 1, 1, 6>}]} {
    %c7_i32 = arith.constant 7 : i32
    %0 = arith.muli %arg1, %c7_i32 : i32
    %c0_i32 = arith.constant 0 : i32
    %1 = arith.addi %0, %c0_i32 : i32
    %c0 = arith.constant 0 : index
    %2 = arith.index_cast %1 : i32 to index
    %c0_0 = arith.constant 0 : index
    %c0_1 = arith.constant 0 : index
    %3 = vector.load %arg2[%c0, %2, %c0_0, %c0_1] : memref<1x9x7x5xbf16, #tpu.memory_space<vmem>>, vector<1x7x7x5xbf16>
    %4 = vector.shape_cast %3 : vector<1x7x7x5xbf16> to vector<7x7x5xbf16>
    %5 = vector.extract_strided_slice %4 {offsets = [0, 0, 0], sizes = [7, 5, 5], strides = [1, 1, 1]} : vector<7x7x5xbf16> to vector<7x5x5xbf16>
    %6 = vector.shape_cast %5 : vector<7x5x5xbf16> to vector<35x5xbf16>
    %c0_2 = arith.constant 0 : index
    %c0_3 = arith.constant 0 : index
    %c0_4 = arith.constant 0 : index
    %7 = vector.load %arg3[%c0_2, %c0_3, %c0_4] : memref<9x5x6xbf16, #tpu.memory_space<vmem>>, vector<1x5x6xbf16>
    %8 = vector.shape_cast %7 : vector<1x5x6xbf16> to vector<5x6xbf16>
    %cst = arith.constant dense<0.000000e+00> : vector<35x6xf32>
    %9 = tpu.matmul %6, %8, %cst {dimension_numbers = #tpu.dot_dimension_numbers<[1], [0], [0], [1], [0, 0, 1, 1], [], []>} : vector<35x5xbf16>, vector<5x6xbf16>, vector<35x6xf32> -> vector<35x6xf32>
    %c0_5 = arith.constant 0 : index
    %c0_6 = arith.constant 0 : index
    %10 = vector.load %arg8[%c0_5, %c0_6] : memref<35x6xf32, #tpu.memory_space<vmem>>, vector<35x6xf32>
    tpu.vector_store %arg8[%c0_5, %c0_6], %9 {strides = array<i32>} : memref<35x6xf32, #tpu.memory_space<vmem>>, vector<35x6xf32>,
    %11 = vector.extract_strided_slice %4 {offsets = [0, 1, 0], sizes = [7, 5, 5], strides = [1, 1, 1]} : vector<7x7x5xbf16> to vector<7x5x5xbf16>
    %12 = vector.shape_cast %11 : vector<7x5x5xbf16> to vector<35x5xbf16>
    %c1 = arith.constant 1 : index
    %c0_7 = arith.constant 0 : index
    %c0_8 = arith.constant 0 : index
    %13 = vector.load %arg3[%c1, %c0_7, %c0_8] : memref<9x5x6xbf16, #tpu.memory_space<vmem>>, vector<1x5x6xbf16>
    %14 = vector.shape_cast %13 : vector<1x5x6xbf16> to vector<5x6xbf16>
    %cst_9 = arith.constant dense<0.000000e+00> : vector<35x6xf32>
    %15 = tpu.matmul %12, %14, %cst_9 {dimension_numbers = #tpu.dot_dimension_numbers<[1], [0], [0], [1], [0, 0, 1, 1], [], []>} : vector<35x5xbf16>, vector<5x6xbf16>, vector<35x6xf32> -> vector<35x6xf32>
    %c0_10 = arith.constant 0 : index
    %c0_11 = arith.constant 0 : index
    %16 = vector.load %arg8[%c0_10, %c0_11] : memref<35x6xf32, #tpu.memory_space<vmem>>, vector<35x6xf32>
    %17 = arith.addf %16, %15 : vector<35x6xf32>
    %c0_12 = arith.constant 0 : index
    %c0_13 = arith.constant 0 : index
    %18 = vector.load %arg8[%c0_12, %c0_13] : memref<35x6xf32, #tpu.memory_space<vmem>>, vector<35x6xf32>
    tpu.vector_store %arg8[%c0_12, %c0_13], %17 {strides = array<i32>} : memref<35x6xf32, #tpu.memory_space<vmem>>, vector<35x6xf32>,
    %19 = vector.extract_strided_slice %4 {offsets = [0, 2, 0], sizes = [7, 5, 5], strides = [1, 1, 1]} : vector<7x7x5xbf16> to vector<7x5x5xbf16>
    %20 = vector.shape_cast %19 : vector<7x5x5xbf16> to vector<35x5xbf16>
    %c2 = arith.constant 2 : index
    %c0_14 = arith.constant 0 : index
    %c0_15 = arith.constant 0 : index
    %21 = vector.load %arg3[%c2, %c0_14, %c0_15] : memref<9x5x6xbf16, #tpu.memory_space<vmem>>, vector<1x5x6xbf16>
    %22 = vector.shape_cast %21 : vector<1x5x6xbf16> to vector<5x6xbf16>
    %cst_16 = arith.constant dense<0.000000e+00> : vector<35x6xf32>
    %23 = tpu.matmul %20, %22, %cst_16 {dimension_numbers = #tpu.dot_dimension_numbers<[1], [0], [0], [1], [0, 0, 1, 1], [], []>} : vector<35x5xbf16>, vector<5x6xbf16>, vector<35x6xf32> -> vector<35x6xf32>
    %c0_17 = arith.constant 0 : index
    %c0_18 = arith.constant 0 : index
    %24 = vector.load %arg8[%c0_17, %c0_18] : memref<35x6xf32, #tpu.memory_space<vmem>>, vector<35x6xf32>
    %25 = arith.addf %24, %23 : vector<35x6xf32>
    %c0_19 = arith.constant 0 : index
    %c0_20 = arith.constant 0 : index
    %26 = vector.load %arg8[%c0_19, %c0_20] : memref<35x6xf32, #tpu.memory_space<vmem>>, vector<35x6xf32>
    tpu.vector_store %arg8[%c0_19, %c0_20], %25 {strides = array<i32>} : memref<35x6xf32, #tpu.memory_space<vmem>>, vector<35x6xf32>,
    %c1_i32 = arith.constant 1 : i32
    %27 = arith.addi %0, %c1_i32 : i32
    %c0_21 = arith.constant 0 : index
    %28 = arith.index_cast %27 : i32 to index
    %c0_22 = arith.constant 0 : index
    %c0_23 = arith.constant 0 : index
    %29 = vector.load %arg2[%c0_21, %28, %c0_22, %c0_23] : memref<1x9x7x5xbf16, #tpu.memory_space<vmem>>, vector<1x7x7x5xbf16>
    %30 = vector.shape_cast %29 : vector<1x7x7x5xbf16> to vector<7x7x5xbf16>
    %31 = vector.extract_strided_slice %30 {offsets = [0, 0, 0], sizes = [7, 5, 5], strides = [1, 1, 1]} : vector<7x7x5xbf16> to vector<7x5x5xbf16>
    %32 = vector.shape_cast %31 : vector<7x5x5xbf16> to vector<35x5xbf16>
    %c3 = arith.constant 3 : index
    %c0_24 = arith.constant 0 : index
    %c0_25 = arith.constant 0 : index
    %33 = vector.load %arg3[%c3, %c0_24, %c0_25] : memref<9x5x6xbf16, #tpu.memory_space<vmem>>, vector<1x5x6xbf16>
    %34 = vector.shape_cast %33 : vector<1x5x6xbf16> to vector<5x6xbf16>
    %cst_26 = arith.constant dense<0.000000e+00> : vector<35x6xf32>
    %35 = tpu.matmul %32, %34, %cst_26 {dimension_numbers = #tpu.dot_dimension_numbers<[1], [0], [0], [1], [0, 0, 1, 1], [], []>} : vector<35x5xbf16>, vector<5x6xbf16>, vector<35x6xf32> -> vector<35x6xf32>
    %c0_27 = arith.constant 0 : index
    %c0_28 = arith.constant 0 : index
    %36 = vector.load %arg8[%c0_27, %c0_28] : memref<35x6xf32, #tpu.memory_space<vmem>>, vector<35x6xf32>
    %37 = arith.addf %36, %35 : vector<35x6xf32>
    %c0_29 = arith.constant 0 : index
    %c0_30 = arith.constant 0 : index
    %38 = vector.load %arg8[%c0_29, %c0_30] : memref<35x6xf32, #tpu.memory_space<vmem>>, vector<35x6xf32>
    tpu.vector_store %arg8[%c0_29, %c0_30], %37 {strides = array<i32>} : memref<35x6xf32, #tpu.memory_space<vmem>>, vector<35x6xf32>,
    %39 = vector.extract_strided_slice %30 {offsets = [0, 1, 0], sizes = [7, 5, 5], strides = [1, 1, 1]} : vector<7x7x5xbf16> to vector<7x5x5xbf16>
    %40 = vector.shape_cast %39 : vector<7x5x5xbf16> to vector<35x5xbf16>
    %c4 = arith.constant 4 : index
    %c0_31 = arith.constant 0 : index
    %c0_32 = arith.constant 0 : index
    %41 = vector.load %arg3[%c4, %c0_31, %c0_32] : memref<9x5x6xbf16, #tpu.memory_space<vmem>>, vector<1x5x6xbf16>
    %42 = vector.shape_cast %41 : vector<1x5x6xbf16> to vector<5x6xbf16>
    %cst_33 = arith.constant dense<0.000000e+00> : vector<35x6xf32>
    %43 = tpu.matmul %40, %42, %cst_33 {dimension_numbers = #tpu.dot_dimension_numbers<[1], [0], [0], [1], [0, 0, 1, 1], [], []>} : vector<35x5xbf16>, vector<5x6xbf16>, vector<35x6xf32> -> vector<35x6xf32>
    %c0_34 = arith.constant 0 : index
    %c0_35 = arith.constant 0 : index
    %44 = vector.load %arg8[%c0_34, %c0_35] : memref<35x6xf32, #tpu.memory_space<vmem>>, vector<35x6xf32>
    %45 = arith.addf %44, %43 : vector<35x6xf32>
    %c0_36 = arith.constant 0 : index
    %c0_37 = arith.constant 0 : index
    %46 = vector.load %arg8[%c0_36, %c0_37] : memref<35x6xf32, #tpu.memory_space<vmem>>, vector<35x6xf32>
    tpu.vector_store %arg8[%c0_36, %c0_37], %45 {strides = array<i32>} : memref<35x6xf32, #tpu.memory_space<vmem>>, vector<35x6xf32>,
    %47 = vector.extract_strided_slice %30 {offsets = [0, 2, 0], sizes = [7, 5, 5], strides = [1, 1, 1]} : vector<7x7x5xbf16> to vector<7x5x5xbf16>
    %48 = vector.shape_cast %47 : vector<7x5x5xbf16> to vector<35x5xbf16>
    %c5 = arith.constant 5 : index
    %c0_38 = arith.constant 0 : index
    %c0_39 = arith.constant 0 : index
    %49 = vector.load %arg3[%c5, %c0_38, %c0_39] : memref<9x5x6xbf16, #tpu.memory_space<vmem>>, vector<1x5x6xbf16>
    %50 = vector.shape_cast %49 : vector<1x5x6xbf16> to vector<5x6xbf16>
    %cst_40 = arith.constant dense<0.000000e+00> : vector<35x6xf32>
    %51 = tpu.matmul %48, %50, %cst_40 {dimension_numbers = #tpu.dot_dimension_numbers<[1], [0], [0], [1], [0, 0, 1, 1], [], []>} : vector<35x5xbf16>, vector<5x6xbf16>, vector<35x6xf32> -> vector<35x6xf32>
    %c0_41 = arith.constant 0 : index
    %c0_42 = arith.constant 0 : index
    %52 = vector.load %arg8[%c0_41, %c0_42] : memref<35x6xf32, #tpu.memory_space<vmem>>, vector<35x6xf32>
    %53 = arith.addf %52, %51 : vector<35x6xf32>
    %c0_43 = arith.constant 0 : index
    %c0_44 = arith.constant 0 : index
    %54 = vector.load %arg8[%c0_43, %c0_44] : memref<35x6xf32, #tpu.memory_space<vmem>>, vector<35x6xf32>
    tpu.vector_store %arg8[%c0_43, %c0_44], %53 {strides = array<i32>} : memref<35x6xf32, #tpu.memory_space<vmem>>, vector<35x6xf32>,
    %c2_i32 = arith.constant 2 : i32
    %55 = arith.addi %0, %c2_i32 : i32
    %c0_45 = arith.constant 0 : index
    %56 = arith.index_cast %55 : i32 to index
    %c0_46 = arith.constant 0 : index
    %c0_47 = arith.constant 0 : index
    %57 = vector.load %arg2[%c0_45, %56, %c0_46, %c0_47] : memref<1x9x7x5xbf16, #tpu.memory_space<vmem>>, vector<1x7x7x5xbf16>
    %58 = vector.shape_cast %57 : vector<1x7x7x5xbf16> to vector<7x7x5xbf16>
    %59 = vector.extract_strided_slice %58 {offsets = [0, 0, 0], sizes = [7, 5, 5], strides = [1, 1, 1]} : vector<7x7x5xbf16> to vector<7x5x5xbf16>
    %60 = vector.shape_cast %59 : vector<7x5x5xbf16> to vector<35x5xbf16>
    %c6 = arith.constant 6 : index
    %c0_48 = arith.constant 0 : index
    %c0_49 = arith.constant 0 : index
    %61 = vector.load %arg3[%c6, %c0_48, %c0_49] : memref<9x5x6xbf16, #tpu.memory_space<vmem>>, vector<1x5x6xbf16>
    %62 = vector.shape_cast %61 : vector<1x5x6xbf16> to vector<5x6xbf16>
    %cst_50 = arith.constant dense<0.000000e+00> : vector<35x6xf32>
    %63 = tpu.matmul %60, %62, %cst_50 {dimension_numbers = #tpu.dot_dimension_numbers<[1], [0], [0], [1], [0, 0, 1, 1], [], []>} : vector<35x5xbf16>, vector<5x6xbf16>, vector<35x6xf32> -> vector<35x6xf32>
    %c0_51 = arith.constant 0 : index
    %c0_52 = arith.constant 0 : index
    %64 = vector.load %arg8[%c0_51, %c0_52] : memref<35x6xf32, #tpu.memory_space<vmem>>, vector<35x6xf32>
    %65 = arith.addf %64, %63 : vector<35x6xf32>
    %c0_53 = arith.constant 0 : index
    %c0_54 = arith.constant 0 : index
    %66 = vector.load %arg8[%c0_53, %c0_54] : memref<35x6xf32, #tpu.memory_space<vmem>>, vector<35x6xf32>
    tpu.vector_store %arg8[%c0_53, %c0_54], %65 {strides = array<i32>} : memref<35x6xf32, #tpu.memory_space<vmem>>, vector<35x6xf32>,
    %67 = vector.extract_strided_slice %58 {offsets = [0, 1, 0], sizes = [7, 5, 5], strides = [1, 1, 1]} : vector<7x7x5xbf16> to vector<7x5x5xbf16>
    %68 = vector.shape_cast %67 : vector<7x5x5xbf16> to vector<35x5xbf16>
    %c7 = arith.constant 7 : index
    %c0_55 = arith.constant 0 : index
    %c0_56 = arith.constant 0 : index
    %69 = vector.load %arg3[%c7, %c0_55, %c0_56] : memref<9x5x6xbf16, #tpu.memory_space<vmem>>, vector<1x5x6xbf16>
    %70 = vector.shape_cast %69 : vector<1x5x6xbf16> to vector<5x6xbf16>
    %cst_57 = arith.constant dense<0.000000e+00> : vector<35x6xf32>
    %71 = tpu.matmul %68, %70, %cst_57 {dimension_numbers = #tpu.dot_dimension_numbers<[1], [0], [0], [1], [0, 0, 1, 1], [], []>} : vector<35x5xbf16>, vector<5x6xbf16>, vector<35x6xf32> -> vector<35x6xf32>
    %c0_58 = arith.constant 0 : index
    %c0_59 = arith.constant 0 : index
    %72 = vector.load %arg8[%c0_58, %c0_59] : memref<35x6xf32, #tpu.memory_space<vmem>>, vector<35x6xf32>
    %73 = arith.addf %72, %71 : vector<35x6xf32>
    %c0_60 = arith.constant 0 : index
    %c0_61 = arith.constant 0 : index
    %74 = vector.load %arg8[%c0_60, %c0_61] : memref<35x6xf32, #tpu.memory_space<vmem>>, vector<35x6xf32>
    tpu.vector_store %arg8[%c0_60, %c0_61], %73 {strides = array<i32>} : memref<35x6xf32, #tpu.memory_space<vmem>>, vector<35x6xf32>,
    %75 = vector.extract_strided_slice %58 {offsets = [0, 2, 0], sizes = [7, 5, 5], strides = [1, 1, 1]} : vector<7x7x5xbf16> to vector<7x5x5xbf16>
    %76 = vector.shape_cast %75 : vector<7x5x5xbf16> to vector<35x5xbf16>
    %c8 = arith.constant 8 : index
    %c0_62 = arith.constant 0 : index
    %c0_63 = arith.constant 0 : index
    %77 = vector.load %arg3[%c8, %c0_62, %c0_63] : memref<9x5x6xbf16, #tpu.memory_space<vmem>>, vector<1x5x6xbf16>
    %78 = vector.shape_cast %77 : vector<1x5x6xbf16> to vector<5x6xbf16>
    %cst_64 = arith.constant dense<0.000000e+00> : vector<35x6xf32>
    %79 = tpu.matmul %76, %78, %cst_64 {dimension_numbers = #tpu.dot_dimension_numbers<[1], [0], [0], [1], [0, 0, 1, 1], [], []>} : vector<35x5xbf16>, vector<5x6xbf16>, vector<35x6xf32> -> vector<35x6xf32>
    %c0_65 = arith.constant 0 : index
    %c0_66 = arith.constant 0 : index
    %80 = vector.load %arg8[%c0_65, %c0_66] : memref<35x6xf32, #tpu.memory_space<vmem>>, vector<35x6xf32>
    %81 = arith.addf %80, %79 : vector<35x6xf32>
    %c0_67 = arith.constant 0 : index
    %c0_68 = arith.constant 0 : index
    %82 = vector.load %arg8[%c0_67, %c0_68] : memref<35x6xf32, #tpu.memory_space<vmem>>, vector<35x6xf32>
    tpu.vector_store %arg8[%c0_67, %c0_68], %81 {strides = array<i32>} : memref<35x6xf32, #tpu.memory_space<vmem>>, vector<35x6xf32>,
    %c0_69 = arith.constant 0 : index
    %c0_70 = arith.constant 0 : index
    %83 = vector.load %arg8[%c0_69, %c0_70] : memref<35x6xf32, #tpu.memory_space<vmem>>, vector<35x6xf32>
    %c0_71 = arith.constant 0 : index
    %c0_72 = arith.constant 0 : index
    %84 = vector.load %arg4[%c0_71, %c0_72] : memref<1x6xf32, #tpu.memory_space<vmem>>, vector<1x6xf32>
    %85 = vector.broadcast %84 : vector<1x6xf32> to vector<35x6xf32>
    %86 = arith.addf %83, %85 : vector<35x6xf32>
    %cst_73 = arith.constant dense<0.000000e+00> : vector<6xf32>
    %87 = vector.multi_reduction <add>, %86, %cst_73 [0] : vector<35x6xf32> to vector<6xf32>
    %88 = vector.shape_cast %87 : vector<6xf32> to vector<1x6xf32>
    %89 = vector.shape_cast %88 : vector<1x6xf32> to vector<1x1x1x6xf32>
    %c0_74 = arith.constant 0 : index
    %c0_75 = arith.constant 0 : index
    %c0_76 = arith.constant 0 : index
    %c0_77 = arith.constant 0 : index
    %90 = vector.load %arg6[%c0_74, %c0_75, %c0_76, %c0_77] : memref<1x1x1x6xf32, #tpu.memory_space<vmem>>, vector<1x1x1x6xf32>
    tpu.vector_store %arg6[%c0_74, %c0_75, %c0_76, %c0_77], %89 {strides = array<i32>} : memref<1x1x1x6xf32, #tpu.memory_space<vmem>>, vector<1x1x1x6xf32>,
    %91 = arith.mulf %86, %86 : vector<35x6xf32>
    %cst_78 = arith.constant dense<0.000000e+00> : vector<6xf32>
    %92 = vector.multi_reduction <add>, %91, %cst_78 [0] : vector<35x6xf32> to vector<6xf32>
    %93 = vector.shape_cast %92 : vector<6xf32> to vector<1x6xf32>
    %94 = vector.shape_cast %93 : vector<1x6xf32> to vector<1x1x1x6xf32>
    %c0_79 = arith.constant 0 : index
    %c0_80 = arith.constant 0 : index
    %c0_81 = arith.constant 0 : index
    %c0_82 = arith.constant 0 : index
    %95 = vector.load %arg7[%c0_79, %c0_80, %c0_81, %c0_82] : memref<1x1x1x6xf32, #tpu.memory_space<vmem>>, vector<1x1x1x6xf32>
    tpu.vector_store %arg7[%c0_79, %c0_80, %c0_81, %c0_82], %94 {strides = array<i32>} : memref<1x1x1x6xf32, #tpu.memory_space<vmem>>, vector<1x1x1x6xf32>,
    %96 = vector.shape_cast %86 : vector<35x6xf32> to vector<1x7x5x6xf32>
    %97 = arith.truncf %96 : vector<1x7x5x6xf32> to vector<1x7x5x6xbf16>
    %c0_83 = arith.constant 0 : index
    %c0_84 = arith.constant 0 : index
    %c0_85 = arith.constant 0 : index
    %c0_86 = arith.constant 0 : index
    %98 = vector.load %arg5[%c0_83, %c0_84, %c0_85, %c0_86] : memref<1x7x5x6xbf16, #tpu.memory_space<vmem>>, vector<1x7x5x6xbf16>
    tpu.vector_store %arg5[%c0_83, %c0_84, %c0_85, %c0_86], %97 {strides = array<i32>} : memref<1x7x5x6xbf16, #tpu.memory_space<vmem>>, vector<1x7x5x6xbf16>,
    return
  }
  func.func @transform_0(%arg0: i32, %arg1: i32) -> (i32, i32, i32, i32) {
    %c0_i32 = arith.constant 0 : i32
    %c0_i32_0 = arith.constant 0 : i32
    %c0_i32_1 = arith.constant 0 : i32
    %c0_i32_2 = arith.constant 0 : i32
    return %arg0, %c0_i32, %c0_i32_0, %c0_i32_1 : i32, i32, i32, i32
  }
  func.func @transform_1(%arg0: i32, %arg1: i32) -> (i32, i32, i32) {
    %c0_i32 = arith.constant 0 : i32
    %c0_i32_0 = arith.constant 0 : i32
    %c0_i32_1 = arith.constant 0 : i32
    %c0_i32_2 = arith.constant 0 : i32
    return %c0_i32, %c0_i32_0, %c0_i32_1 : i32, i32, i32
  }
  func.func @transform_2(%arg0: i32, %arg1: i32) -> (i32, i32) {
    %c0_i32 = arith.constant 0 : i32
    %c0_i32_0 = arith.constant 0 : i32
    %c0_i32_1 = arith.constant 0 : i32
    return %c0_i32, %c0_i32_0 : i32, i32
  }
  func.func @transform_3(%arg0: i32, %arg1: i32) -> (i32, i32, i32, i32) {
    %c0_i32 = arith.constant 0 : i32
    %c0_i32_0 = arith.constant 0 : i32
    %c0_i32_1 = arith.constant 0 : i32
    return %arg0, %arg1, %c0_i32, %c0_i32_0 : i32, i32, i32, i32
  }
  func.func @transform_4(%arg0: i32, %arg1: i32) -> (i32, i32, i32, i32) {
    %c0_i32 = arith.constant 0 : i32
    %c0_i32_0 = arith.constant 0 : i32
    %c0_i32_1 = arith.constant 0 : i32
    return %arg0, %arg1, %c0_i32, %c0_i32_0 : i32, i32, i32, i32
  }
  func.func @transform_5(%arg0: i32, %arg1: i32) -> (i32, i32, i32, i32) {
    %c0_i32 = arith.constant 0 : i32
    %c0_i32_0 = arith.constant 0 : i32
    %c0_i32_1 = arith.constant 0 : i32
    return %arg0, %arg1, %c0_i32, %c0_i32_0 : i32, i32, i32, i32
  }
}

</mosaic_0001>

<llo_original>
// kernel: tpu_custom_call.1
$region0: #{tpu_custom_call.1}
  #allocation0 [shape = 'u32[]', space=smem, size = 0x4, offset = 0x4, fixed_abs, tag = 'smem constant byte address 0x4 - core index']
  #allocation1 [shape = 'u32[144,128]{1,0:T(1,128)}', space=vmem, size = 0x12000, scoped, tag = 'internal scratch']
  #allocation2 [shape = 'f32[35,6]{1,0:T(8,128)}', space=vmem, size = 0x5000, scoped, tag = 'scratch operand']
  %s0 = inlined_call_operand.vmem [shape: bf16[1,9,7,5], index: 0, kind: input, shape index: {}]
  %s1 = inlined_call_operand.vmem [shape: bf16[9,5,6], index: 1, kind: input, shape index: {}]
  %s2 = inlined_call_operand.vmem [shape: f32[1,6], index: 2, kind: input, shape index: {}]
  %s3 = inlined_call_operand.vmem [shape: bf16[1,7,5,6], index: 3, kind: output, shape index: {0}]
  %s4 = inlined_call_operand.hbm [shape: f32[1,1,1,6], index: 4, kind: output, shape index: {1}]
  %s5 = inlined_call_operand.hbm [shape: f32[1,1,1,6], index: 5, kind: output, shape index: {2}]
  %6 = xla_tuple %s3, %s4, %s5
  %s7 = sld [smem:[#allocation0]]
  $region38: #{tpu_custom_call.1} parent=0
    _
  %s9 = ssub.s32 1, %s7
  %s10 = scalar_select 0, %s9, %s7
  $region1: #{tpu_custom_call.1} parent=0
    #allocation3 [shape = 'u8[512]{0}', space=vmem, size = 0x400, scoped, tag = 'output window, operand 1, single buffered']
    #allocation4 [shape = 's32[1]{0}', space=sflag, size = 0x4, scoped, tag = 'scoped memory for tpu_custom_call.1']
    #allocation5 [shape = 'u8[512]{0}', space=vmem, size = 0x400, scoped, tag = 'output window, operand 2, single buffered']
    #allocation6 [shape = 's32[1]{0}', space=sflag, size = 0x4, scoped, tag = 'scoped memory for tpu_custom_call.1']
    %11 = vsyncpa [#allocation4], 0
    %12 = vsyncpa [#allocation6], 0
    // Predicated region
    $region2: #{tpu_custom_call.1} parent=1 // pred_check
      _
    $region3: #{tpu_custom_call.1} parent=1 // pred_check_branch
      %14 = sbr.rel (0) target = $region5
    $region4: #{tpu_custom_call.1} parent=1 // pred_region
      _
    $region5: #{tpu_custom_call.1} parent=1 // pred_fallthru
      _
    // Predicated region
    $region6: #{tpu_custom_call.1} parent=1 // pred_check
      _
    $region7: #{tpu_custom_call.1} parent=1 // pred_check_branch
      %16 = sbr.rel (0) target = $region9
    $region8: #{tpu_custom_call.1} parent=1 // pred_region
      _
    $region9: #{tpu_custom_call.1} parent=1 // pred_fallthru
      _
    // Predicated region
    $region10: #{tpu_custom_call.1} parent=1 // pred_check
      _
    $region11: #{tpu_custom_call.1} parent=1 // pred_check_branch
      %18 = sbr.rel (0) target = $region13
    $region12: #{tpu_custom_call.1} parent=1 // pred_region
      _
    $region13: #{tpu_custom_call.1} parent=1 // pred_fallthru
      _
    %s20 = smul.u32 0, 7
    %s21 = smul.addr %s20, 4
    %s22 = scalar_lea.vmem %s0, %s21
    %v23 = vld [vmem:[%s22] sm:$0xf]
    %v24 = vld [vmem:[%s22 + $0x4] sm:$0xf]
    %v25 = vld [vmem:[%s22 + $0x8] sm:$0xf]
    %v26 = vld [vmem:[%s22 + $0xc] sm:$0xf]
    %v27 = vld [vmem:[%s22 + $0x10] sm:$0xf]
    %v28 = vld [vmem:[%s22 + $0x14] sm:$0xf]
    %v29 = vld [vmem:[%s22 + $0x18] sm:$0xf]
    %v38 = vunpack.c.l.s4 1966171168
    %v39 = vunpack.c.0.s8 %v38
    %v40 = vlaneseq
    %v41 = vshrl.u32 %v40, 7
    %v42 = vsub.s32 %v39, %v41
    %v43 = vrot.slane %v23, %v42
    %v44 = vcombine.high %v43, %v43
    %v46 = vunpack.c.l.s4 1966171168
    %v47 = vunpack.c.0.s8 %v46
    %v48 = vlaneseq
    %v49 = vshrl.u32 %v48, 7
    %v50 = vsub.s32 %v47, %v49
    %v51 = vrot.slane %v43, %v50
    %v53 = vunpack.c.l.s4 1966171168
    %v54 = vunpack.c.0.s8 %v53
    %v55 = vlaneseq
    %v56 = vshrl.u32 %v55, 7
    %v57 = vsub.s32 %v54, %v56
    %v58 = vrot.slane %v44, %v57
    %v59 = vcombine.high %v51, %v51
    %v61 = vunpack.c.l.s4 1966171168
    %v62 = vunpack.c.0.s8 %v61
    %v63 = vlaneseq
    %v64 = vshrl.u32 %v63, 7
    %v65 = vsub.s32 %v62, %v64
    %v66 = vrot.slane %v24, %v65
    %v67 = vcombine.high %v66, %v66
    %v69 = vunpack.c.l.s4 1966171168
    %v70 = vunpack.c.0.s8 %v69
    %v71 = vlaneseq
    %v72 = vshrl.u32 %v71, 7
    %v73 = vsub.s32 %v70, %v72
    %v74 = vrot.slane %v66, %v73
    %v76 = vunpack.c.l.s4 1966171168
    %v77 = vunpack.c.0.s8 %v76
    %v78 = vlaneseq
    %v79 = vshrl.u32 %v78, 7
    %v80 = vsub.s32 %v77, %v79
    %v81 = vrot.slane %v67, %v80
    %v82 = vcombine.high %v74, %v74
    %v84 = vunpack.c.l.s4 1966171168
    %v85 = vunpack.c.0.s8 %v84
    %v86 = vlaneseq
    %v87 = vshrl.u32 %v86, 7
    %v88 = vsub.s32 %v85, %v87
    %v89 = vrot.slane %v25, %v88
    %v90 = vcombine.high %v89, %v89
    %v92 = vunpack.c.l.s4 1966171168
    %v93 = vunpack.c.0.s8 %v92
    %v94 = vlaneseq
    %v95 = vshrl.u32 %v94, 7
    %v96 = vsub.s32 %v93, %v95
    %v97 = vrot.slane %v89, %v96
    %v99 = vunpack.c.l.s4 1966171168
    %v100 = vunpack.c.0.s8 %v99
    %v101 = vlaneseq
    %v102 = vshrl.u32 %v101, 7
    %v103 = vsub.s32 %v100, %v102
    %v104 = vrot.slane %v90, %v103
    %v105 = vcombine.high %v97, %v97
    %v107 = vunpack.c.l.s4 1966171168
    %v108 = vunpack.c.0.s8 %v107
    %v109 = vlaneseq
    %v110 = vshrl.u32 %v109, 7
    %v111 = vsub.s32 %v108, %v110
    %v112 = vrot.slane %v26, %v111
    %v113 = vcombine.high %v112, %v112
    %v115 = vunpack.c.l.s4 1966171168
    %v116 = vunpack.c.0.s8 %v115
    %v117 = vlaneseq
    %v118 = vshrl.u32 %v117, 7
    %v119 = vsub.s32 %v116, %v118
    %v120 = vrot.slane %v112, %v119
    %v122 = vunpack.c.l.s4 1966171168
    %v123 = vunpack.c.0.s8 %v122
    %v124 = vlaneseq
    %v125 = vshrl.u32 %v124, 7
    %v126 = vsub.s32 %v123, %v125
    %v127 = vrot.slane %v113, %v126
    %v128 = vcombine.high %v120, %v120
    %v130 = vunpack.c.l.s4 1966171168
    %v131 = vunpack.c.0.s8 %v130
    %v132 = vlaneseq
    %v133 = vshrl.u32 %v132, 7
    %v134 = vsub.s32 %v131, %v133
    %v135 = vrot.slane %v27, %v134
    %v136 = vcombine.high %v135, %v135
    %v138 = vunpack.c.l.s4 1966171168
    %v139 = vunpack.c.0.s8 %v138
    %v140 = vlaneseq
    %v141 = vshrl.u32 %v140, 7
    %v142 = vsub.s32 %v139, %v141
    %v143 = vrot.slane %v135, %v142
    %v145 = vunpack.c.l.s4 1966171168
    %v146 = vunpack.c.0.s8 %v145
    %v147 = vlaneseq
    %v148 = vshrl.u32 %v147, 7
    %v149 = vsub.s32 %v146, %v148
    %v150 = vrot.slane %v136, %v149
    %v151 = vcombine.high %v143, %v143
    %v153 = vunpack.c.l.s4 1966171168
    %v154 = vunpack.c.0.s8 %v153
    %v155 = vlaneseq
    %v156 = vshrl.u32 %v155, 7
    %v157 = vsub.s32 %v154, %v156
    %v158 = vrot.slane %v28, %v157
    %v159 = vcombine.high %v158, %v158
    %v161 = vunpack.c.l.s4 1966171168
    %v162 = vunpack.c.0.s8 %v161
    %v163 = vlaneseq
    %v164 = vshrl.u32 %v163, 7
    %v165 = vsub.s32 %v162, %v164
    %v166 = vrot.slane %v158, %v165
    %v168 = vunpack.c.l.s4 1966171168
    %v169 = vunpack.c.0.s8 %v168
    %v170 = vlaneseq
    %v171 = vshrl.u32 %v170, 7
    %v172 = vsub.s32 %v169, %v171
    %v173 = vrot.slane %v159, %v172
    %v174 = vcombine.high %v166, %v166
    %v176 = vunpack.c.l.s4 1966171168
    %v177 = vunpack.c.0.s8 %v176
    %v178 = vlaneseq
    %v179 = vshrl.u32 %v178, 7
    %v180 = vsub.s32 %v177, %v179
    %v181 = vrot.slane %v29, %v180
    %v182 = vcombine.high %v181, %v181
    %v184 = vunpack.c.l.s4 1966171168
    %v185 = vunpack.c.0.s8 %v184
    %v186 = vlaneseq
    %v187 = vshrl.u32 %v186, 7
    %v188 = vsub.s32 %v185, %v187
    %v189 = vrot.slane %v181, %v188
    %v191 = vunpack.c.l.s4 1966171168
    %v192 = vunpack.c.0.s8 %v191
    %v193 = vlaneseq
    %v194 = vshrl.u32 %v193, 7
    %v195 = vsub.s32 %v192, %v194
    %v196 = vrot.slane %v182, %v195
    %v197 = vcombine.high %v189, %v189
    %v198 = vunpack.i.l.s16 %v51
    %v199 = vunpack.i.h.s16 %v51
    %v200 = vunpack.i.l.s16 %v58
    %v201 = vunpack.i.h.s16 %v58
    %v202 = vunpack.i.l.s16 %v59
    %v203 = vunpack.i.l.s16 %v74
    %v204 = vunpack.i.h.s16 %v74
    %v205 = vunpack.i.l.s16 %v81
    %v206 = vunpack.i.h.s16 %v81
    %v207 = vunpack.i.l.s16 %v82
    %v208 = vunpack.i.l.s16 %v97
    %v209 = vunpack.i.h.s16 %v97
    %v210 = vunpack.i.l.s16 %v104
    %v211 = vunpack.i.h.s16 %v104
    %v212 = vunpack.i.l.s16 %v105
    %v213 = vunpack.i.l.s16 %v120
    %v214 = vunpack.i.h.s16 %v120
    %v215 = vunpack.i.l.s16 %v127
    %v216 = vunpack.i.h.s16 %v127
    %v217 = vunpack.i.l.s16 %v128
    %v218 = vunpack.i.l.s16 %v143
    %v219 = vunpack.i.h.s16 %v143
    %v220 = vunpack.i.l.s16 %v150
    %v221 = vunpack.i.h.s16 %v150
    %v222 = vunpack.i.l.s16 %v151
    %v223 = vunpack.i.l.s16 %v166
    %v224 = vunpack.i.h.s16 %v166
    %v225 = vunpack.i.l.s16 %v173
    %v226 = vunpack.i.h.s16 %v173
    %v227 = vunpack.i.l.s16 %v174
    %v228 = vunpack.i.l.s16 %v189
    %v229 = vunpack.i.h.s16 %v189
    %v230 = vunpack.i.l.s16 %v196
    %v231 = vunpack.i.h.s16 %v196
    %v232 = vunpack.i.l.s16 %v197
    %v233 = vld [vmem:[%s1] sm:$0x7]
    %v234 = vpack.i.b16 %v199, %v198
    %v235 = vpack.i.b16 %v201, %v200
    %v236 = vpack.i.b16 %v203, %v202
    %v237 = vpack.i.b16 %v205, %v204
    %v238 = vpack.i.b16 %v207, %v206
    %v239 = vpack.i.b16 %v209, %v208
    %v240 = vpack.i.b16 %v211, %v210
    %v241 = vpack.i.b16 %v213, %v212
    %v242 = vpack.i.b16 %v215, %v214
    %v243 = vpack.i.b16 %v217, %v216
    %v244 = vpack.i.b16 %v219, %v218
    %v245 = vpack.i.b16 %v221, %v220
    %v246 = vpack.i.b16 %v223, %v222
    %v247 = vpack.i.b16 %v225, %v224
    %v248 = vpack.i.b16 %v227, %v226
    %v249 = vpack.i.b16 %v229, %v228
    %v250 = vpack.i.b16 %v231, %v230
    %v252 = vcombine.low %v234, %v235
    %v253 = vcombine.low %v236, %v237
    %v254 = vcombine.low %v238, %v239
    %v255 = vcombine.low %v240, %v241
    %v257 = vunpack.c.l.s4 1966171168
    %v258 = vunpack.c.0.s8 %v257
    %v259 = vlaneseq
    %v260 = vshrl.u32 %v259, 7
    %v261 = vsub.s32 %v258, %v260
    %v262 = vrot.slane %v252, %v261
    %v264 = vunpack.c.l.s4 1966171168
    %v265 = vunpack.c.0.s8 %v264
    %v266 = vlaneseq
    %v267 = vshrl.u32 %v266, 7
    %v268 = vsub.s32 %v265, %v267
    %v269 = vrot.slane %v253, %v268
    %v271 = vunpack.c.l.s4 1966171168
    %v272 = vunpack.c.0.s8 %v271
    %v273 = vlaneseq
    %v274 = vshrl.u32 %v273, 7
    %v275 = vsub.s32 %v272, %v274
    %v276 = vrot.slane %v254, %v275
    %v278 = vunpack.c.l.s4 1966171168
    %v279 = vunpack.c.0.s8 %v278
    %v280 = vlaneseq
    %v281 = vshrl.u32 %v280, 7
    %v282 = vsub.s32 %v279, %v281
    %v283 = vrot.slane %v255, %v282
    %v284 = vcombine.low %v262, %v269
    %v285 = vcombine.low %v276, %v283
    %v287 = vunpack.c.l.s4 1966171168
    %v288 = vunpack.c.0.s8 %v287
    %v289 = vlaneseq
    %v290 = vshrl.u32 %v289, 7
    %v291 = vsub.s32 %v288, %v290
    %v292 = vrot.slane %v284, %v291
    %v294 = vunpack.c.l.s4 1966171168
    %v295 = vunpack.c.0.s8 %v294
    %v296 = vlaneseq
    %v297 = vshrl.u32 %v296, 7
    %v298 = vsub.s32 %v295, %v297
    %v299 = vrot.slane %v285, %v298
    %v300 = vcombine.low %v292, %v299
    %v301 = vcombine.low %v242, %v243
    %v302 = vcombine.low %v244, %v245
    %v303 = vcombine.low %v246, %v247
    %v304 = vcombine.low %v248, %v249
    %v306 = vunpack.c.l.s4 1966171168
    %v307 = vunpack.c.0.s8 %v306
    %v308 = vlaneseq
    %v309 = vshrl.u32 %v308, 7
    %v310 = vsub.s32 %v307, %v309
    %v311 = vrot.slane %v301, %v310
    %v313 = vunpack.c.l.s4 1966171168
    %v314 = vunpack.c.0.s8 %v313
    %v315 = vlaneseq
    %v316 = vshrl.u32 %v315, 7
    %v317 = vsub.s32 %v314, %v316
    %v318 = vrot.slane %v302, %v317
    %v320 = vunpack.c.l.s4 1966171168
    %v321 = vunpack.c.0.s8 %v320
    %v322 = vlaneseq
    %v323 = vshrl.u32 %v322, 7
    %v324 = vsub.s32 %v321, %v323
    %v325 = vrot.slane %v303, %v324
    %v327 = vunpack.c.l.s4 1966171168
    %v328 = vunpack.c.0.s8 %v327
    %v329 = vlaneseq
    %v330 = vshrl.u32 %v329, 7
    %v331 = vsub.s32 %v328, %v330
    %v332 = vrot.slane %v304, %v331
    %v333 = vcombine.low %v311, %v318
    %v334 = vcombine.low %v325, %v332
    %v336 = vunpack.c.l.s4 1966171168
    %v337 = vunpack.c.0.s8 %v336
    %v338 = vlaneseq
    %v339 = vshrl.u32 %v338, 7
    %v340 = vsub.s32 %v337, %v339
    %v341 = vrot.slane %v333, %v340
    %v343 = vunpack.c.l.s4 1966171168
    %v344 = vunpack.c.0.s8 %v343
    %v345 = vlaneseq
    %v346 = vshrl.u32 %v345, 7
    %v347 = vsub.s32 %v344, %v346
    %v348 = vrot.slane %v334, %v347
    %v349 = vcombine.low %v341, %v348
    %v350 = vcombine.low %v250, %v232
    %v352 = vunpack.c.l.s4 1966171168
    %v353 = vunpack.c.0.s8 %v352
    %v354 = vlaneseq
    %v355 = vshrl.u32 %v354, 7
    %v356 = vsub.s32 %v353, %v355
    %v357 = vrot.slane %v350, %v356
    %v359 = vunpack.c.l.s4 1966171168
    %v360 = vunpack.c.0.s8 %v359
    %v361 = vlaneseq
    %v362 = vshrl.u32 %v361, 7
    %v363 = vsub.s32 %v360, %v362
    %v364 = vrot.slane %v357, %v363
    %vm365 = vcmask 39936
    %v367 = vsel %vm365, %v300, 0
    %v370 = vsel %vm365, %v349, 0
    %v373 = vsel %vm365, %v364, 0
    %vm375 = vcmask 1041408
    %vm376 = vcmask 1042432
    %v377 = vsel %vm375, 4294967295, 65535
    %v378 = vsel %vm376, %v377, 0
    %v380 = vand.u32 %v233, %v378
    %382 = vmatprep.subr.bf16.mxu0 0
    %383 = vmatpush1.bf16.msra.mxu0 %v380
    %384 = vmatprep.subr.bf16.mxu0 0
    %385 = vmatpush1.bf16.msra.mxu0 0
    %386 = vmatprep.subr.bf16.mxu0 0
    %387 = vmatpush1.bf16.msra.mxu0 0
    %388 = vmatprep.subr.bf16.mxu0 0
    %389 = vmatpush1.bf16.msra.mxu0 0
    %390 = vmatprep.subr.bf16.mxu0 0
    %391 = vmatpush1.bf16.msra.mxu0 0
    %392 = vmatprep.subr.bf16.mxu0 0
    %393 = vmatpush1.bf16.msra.mxu0 0
    %394 = vmatprep.subr.bf16.mxu0 0
    %395 = vmatpush1.bf16.msra.mxu0 0
    %396 = vmatprep.subr.bf16.mxu0 0
    %397 = vmatpush1.bf16.msra.mxu0 0
    %398 = vmatprep.subr.bf16.mxu0 0
    %399 = vmatpush1.bf16.msra.mxu0 0
    %400 = vmatprep.subr.bf16.mxu0 0
    %401 = vmatpush1.bf16.msra.mxu0 0
    %402 = vmatprep.subr.bf16.mxu0 0
    %403 = vmatpush1.bf16.msra.mxu0 0
    %404 = vmatprep.subr.bf16.mxu0 0
    %405 = vmatpush1.bf16.msra.mxu0 0
    %406 = vmatprep.subr.bf16.mxu0 0
    %407 = vmatpush1.bf16.msra.mxu0 0
    %408 = vmatprep.subr.bf16.mxu0 0
    %409 = vmatpush1.bf16.msra.mxu0 0
    %410 = vmatprep.subr.bf16.mxu0 0
    %411 = vmatpush1.bf16.msra.mxu0 0
    %412 = vmatprep.subr.bf16.mxu0 0
    %413 = vmatpush1.bf16.msra.mxu0 0
    %414 = vmatprep.mubr.bf16.mxu0 0
    %415 = vmatmul.mubr.bf16.gmra.mrb[0].mxu0 %v367
    %v416 = vpop.f32.mrb[0].mxu0
    %v417 = vadd.f32 0.0, %v416
    %v418 = vpop.f32.mrb[0].mxu0
    %v419 = vpop.f32.mrb[0].mxu0
    %v420 = vadd.f32 0.0, %v419
    %v421 = vpop.f32.mrb[0].mxu0
    %422 = vmatprep.mubr.bf16.mxu0 0
    %423 = vmatmul.mubr.bf16.gmra.mrb[0].mxu0 %v370
    %v424 = vpop.f32.mrb[0].mxu0
    %v425 = vadd.f32 0.0, %v424
    %v426 = vpop.f32.mrb[0].mxu0
    %v427 = vpop.f32.mrb[0].mxu0
    %v428 = vadd.f32 0.0, %v427
    %v429 = vpop.f32.mrb[0].mxu0
    %430 = vmatprep.mubr.bf16.mxu0 0
    %431 = vmatmul.mubr.bf16.gmra.mrb[0].mxu0 %v373
    %v432 = vpop.f32.mrb[0].mxu0
    %v433 = vadd.f32 0.0, %v432
    %v434 = vpop.f32.mrb[0].mxu0
    %v435 = vpop.f32.mrb[0].mxu0
    %v436 = vpop.f32.mrb[0].mxu0
    %437 = vdwg.mxu0
    %vm438 = vcmask 48128
    %439 = vst.msk [vmem:[#allocation2] sm:$0xff] %vm438, %v417
    %440 = vst.msk [vmem:[#allocation2 + $0x8] sm:$0xff] %vm438, %v420
    %441 = vst.msk [vmem:[#allocation2 + $0x10] sm:$0xff] %vm438, %v425
    %442 = vst.msk [vmem:[#allocation2 + $0x18] sm:$0xff] %vm438, %v428
    %vm443 = vcmask 43008
    %444 = vst.msk [vmem:[#allocation2 + $0x20] sm:$0x7] %vm443, %v433
    %v445 = vunpack.i.h.s16 %v59
    %v446 = vunpack.i.h.s16 %v82
    %v447 = vunpack.i.h.s16 %v105
    %v448 = vunpack.i.h.s16 %v128
    %v449 = vunpack.i.h.s16 %v151
    %v450 = vunpack.i.h.s16 %v174
    %v451 = vunpack.i.h.s16 %v197
    %s452 = scalar_lea.vmem %s1, 4
    %v453 = vld [vmem:[%s452] sm:$0x7]
    %v454 = vpack.i.b16 %v200, %v199
    %v455 = vpack.i.b16 %v202, %v201
    %v456 = vpack.i.b16 %v204, %v445
    %v457 = vpack.i.b16 %v206, %v205
    %v458 = vpack.i.b16 %v446, %v207
    %v459 = vpack.i.b16 %v210, %v209
    %v460 = vpack.i.b16 %v212, %v211
    %v461 = vpack.i.b16 %v214, %v447
    %v462 = vpack.i.b16 %v216, %v215
    %v463 = vpack.i.b16 %v448, %v217
    %v464 = vpack.i.b16 %v220, %v219
    %v465 = vpack.i.b16 %v222, %v221
    %v466 = vpack.i.b16 %v224, %v449
    %v467 = vpack.i.b16 %v226, %v225
    %v468 = vpack.i.b16 %v450, %v227
    %v469 = vpack.i.b16 %v230, %v229
    %v470 = vpack.i.b16 %v232, %v231
    %v472 = vcombine.low %v454, %v455
    %v473 = vcombine.low %v456, %v457
    %v474 = vcombine.low %v458, %v459
    %v475 = vcombine.low %v460, %v461
    %v477 = vunpack.c.l.s4 1966171168
    %v478 = vunpack.c.0.s8 %v477
    %v479 = vlaneseq
    %v480 = vshrl.u32 %v479, 7
    %v481 = vsub.s32 %v478, %v480
    %v482 = vrot.slane %v472, %v481
    %v484 = vunpack.c.l.s4 1966171168
    %v485 = vunpack.c.0.s8 %v484
    %v486 = vlaneseq
    %v487 = vshrl.u32 %v486, 7
    %v488 = vsub.s32 %v485, %v487
    %v489 = vrot.slane %v473, %v488
    %v491 = vunpack.c.l.s4 1966171168
    %v492 = vunpack.c.0.s8 %v491
    %v493 = vlaneseq
    %v494 = vshrl.u32 %v493, 7
    %v495 = vsub.s32 %v492, %v494
    %v496 = vrot.slane %v474, %v495
    %v498 = vunpack.c.l.s4 1966171168
    %v499 = vunpack.c.0.s8 %v498
    %v500 = vlaneseq
    %v501 = vshrl.u32 %v500, 7
    %v502 = vsub.s32 %v499, %v501
    %v503 = vrot.slane %v475, %v502
    %v504 = vcombine.low %v482, %v489
    %v505 = vcombine.low %v496, %v503
    %v507 = vunpack.c.l.s4 1966171168
    %v508 = vunpack.c.0.s8 %v507
    %v509 = vlaneseq
    %v510 = vshrl.u32 %v509, 7
    %v511 = vsub.s32 %v508, %v510
    %v512 = vrot.slane %v504, %v511
    %v514 = vunpack.c.l.s4 1966171168
    %v515 = vunpack.c.0.s8 %v514
    %v516 = vlaneseq
    %v517 = vshrl.u32 %v516, 7
    %v518 = vsub.s32 %v515, %v517
    %v519 = vrot.slane %v505, %v518
    %v520 = vcombine.low %v512, %v519
    %v521 = vcombine.low %v462, %v463
    %v522 = vcombine.low %v464, %v465
    %v523 = vcombine.low %v466, %v467
    %v524 = vcombine.low %v468, %v469
    %v526 = vunpack.c.l.s4 1966171168
    %v527 = vunpack.c.0.s8 %v526
    %v528 = vlaneseq
    %v529 = vshrl.u32 %v528, 7
    %v530 = vsub.s32 %v527, %v529
    %v531 = vrot.slane %v521, %v530
    %v533 = vunpack.c.l.s4 1966171168
    %v534 = vunpack.c.0.s8 %v533
    %v535 = vlaneseq
    %v536 = vshrl.u32 %v535, 7
    %v537 = vsub.s32 %v534, %v536
    %v538 = vrot.slane %v522, %v537
    %v540 = vunpack.c.l.s4 1966171168
    %v541 = vunpack.c.0.s8 %v540
    %v542 = vlaneseq
    %v543 = vshrl.u32 %v542, 7
    %v544 = vsub.s32 %v541, %v543
    %v545 = vrot.slane %v523, %v544
    %v547 = vunpack.c.l.s4 1966171168
    %v548 = vunpack.c.0.s8 %v547
    %v549 = vlaneseq
    %v550 = vshrl.u32 %v549, 7
    %v551 = vsub.s32 %v548, %v550
    %v552 = vrot.slane %v524, %v551
    %v553 = vcombine.low %v531, %v538
    %v554 = vcombine.low %v545, %v552
    %v556 = vunpack.c.l.s4 1966171168
    %v557 = vunpack.c.0.s8 %v556
    %v558 = vlaneseq
    %v559 = vshrl.u32 %v558, 7
    %v560 = vsub.s32 %v557, %v559
    %v561 = vrot.slane %v553, %v560
    %v563 = vunpack.c.l.s4 1966171168
    %v564 = vunpack.c.0.s8 %v563
    %v565 = vlaneseq
    %v566 = vshrl.u32 %v565, 7
    %v567 = vsub.s32 %v564, %v566
    %v568 = vrot.slane %v554, %v567
    %v569 = vcombine.low %v561, %v568
    %v570 = vcombine.low %v470, %v451
    %v572 = vunpack.c.l.s4 1966171168
    %v573 = vunpack.c.0.s8 %v572
    %v574 = vlaneseq
    %v575 = vshrl.u32 %v574, 7
    %v576 = vsub.s32 %v573, %v575
    %v577 = vrot.slane %v570, %v576
    %v579 = vunpack.c.l.s4 1966171168
    %v580 = vunpack.c.0.s8 %v579
    %v581 = vlaneseq
    %v582 = vshrl.u32 %v581, 7
    %v583 = vsub.s32 %v580, %v582
    %v584 = vrot.slane %v577, %v583
    %v586 = vsel %vm365, %v520, 0
    %v589 = vsel %vm365, %v569, 0
    %v592 = vsel %vm365, %v584, 0
    %v595 = vand.u32 %v453, %v378
    %597 = vmatprep.subr.bf16.mxu0 0
    %598 = vmatpush1.bf16.msra.mxu0 %v595
    %599 = vmatprep.subr.bf16.mxu0 0
    %600 = vmatpush1.bf16.msra.mxu0 0
    %601 = vmatprep.subr.bf16.mxu0 0
    %602 = vmatpush1.bf16.msra.mxu0 0
    %603 = vmatprep.subr.bf16.mxu0 0
    %604 = vmatpush1.bf16.msra.mxu0 0
    %605 = vmatprep.subr.bf16.mxu0 0
    %606 = vmatpush1.bf16.msra.mxu0 0
    %607 = vmatprep.subr.bf16.mxu0 0
    %608 = vmatpush1.bf16.msra.mxu0 0
    %609 = vmatprep.subr.bf16.mxu0 0
    %610 = vmatpush1.bf16.msra.mxu0 0
    %611 = vmatprep.subr.bf16.mxu0 0
    %612 = vmatpush1.bf16.msra.mxu0 0
    %613 = vmatprep.subr.bf16.mxu0 0
    %614 = vmatpush1.bf16.msra.mxu0 0
    %615 = vmatprep.subr.bf16.mxu0 0
    %616 = vmatpush1.bf16.msra.mxu0 0
    %617 = vmatprep.subr.bf16.mxu0 0
    %618 = vmatpush1.bf16.msra.mxu0 0
    %619 = vmatprep.subr.bf16.mxu0 0
    %620 = vmatpush1.bf16.msra.mxu0 0
    %621 = vmatprep.subr.bf16.mxu0 0
    %622 = vmatpush1.bf16.msra.mxu0 0
    %623 = vmatprep.subr.bf16.mxu0 0
    %624 = vmatpush1.bf16.msra.mxu0 0
    %625 = vmatprep.subr.bf16.mxu0 0
    %626 = vmatpush1.bf16.msra.mxu0 0
    %627 = vmatprep.subr.bf16.mxu0 0
    %628 = vmatpush1.bf16.msra.mxu0 0
    %629 = vmatprep.mubr.bf16.mxu0 0
    %630 = vmatmul.mubr.bf16.gmra.mrb[0].mxu0 %v586
    %v631 = vpop.f32.mrb[0].mxu0
    %v632 = vadd.f32 0.0, %v631
    %v633 = vpop.f32.mrb[0].mxu0
    %v634 = vpop.f32.mrb[0].mxu0
    %v635 = vadd.f32 0.0, %v634
    %v636 = vpop.f32.mrb[0].mxu0
    %637 = vmatprep.mubr.bf16.mxu0 0
    %638 = vmatmul.mubr.bf16.gmra.mrb[0].mxu0 %v589
    %v639 = vpop.f32.mrb[0].mxu0
    %v640 = vadd.f32 0.0, %v639
    %v641 = vpop.f32.mrb[0].mxu0
    %v642 = vpop.f32.mrb[0].mxu0
    %v643 = vadd.f32 0.0, %v642
    %v644 = vpop.f32.mrb[0].mxu0
    %645 = vmatprep.mubr.bf16.mxu0 0
    %646 = vmatmul.mubr.bf16.gmra.mrb[0].mxu0 %v592
    %v647 = vpop.f32.mrb[0].mxu0
    %v648 = vadd.f32 0.0, %v647
    %v649 = vpop.f32.mrb[0].mxu0
    %v650 = vpop.f32.mrb[0].mxu0
    %v651 = vpop.f32.mrb[0].mxu0
    %652 = vdwg.mxu0
    %v653 = vld [vmem:[#allocation2] sm:$0xff]
    %v654 = vld [vmem:[#allocation2 + $0x8] sm:$0xff]
    %v655 = vld [vmem:[#allocation2 + $0x10] sm:$0xff]
    %v656 = vld [vmem:[#allocation2 + $0x18] sm:$0xff]
    %v657 = vld [vmem:[#allocation2 + $0x20] sm:$0x7]
    %v658 = vadd.f32 %v653, %v632
    %v659 = vadd.f32 %v654, %v635
    %v660 = vadd.f32 %v655, %v640
    %v661 = vadd.f32 %v656, %v643
    %v662 = vadd.f32 %v657, %v648
    %663 = vst.msk [vmem:[#allocation2] sm:$0xff] %vm438, %v658
    %664 = vst.msk [vmem:[#allocation2 + $0x8] sm:$0xff] %vm438, %v659
    %665 = vst.msk [vmem:[#allocation2 + $0x10] sm:$0xff] %vm438, %v660
    %666 = vst.msk [vmem:[#allocation2 + $0x18] sm:$0xff] %vm438, %v661
    %667 = vst.msk [vmem:[#allocation2 + $0x20] sm:$0x7] %vm443, %v662
    %v668 = vcombine.high %v58, %v58
    %v669 = vcombine.high %v81, %v81
    %v670 = vcombine.high %v104, %v104
    %v671 = vcombine.high %v127, %v127
    %v672 = vcombine.high %v150, %v150
    %v673 = vcombine.high %v173, %v173
    %v674 = vcombine.high %v196, %v196
    %v675 = vunpack.i.l.s16 %v668
    %v676 = vunpack.i.l.s16 %v669
    %v677 = vunpack.i.l.s16 %v670
    %v678 = vunpack.i.l.s16 %v671
    %v679 = vunpack.i.l.s16 %v672
    %v680 = vunpack.i.l.s16 %v673
    %v681 = vunpack.i.l.s16 %v674
    %s682 = scalar_lea.vmem %s1, 8
    %v683 = vld [vmem:[%s682] sm:$0x7]
    %v684 = vpack.i.b16 %v445, %v202
    %v685 = vpack.i.b16 %v205, %v675
    %v686 = vpack.i.b16 %v676, %v446
    %v687 = vpack.i.b16 %v447, %v212
    %v688 = vpack.i.b16 %v215, %v677
    %v689 = vpack.i.b16 %v678, %v448
    %v690 = vpack.i.b16 %v449, %v222
    %v691 = vpack.i.b16 %v225, %v679
    %v692 = vpack.i.b16 %v680, %v450
    %v693 = vpack.i.b16 %v451, %v232
    %v695 = vcombine.low %v235, %v684
    %v696 = vcombine.low %v685, %v238
    %v697 = vcombine.low %v686, %v240
    %v698 = vcombine.low %v687, %v688
    %v700 = vunpack.c.l.s4 1966171168
    %v701 = vunpack.c.0.s8 %v700
    %v702 = vlaneseq
    %v703 = vshrl.u32 %v702, 7
    %v704 = vsub.s32 %v701, %v703
    %v705 = vrot.slane %v695, %v704
    %v707 = vunpack.c.l.s4 1966171168
    %v708 = vunpack.c.0.s8 %v707
    %v709 = vlaneseq
    %v710 = vshrl.u32 %v709, 7
    %v711 = vsub.s32 %v708, %v710
    %v712 = vrot.slane %v696, %v711
    %v714 = vunpack.c.l.s4 1966171168
    %v715 = vunpack.c.0.s8 %v714
    %v716 = vlaneseq
    %v717 = vshrl.u32 %v716, 7
    %v718 = vsub.s32 %v715, %v717
    %v719 = vrot.slane %v697, %v718
    %v721 = vunpack.c.l.s4 1966171168
    %v722 = vunpack.c.0.s8 %v721
    %v723 = vlaneseq
    %v724 = vshrl.u32 %v723, 7
    %v725 = vsub.s32 %v722, %v724
    %v726 = vrot.slane %v698, %v725
    %v727 = vcombine.low %v705, %v712
    %v728 = vcombine.low %v719, %v726
    %v730 = vunpack.c.l.s4 1966171168
    %v731 = vunpack.c.0.s8 %v730
    %v732 = vlaneseq
    %v733 = vshrl.u32 %v732, 7
    %v734 = vsub.s32 %v731, %v733
    %v735 = vrot.slane %v727, %v734
    %v737 = vunpack.c.l.s4 1966171168
    %v738 = vunpack.c.0.s8 %v737
    %v739 = vlaneseq
    %v740 = vshrl.u32 %v739, 7
    %v741 = vsub.s32 %v738, %v740
    %v742 = vrot.slane %v728, %v741
    %v743 = vcombine.low %v735, %v742
    %v744 = vcombine.low %v243, %v689
    %v745 = vcombine.low %v245, %v690
    %v746 = vcombine.low %v691, %v248
    %v747 = vcombine.low %v692, %v250
    %v749 = vunpack.c.l.s4 1966171168
    %v750 = vunpack.c.0.s8 %v749
    %v751 = vlaneseq
    %v752 = vshrl.u32 %v751, 7
    %v753 = vsub.s32 %v750, %v752
    %v754 = vrot.slane %v744, %v753
    %v756 = vunpack.c.l.s4 1966171168
    %v757 = vunpack.c.0.s8 %v756
    %v758 = vlaneseq
    %v759 = vshrl.u32 %v758, 7
    %v760 = vsub.s32 %v757, %v759
    %v761 = vrot.slane %v745, %v760
    %v763 = vunpack.c.l.s4 1966171168
    %v764 = vunpack.c.0.s8 %v763
    %v765 = vlaneseq
    %v766 = vshrl.u32 %v765, 7
    %v767 = vsub.s32 %v764, %v766
    %v768 = vrot.slane %v746, %v767
    %v770 = vunpack.c.l.s4 1966171168
    %v771 = vunpack.c.0.s8 %v770
    %v772 = vlaneseq
    %v773 = vshrl.u32 %v772, 7
    %v774 = vsub.s32 %v771, %v773
    %v775 = vrot.slane %v747, %v774
    %v776 = vcombine.low %v754, %v761
    %v777 = vcombine.low %v768, %v775
    %v779 = vunpack.c.l.s4 1966171168
    %v780 = vunpack.c.0.s8 %v779
    %v781 = vlaneseq
    %v782 = vshrl.u32 %v781, 7
    %v783 = vsub.s32 %v780, %v782
    %v784 = vrot.slane %v776, %v783
    %v786 = vunpack.c.l.s4 1966171168
    %v787 = vunpack.c.0.s8 %v786
    %v788 = vlaneseq
    %v789 = vshrl.u32 %v788, 7
    %v790 = vsub.s32 %v787, %v789
    %v791 = vrot.slane %v777, %v790
    %v792 = vcombine.low %v784, %v791
    %v793 = vcombine.low %v693, %v681
    %v795 = vunpack.c.l.s4 1966171168
    %v796 = vunpack.c.0.s8 %v795
    %v797 = vlaneseq
    %v798 = vshrl.u32 %v797, 7
    %v799 = vsub.s32 %v796, %v798
    %v800 = vrot.slane %v793, %v799
    %v802 = vunpack.c.l.s4 1966171168
    %v803 = vunpack.c.0.s8 %v802
    %v804 = vlaneseq
    %v805 = vshrl.u32 %v804, 7
    %v806 = vsub.s32 %v803, %v805
    %v807 = vrot.slane %v800, %v806
    %v809 = vsel %vm365, %v743, 0
    %v812 = vsel %vm365, %v792, 0
    %v815 = vsel %vm365, %v807, 0
    %v818 = vand.u32 %v683, %v378
    %820 = vmatprep.subr.bf16.mxu0 0
    %821 = vmatpush1.bf16.msra.mxu0 %v818
    %822 = vmatprep.subr.bf16.mxu0 0
    %823 = vmatpush1.bf16.msra.mxu0 0
    %824 = vmatprep.subr.bf16.mxu0 0
    %825 = vmatpush1.bf16.msra.mxu0 0
    %826 = vmatprep.subr.bf16.mxu0 0
    %827 = vmatpush1.bf16.msra.mxu0 0
    %828 = vmatprep.subr.bf16.mxu0 0
    %829 = vmatpush1.bf16.msra.mxu0 0
    %830 = vmatprep.subr.bf16.mxu0 0
    %831 = vmatpush1.bf16.msra.mxu0 0
    %832 = vmatprep.subr.bf16.mxu0 0
    %833 = vmatpush1.bf16.msra.mxu0 0
    %834 = vmatprep.subr.bf16.mxu0 0
    %835 = vmatpush1.bf16.msra.mxu0 0
    %836 = vmatprep.subr.bf16.mxu0 0
    %837 = vmatpush1.bf16.msra.mxu0 0
    %838 = vmatprep.subr.bf16.mxu0 0
    %839 = vmatpush1.bf16.msra.mxu0 0
    %840 = vmatprep.subr.bf16.mxu0 0
    %841 = vmatpush1.bf16.msra.mxu0 0
    %842 = vmatprep.subr.bf16.mxu0 0
    %843 = vmatpush1.bf16.msra.mxu0 0
    %844 = vmatprep.subr.bf16.mxu0 0
    %845 = vmatpush1.bf16.msra.mxu0 0
    %846 = vmatprep.subr.bf16.mxu0 0
    %847 = vmatpush1.bf16.msra.mxu0 0
    %848 = vmatprep.subr.bf16.mxu0 0
    %849 = vmatpush1.bf16.msra.mxu0 0
    %850 = vmatprep.subr.bf16.mxu0 0
    %851 = vmatpush1.bf16.msra.mxu0 0
    %852 = vmatprep.mubr.bf16.mxu0 0
    %853 = vmatmul.mubr.bf16.gmra.mrb[0].mxu0 %v809
    %v854 = vpop.f32.mrb[0].mxu0
    %v855 = vadd.f32 0.0, %v854
    %v856 = vpop.f32.mrb[0].mxu0
    %v857 = vpop.f32.mrb[0].mxu0
    %v858 = vadd.f32 0.0, %v857
    %v859 = vpop.f32.mrb[0].mxu0
    %860 = vmatprep.mubr.bf16.mxu0 0
    %861 = vmatmul.mubr.bf16.gmra.mrb[0].mxu0 %v812
    %v862 = vpop.f32.mrb[0].mxu0
    %v863 = vadd.f32 0.0, %v862
    %v864 = vpop.f32.mrb[0].mxu0
    %v865 = vpop.f32.mrb[0].mxu0
    %v866 = vadd.f32 0.0, %v865
    %v867 = vpop.f32.mrb[0].mxu0
    %868 = vmatprep.mubr.bf16.mxu0 0
    %869 = vmatmul.mubr.bf16.gmra.mrb[0].mxu0 %v815
    %v870 = vpop.f32.mrb[0].mxu0
    %v871 = vadd.f32 0.0, %v870
    %v872 = vpop.f32.mrb[0].mxu0
    %v873 = vpop.f32.mrb[0].mxu0
    %v874 = vpop.f32.mrb[0].mxu0
    %875 = vdwg.mxu0
    %v876 = vld [vmem:[#allocation2] sm:$0xff]
    %v877 = vld [vmem:[#allocation2 + $0x8] sm:$0xff]
    %v878 = vld [vmem:[#allocation2 + $0x10] sm:$0xff]
    %v879 = vld [vmem:[#allocation2 + $0x18] sm:$0xff]
    %v880 = vld [vmem:[#allocation2 + $0x20] sm:$0x7]
    %v881 = vadd.f32 %v876, %v855
    %v882 = vadd.f32 %v877, %v858
    %v883 = vadd.f32 %v878, %v863
    %v884 = vadd.f32 %v879, %v866
    %v885 = vadd.f32 %v880, %v871
    %886 = vst.msk [vmem:[#allocation2] sm:$0xff] %vm438, %v881
    %887 = vst.msk [vmem:[#allocation2 + $0x8] sm:$0xff] %vm438, %v882
    %888 = vst.msk [vmem:[#allocation2 + $0x10] sm:$0xff] %vm438, %v883
    %889 = vst.msk [vmem:[#allocation2 + $0x18] sm:$0xff] %vm438, %v884
    %890 = vst.msk [vmem:[#allocation2 + $0x20] sm:$0x7] %vm443, %v885
    %s891 = sadd.s32 %s20, 1
    %s892 = smul.addr %s891, 4
    %s893 = scalar_lea.vmem %s0, %s892
    %v894 = vld [vmem:[%s893] sm:$0xf]
    %v895 = vld [vmem:[%s893 + $0x4] sm:$0xf]
    %v896 = vld [vmem:[%s893 + $0x8] sm:$0xf]
    %v897 = vld [vmem:[%s893 + $0xc] sm:$0xf]
    %v898 = vld [vmem:[%s893 + $0x10] sm:$0xf]
    %v899 = vld [vmem:[%s893 + $0x14] sm:$0xf]
    %v900 = vld [vmem:[%s893 + $0x18] sm:$0xf]
    %v909 = vunpack.c.l.s4 1966171168
    %v910 = vunpack.c.0.s8 %v909
    %v911 = vlaneseq
    %v912 = vshrl.u32 %v911, 7
    %v913 = vsub.s32 %v910, %v912
    %v914 = vrot.slane %v894, %v913
    %v915 = vcombine.high %v914, %v914
    %v917 = vunpack.c.l.s4 1966171168
    %v918 = vunpack.c.0.s8 %v917
    %v919 = vlaneseq
    %v920 = vshrl.u32 %v919, 7
    %v921 = vsub.s32 %v918, %v920
    %v922 = vrot.slane %v914, %v921
    %v924 = vunpack.c.l.s4 1966171168
    %v925 = vunpack.c.0.s8 %v924
    %v926 = vlaneseq
    %v927 = vshrl.u32 %v926, 7
    %v928 = vsub.s32 %v925, %v927
    %v929 = vrot.slane %v915, %v928
    %v930 = vcombine.high %v922, %v922
    %v932 = vunpack.c.l.s4 1966171168
    %v933 = vunpack.c.0.s8 %v932
    %v934 = vlaneseq
    %v935 = vshrl.u32 %v934, 7
    %v936 = vsub.s32 %v933, %v935
    %v937 = vrot.slane %v895, %v936
    %v938 = vcombine.high %v937, %v937
    %v940 = vunpack.c.l.s4 1966171168
    %v941 = vunpack.c.0.s8 %v940
    %v942 = vlaneseq
    %v943 = vshrl.u32 %v942, 7
    %v944 = vsub.s32 %v941, %v943
    %v945 = vrot.slane %v937, %v944
    %v947 = vunpack.c.l.s4 1966171168
    %v948 = vunpack.c.0.s8 %v947
    %v949 = vlaneseq
    %v950 = vshrl.u32 %v949, 7
    %v951 = vsub.s32 %v948, %v950
    %v952 = vrot.slane %v938, %v951
    %v953 = vcombine.high %v945, %v945
    %v955 = vunpack.c.l.s4 1966171168
    %v956 = vunpack.c.0.s8 %v955
    %v957 = vlaneseq
    %v958 = vshrl.u32 %v957, 7
    %v959 = vsub.s32 %v956, %v958
    %v960 = vrot.slane %v896, %v959
    %v961 = vcombine.high %v960, %v960
    %v963 = vunpack.c.l.s4 1966171168
    %v964 = vunpack.c.0.s8 %v963
    %v965 = vlaneseq
    %v966 = vshrl.u32 %v965, 7
    %v967 = vsub.s32 %v964, %v966
    %v968 = vrot.slane %v960, %v967
    %v970 = vunpack.c.l.s4 1966171168
    %v971 = vunpack.c.0.s8 %v970
    %v972 = vlaneseq
    %v973 = vshrl.u32 %v972, 7
    %v974 = vsub.s32 %v971, %v973
    %v975 = vrot.slane %v961, %v974
    %v976 = vcombine.high %v968, %v968
    %v978 = vunpack.c.l.s4 1966171168
    %v979 = vunpack.c.0.s8 %v978
    %v980 = vlaneseq
    %v981 = vshrl.u32 %v980, 7
    %v982 = vsub.s32 %v979, %v981
    %v983 = vrot.slane %v897, %v982
    %v984 = vcombine.high %v983, %v983
    %v986 = vunpack.c.l.s4 1966171168
    %v987 = vunpack.c.0.s8 %v986
    %v988 = vlaneseq
    %v989 = vshrl.u32 %v988, 7
    %v990 = vsub.s32 %v987, %v989
    %v991 = vrot.slane %v983, %v990
    %v993 = vunpack.c.l.s4 1966171168
    %v994 = vunpack.c.0.s8 %v993
    %v995 = vlaneseq
    %v996 = vshrl.u32 %v995, 7
    %v997 = vsub.s32 %v994, %v996
    %v998 = vrot.slane %v984, %v997
    %v999 = vcombine.high %v991, %v991
    %v1001 = vunpack.c.l.s4 1966171168
    %v1002 = vunpack.c.0.s8 %v1001
    %v1003 = vlaneseq
    %v1004 = vshrl.u32 %v1003, 7
    %v1005 = vsub.s32 %v1002, %v1004
    %v1006 = vrot.slane %v898, %v1005
    %v1007 = vcombine.high %v1006, %v1006
    %v1009 = vunpack.c.l.s4 1966171168
    %v1010 = vunpack.c.0.s8 %v1009
    %v1011 = vlaneseq
    %v1012 = vshrl.u32 %v1011, 7
    %v1013 = vsub.s32 %v1010, %v1012
    %v1014 = vrot.slane %v1006, %v1013
    %v1016 = vunpack.c.l.s4 1966171168
    %v1017 = vunpack.c.0.s8 %v1016
    %v1018 = vlaneseq
    %v1019 = vshrl.u32 %v1018, 7
    %v1020 = vsub.s32 %v1017, %v1019
    %v1021 = vrot.slane %v1007, %v1020
    %v1022 = vcombine.high %v1014, %v1014
    %v1024 = vunpack.c.l.s4 1966171168
    %v1025 = vunpack.c.0.s8 %v1024
    %v1026 = vlaneseq
    %v1027 = vshrl.u32 %v1026, 7
    %v1028 = vsub.s32 %v1025, %v1027
    %v1029 = vrot.slane %v899, %v1028
    %v1030 = vcombine.high %v1029, %v1029
    %v1032 = vunpack.c.l.s4 1966171168
    %v1033 = vunpack.c.0.s8 %v1032
    %v1034 = vlaneseq
    %v1035 = vshrl.u32 %v1034, 7
    %v1036 = vsub.s32 %v1033, %v1035
    %v1037 = vrot.slane %v1029, %v1036
    %v1039 = vunpack.c.l.s4 1966171168
    %v1040 = vunpack.c.0.s8 %v1039
    %v1041 = vlaneseq
    %v1042 = vshrl.u32 %v1041, 7
    %v1043 = vsub.s32 %v1040, %v1042
    %v1044 = vrot.slane %v1030, %v1043
    %v1045 = vcombine.high %v1037, %v1037
    %v1047 = vunpack.c.l.s4 1966171168
    %v1048 = vunpack.c.0.s8 %v1047
    %v1049 = vlaneseq
    %v1050 = vshrl.u32 %v1049, 7
    %v1051 = vsub.s32 %v1048, %v1050
    %v1052 = vrot.slane %v900, %v1051
    %v1053 = vcombine.high %v1052, %v1052
    %v1055 = vunpack.c.l.s4 1966171168
    %v1056 = vunpack.c.0.s8 %v1055
    %v1057 = vlaneseq
    %v1058 = vshrl.u32 %v1057, 7
    %v1059 = vsub.s32 %v1056, %v1058
    %v1060 = vrot.slane %v1052, %v1059
    %v1062 = vunpack.c.l.s4 1966171168
    %v1063 = vunpack.c.0.s8 %v1062
    %v1064 = vlaneseq
    %v1065 = vshrl.u32 %v1064, 7
    %v1066 = vsub.s32 %v1063, %v1065
    %v1067 = vrot.slane %v1053, %v1066
    %v1068 = vcombine.high %v1060, %v1060
    %v1069 = vunpack.i.l.s16 %v922
    %v1070 = vunpack.i.h.s16 %v922
    %v1071 = vunpack.i.l.s16 %v929
    %v1072 = vunpack.i.h.s16 %v929
    %v1073 = vunpack.i.l.s16 %v930
    %v1074 = vunpack.i.l.s16 %v945
    %v1075 = vunpack.i.h.s16 %v945
    %v1076 = vunpack.i.l.s16 %v952
    %v1077 = vunpack.i.h.s16 %v952
    %v1078 = vunpack.i.l.s16 %v953
    %v1079 = vunpack.i.l.s16 %v968
    %v1080 = vunpack.i.h.s16 %v968
    %v1081 = vunpack.i.l.s16 %v975
    %v1082 = vunpack.i.h.s16 %v975
    %v1083 = vunpack.i.l.s16 %v976
    %v1084 = vunpack.i.l.s16 %v991
    %v1085 = vunpack.i.h.s16 %v991
    %v1086 = vunpack.i.l.s16 %v998
    %v1087 = vunpack.i.h.s16 %v998
    %v1088 = vunpack.i.l.s16 %v999
    %v1089 = vunpack.i.l.s16 %v1014
    %v1090 = vunpack.i.h.s16 %v1014
    %v1091 = vunpack.i.l.s16 %v1021
    %v1092 = vunpack.i.h.s16 %v1021
    %v1093 = vunpack.i.l.s16 %v1022
    %v1094 = vunpack.i.l.s16 %v1037
    %v1095 = vunpack.i.h.s16 %v1037
    %v1096 = vunpack.i.l.s16 %v1044
    %v1097 = vunpack.i.h.s16 %v1044
    %v1098 = vunpack.i.l.s16 %v1045
    %v1099 = vunpack.i.l.s16 %v1060
    %v1100 = vunpack.i.h.s16 %v1060
    %v1101 = vunpack.i.l.s16 %v1067
    %v1102 = vunpack.i.h.s16 %v1067
    %v1103 = vunpack.i.l.s16 %v1068
    %s1104 = scalar_lea.vmem %s1, 12
    %v1105 = vld [vmem:[%s1104] sm:$0x7]
    %v1106 = vpack.i.b16 %v1070, %v1069
    %v1107 = vpack.i.b16 %v1072, %v1071
    %v1108 = vpack.i.b16 %v1074, %v1073
    %v1109 = vpack.i.b16 %v1076, %v1075
    %v1110 = vpack.i.b16 %v1078, %v1077
    %v1111 = vpack.i.b16 %v1080, %v1079
    %v1112 = vpack.i.b16 %v1082, %v1081
    %v1113 = vpack.i.b16 %v1084, %v1083
    %v1114 = vpack.i.b16 %v1086, %v1085
    %v1115 = vpack.i.b16 %v1088, %v1087
    %v1116 = vpack.i.b16 %v1090, %v1089
    %v1117 = vpack.i.b16 %v1092, %v1091
    %v1118 = vpack.i.b16 %v1094, %v1093
    %v1119 = vpack.i.b16 %v1096, %v1095
    %v1120 = vpack.i.b16 %v1098, %v1097
    %v1121 = vpack.i.b16 %v1100, %v1099
    %v1122 = vpack.i.b16 %v1102, %v1101
    %v1124 = vcombine.low %v1106, %v1107
    %v1125 = vcombine.low %v1108, %v1109
    %v1126 = vcombine.low %v1110, %v1111
    %v1127 = vcombine.low %v1112, %v1113
    %v1129 = vunpack.c.l.s4 1966171168
    %v1130 = vunpack.c.0.s8 %v1129
    %v1131 = vlaneseq
    %v1132 = vshrl.u32 %v1131, 7
    %v1133 = vsub.s32 %v1130, %v1132
    %v1134 = vrot.slane %v1124, %v1133
    %v1136 = vunpack.c.l.s4 1966171168
    %v1137 = vunpack.c.0.s8 %v1136
    %v1138 = vlaneseq
    %v1139 = vshrl.u32 %v1138, 7
    %v1140 = vsub.s32 %v1137, %v1139
    %v1141 = vrot.slane %v1125, %v1140
    %v1143 = vunpack.c.l.s4 1966171168
    %v1144 = vunpack.c.0.s8 %v1143
    %v1145 = vlaneseq
    %v1146 = vshrl.u32 %v1145, 7
    %v1147 = vsub.s32 %v1144, %v1146
    %v1148 = vrot.slane %v1126, %v1147
    %v1150 = vunpack.c.l.s4 1966171168
    %v1151 = vunpack.c.0.s8 %v1150
    %v1152 = vlaneseq
    %v1153 = vshrl.u32 %v1152, 7
    %v1154 = vsub.s32 %v1151, %v1153
    %v1155 = vrot.slane %v1127, %v1154
    %v1156 = vcombine.low %v1134, %v1141
    %v1157 = vcombine.low %v1148, %v1155
    %v1159 = vunpack.c.l.s4 1966171168
    %v1160 = vunpack.c.0.s8 %v1159
    %v1161 = vlaneseq
    %v1162 = vshrl.u32 %v1161, 7
    %v1163 = vsub.s32 %v1160, %v1162
    %v1164 = vrot.slane %v1156, %v1163
    %v1166 = vunpack.c.l.s4 1966171168
    %v1167 = vunpack.c.0.s8 %v1166
    %v1168 = vlaneseq
    %v1169 = vshrl.u32 %v1168, 7
    %v1170 = vsub.s32 %v1167, %v1169
    %v1171 = vrot.slane %v1157, %v1170
    %v1172 = vcombine.low %v1164, %v1171
    %v1173 = vcombine.low %v1114, %v1115
    %v1174 = vcombine.low %v1116, %v1117
    %v1175 = vcombine.low %v1118, %v1119
    %v1176 = vcombine.low %v1120, %v1121
    %v1178 = vunpack.c.l.s4 1966171168
    %v1179 = vunpack.c.0.s8 %v1178
    %v1180 = vlaneseq
    %v1181 = vshrl.u32 %v1180, 7
    %v1182 = vsub.s32 %v1179, %v1181
    %v1183 = vrot.slane %v1173, %v1182
    %v1185 = vunpack.c.l.s4 1966171168
    %v1186 = vunpack.c.0.s8 %v1185
    %v1187 = vlaneseq
    %v1188 = vshrl.u32 %v1187, 7
    %v1189 = vsub.s32 %v1186, %v1188
    %v1190 = vrot.slane %v1174, %v1189
    %v1192 = vunpack.c.l.s4 1966171168
    %v1193 = vunpack.c.0.s8 %v1192
    %v1194 = vlaneseq
    %v1195 = vshrl.u32 %v1194, 7
    %v1196 = vsub.s32 %v1193, %v1195
    %v1197 = vrot.slane %v1175, %v1196
    %v1199 = vunpack.c.l.s4 1966171168
    %v1200 = vunpack.c.0.s8 %v1199
    %v1201 = vlaneseq
    %v1202 = vshrl.u32 %v1201, 7
    %v1203 = vsub.s32 %v1200, %v1202
    %v1204 = vrot.slane %v1176, %v1203
    %v1205 = vcombine.low %v1183, %v1190
    %v1206 = vcombine.low %v1197, %v1204
    %v1208 = vunpack.c.l.s4 1966171168
    %v1209 = vunpack.c.0.s8 %v1208
    %v1210 = vlaneseq
    %v1211 = vshrl.u32 %v1210, 7
    %v1212 = vsub.s32 %v1209, %v1211
    %v1213 = vrot.slane %v1205, %v1212
    %v1215 = vunpack.c.l.s4 1966171168
    %v1216 = vunpack.c.0.s8 %v1215
    %v1217 = vlaneseq
    %v1218 = vshrl.u32 %v1217, 7
    %v1219 = vsub.s32 %v1216, %v1218
    %v1220 = vrot.slane %v1206, %v1219
    %v1221 = vcombine.low %v1213, %v1220
    %v1222 = vcombine.low %v1122, %v1103
    %v1224 = vunpack.c.l.s4 1966171168
    %v1225 = vunpack.c.0.s8 %v1224
    %v1226 = vlaneseq
    %v1227 = vshrl.u32 %v1226, 7
    %v1228 = vsub.s32 %v1225, %v1227
    %v1229 = vrot.slane %v1222, %v1228
    %v1231 = vunpack.c.l.s4 1966171168
    %v1232 = vunpack.c.0.s8 %v1231
    %v1233 = vlaneseq
    %v1234 = vshrl.u32 %v1233, 7
    %v1235 = vsub.s32 %v1232, %v1234
    %v1236 = vrot.slane %v1229, %v1235
    %v1238 = vsel %vm365, %v1172, 0
    %v1241 = vsel %vm365, %v1221, 0
    %v1244 = vsel %vm365, %v1236, 0
    %v1247 = vand.u32 %v1105, %v378
    %1249 = vmatprep.subr.bf16.mxu0 0
    %1250 = vmatpush1.bf16.msra.mxu0 %v1247
    %1251 = vmatprep.subr.bf16.mxu0 0
    %1252 = vmatpush1.bf16.msra.mxu0 0
    %1253 = vmatprep.subr.bf16.mxu0 0
    %1254 = vmatpush1.bf16.msra.mxu0 0
    %1255 = vmatprep.subr.bf16.mxu0 0
    %1256 = vmatpush1.bf16.msra.mxu0 0
    %1257 = vmatprep.subr.bf16.mxu0 0
    %1258 = vmatpush1.bf16.msra.mxu0 0
    %1259 = vmatprep.subr.bf16.mxu0 0
    %1260 = vmatpush1.bf16.msra.mxu0 0
    %1261 = vmatprep.subr.bf16.mxu0 0
    %1262 = vmatpush1.bf16.msra.mxu0 0
    %1263 = vmatprep.subr.bf16.mxu0 0
    %1264 = vmatpush1.bf16.msra.mxu0 0
    %1265 = vmatprep.subr.bf16.mxu0 0
    %1266 = vmatpush1.bf16.msra.mxu0 0
    %1267 = vmatprep.subr.bf16.mxu0 0
    %1268 = vmatpush1.bf16.msra.mxu0 0
    %1269 = vmatprep.subr.bf16.mxu0 0
    %1270 = vmatpush1.bf16.msra.mxu0 0
    %1271 = vmatprep.subr.bf16.mxu0 0
    %1272 = vmatpush1.bf16.msra.mxu0 0
    %1273 = vmatprep.subr.bf16.mxu0 0
    %1274 = vmatpush1.bf16.msra.mxu0 0
    %1275 = vmatprep.subr.bf16.mxu0 0
    %1276 = vmatpush1.bf16.msra.mxu0 0
    %1277 = vmatprep.subr.bf16.mxu0 0
    %1278 = vmatpush1.bf16.msra.mxu0 0
    %1279 = vmatprep.subr.bf16.mxu0 0
    %1280 = vmatpush1.bf16.msra.mxu0 0
    %1281 = vmatprep.mubr.bf16.mxu0 0
    %1282 = vmatmul.mubr.bf16.gmra.mrb[0].mxu0 %v1238
    %v1283 = vpop.f32.mrb[0].mxu0
    %v1284 = vadd.f32 0.0, %v1283
    %v1285 = vpop.f32.mrb[0].mxu0
    %v1286 = vpop.f32.mrb[0].mxu0
    %v1287 = vadd.f32 0.0, %v1286
    %v1288 = vpop.f32.mrb[0].mxu0
    %1289 = vmatprep.mubr.bf16.mxu0 0
    %1290 = vmatmul.mubr.bf16.gmra.mrb[0].mxu0 %v1241
    %v1291 = vpop.f32.mrb[0].mxu0
    %v1292 = vadd.f32 0.0, %v1291
    %v1293 = vpop.f32.mrb[0].mxu0
    %v1294 = vpop.f32.mrb[0].mxu0
    %v1295 = vadd.f32 0.0, %v1294
    %v1296 = vpop.f32.mrb[0].mxu0
    %1297 = vmatprep.mubr.bf16.mxu0 0
    %1298 = vmatmul.mubr.bf16.gmra.mrb[0].mxu0 %v1244
    %v1299 = vpop.f32.mrb[0].mxu0
    %v1300 = vadd.f32 0.0, %v1299
    %v1301 = vpop.f32.mrb[0].mxu0
    %v1302 = vpop.f32.mrb[0].mxu0
    %v1303 = vpop.f32.mrb[0].mxu0
    %1304 = vdwg.mxu0
    %v1305 = vld [vmem:[#allocation2] sm:$0xff]
    %v1306 = vld [vmem:[#allocation2 + $0x8] sm:$0xff]
    %v1307 = vld [vmem:[#allocation2 + $0x10] sm:$0xff]
    %v1308 = vld [vmem:[#allocation2 + $0x18] sm:$0xff]
    %v1309 = vld [vmem:[#allocation2 + $0x20] sm:$0x7]
    %v1310 = vadd.f32 %v1305, %v1284
    %v1311 = vadd.f32 %v1306, %v1287
    %v1312 = vadd.f32 %v1307, %v1292
    %v1313 = vadd.f32 %v1308, %v1295
    %v1314 = vadd.f32 %v1309, %v1300
    %1315 = vst.msk [vmem:[#allocation2] sm:$0xff] %vm438, %v1310
    %1316 = vst.msk [vmem:[#allocation2 + $0x8] sm:$0xff] %vm438, %v1311
    %1317 = vst.msk [vmem:[#allocation2 + $0x10] sm:$0xff] %vm438, %v1312
    %1318 = vst.msk [vmem:[#allocation2 + $0x18] sm:$0xff] %vm438, %v1313
    %1319 = vst.msk [vmem:[#allocation2 + $0x20] sm:$0x7] %vm443, %v1314
    %v1320 = vunpack.i.h.s16 %v930
    %v1321 = vunpack.i.h.s16 %v953
    %v1322 = vunpack.i.h.s16 %v976
    %v1323 = vunpack.i.h.s16 %v999
    %v1324 = vunpack.i.h.s16 %v1022
    %v1325 = vunpack.i.h.s16 %v1045
    %v1326 = vunpack.i.h.s16 %v1068
    %s1327 = scalar_lea.vmem %s1, 16
    %v1328 = vld [vmem:[%s1327] sm:$0x7]
    %v1329 = vpack.i.b16 %v1071, %v1070
    %v1330 = vpack.i.b16 %v1073, %v1072
    %v1331 = vpack.i.b16 %v1075, %v1320
    %v1332 = vpack.i.b16 %v1077, %v1076
    %v1333 = vpack.i.b16 %v1321, %v1078
    %v1334 = vpack.i.b16 %v1081, %v1080
    %v1335 = vpack.i.b16 %v1083, %v1082
    %v1336 = vpack.i.b16 %v1085, %v1322
    %v1337 = vpack.i.b16 %v1087, %v1086
    %v1338 = vpack.i.b16 %v1323, %v1088
    %v1339 = vpack.i.b16 %v1091, %v1090
    %v1340 = vpack.i.b16 %v1093, %v1092
    %v1341 = vpack.i.b16 %v1095, %v1324
    %v1342 = vpack.i.b16 %v1097, %v1096
    %v1343 = vpack.i.b16 %v1325, %v1098
    %v1344 = vpack.i.b16 %v1101, %v1100
    %v1345 = vpack.i.b16 %v1103, %v1102
    %v1347 = vcombine.low %v1329, %v1330
    %v1348 = vcombine.low %v1331, %v1332
    %v1349 = vcombine.low %v1333, %v1334
    %v1350 = vcombine.low %v1335, %v1336
    %v1352 = vunpack.c.l.s4 1966171168
    %v1353 = vunpack.c.0.s8 %v1352
    %v1354 = vlaneseq
    %v1355 = vshrl.u32 %v1354, 7
    %v1356 = vsub.s32 %v1353, %v1355
    %v1357 = vrot.slane %v1347, %v1356
    %v1359 = vunpack.c.l.s4 1966171168
    %v1360 = vunpack.c.0.s8 %v1359
    %v1361 = vlaneseq
    %v1362 = vshrl.u32 %v1361, 7
    %v1363 = vsub.s32 %v1360, %v1362
    %v1364 = vrot.slane %v1348, %v1363
    %v1366 = vunpack.c.l.s4 1966171168
    %v1367 = vunpack.c.0.s8 %v1366
    %v1368 = vlaneseq
    %v1369 = vshrl.u32 %v1368, 7
    %v1370 = vsub.s32 %v1367, %v1369
    %v1371 = vrot.slane %v1349, %v1370
    %v1373 = vunpack.c.l.s4 1966171168
    %v1374 = vunpack.c.0.s8 %v1373
    %v1375 = vlaneseq
    %v1376 = vshrl.u32 %v1375, 7
    %v1377 = vsub.s32 %v1374, %v1376
    %v1378 = vrot.slane %v1350, %v1377
    %v1379 = vcombine.low %v1357, %v1364
    %v1380 = vcombine.low %v1371, %v1378
    %v1382 = vunpack.c.l.s4 1966171168
    %v1383 = vunpack.c.0.s8 %v1382
    %v1384 = vlaneseq
    %v1385 = vshrl.u32 %v1384, 7
    %v1386 = vsub.s32 %v1383, %v1385
    %v1387 = vrot.slane %v1379, %v1386
    %v1389 = vunpack.c.l.s4 1966171168
    %v1390 = vunpack.c.0.s8 %v1389
    %v1391 = vlaneseq
    %v1392 = vshrl.u32 %v1391, 7
    %v1393 = vsub.s32 %v1390, %v1392
    %v1394 = vrot.slane %v1380, %v1393
    %v1395 = vcombine.low %v1387, %v1394
    %v1396 = vcombine.low %v1337, %v1338
    %v1397 = vcombine.low %v1339, %v1340
    %v1398 = vcombine.low %v1341, %v1342
    %v1399 = vcombine.low %v1343, %v1344
    %v1401 = vunpack.c.l.s4 1966171168
    %v1402 = vunpack.c.0.s8 %v1401
    %v1403 = vlaneseq
    %v1404 = vshrl.u32 %v1403, 7
    %v1405 = vsub.s32 %v1402, %v1404
    %v1406 = vrot.slane %v1396, %v1405
    %v1408 = vunpack.c.l.s4 1966171168
    %v1409 = vunpack.c.0.s8 %v1408
    %v1410 = vlaneseq
    %v1411 = vshrl.u32 %v1410, 7
    %v1412 = vsub.s32 %v1409, %v1411
    %v1413 = vrot.slane %v1397, %v1412
    %v1415 = vunpack.c.l.s4 1966171168
    %v1416 = vunpack.c.0.s8 %v1415
    %v1417 = vlaneseq
    %v1418 = vshrl.u32 %v1417, 7
    %v1419 = vsub.s32 %v1416, %v1418
    %v1420 = vrot.slane %v1398, %v1419
    %v1422 = vunpack.c.l.s4 1966171168
    %v1423 = vunpack.c.0.s8 %v1422
    %v1424 = vlaneseq
    %v1425 = vshrl.u32 %v1424, 7
    %v1426 = vsub.s32 %v1423, %v1425
    %v1427 = vrot.slane %v1399, %v1426
    %v1428 = vcombine.low %v1406, %v1413
    %v1429 = vcombine.low %v1420, %v1427
    %v1431 = vunpack.c.l.s4 1966171168
    %v1432 = vunpack.c.0.s8 %v1431
    %v1433 = vlaneseq
    %v1434 = vshrl.u32 %v1433, 7
    %v1435 = vsub.s32 %v1432, %v1434
    %v1436 = vrot.slane %v1428, %v1435
    %v1438 = vunpack.c.l.s4 1966171168
    %v1439 = vunpack.c.0.s8 %v1438
    %v1440 = vlaneseq
    %v1441 = vshrl.u32 %v1440, 7
    %v1442 = vsub.s32 %v1439, %v1441
    %v1443 = vrot.slane %v1429, %v1442
    %v1444 = vcombine.low %v1436, %v1443
    %v1445 = vcombine.low %v1345, %v1326
    %v1447 = vunpack.c.l.s4 1966171168
    %v1448 = vunpack.c.0.s8 %v1447
    %v1449 = vlaneseq
    %v1450 = vshrl.u32 %v1449, 7
    %v1451 = vsub.s32 %v1448, %v1450
    %v1452 = vrot.slane %v1445, %v1451
    %v1454 = vunpack.c.l.s4 1966171168
    %v1455 = vunpack.c.0.s8 %v1454
    %v1456 = vlaneseq
    %v1457 = vshrl.u32 %v1456, 7
    %v1458 = vsub.s32 %v1455, %v1457
    %v1459 = vrot.slane %v1452, %v1458
    %v1461 = vsel %vm365, %v1395, 0
    %v1464 = vsel %vm365, %v1444, 0
    %v1467 = vsel %vm365, %v1459, 0
    %v1470 = vand.u32 %v1328, %v378
    %1472 = vmatprep.subr.bf16.mxu0 0
    %1473 = vmatpush1.bf16.msra.mxu0 %v1470
    %1474 = vmatprep.subr.bf16.mxu0 0
    %1475 = vmatpush1.bf16.msra.mxu0 0
    %1476 = vmatprep.subr.bf16.mxu0 0
    %1477 = vmatpush1.bf16.msra.mxu0 0
    %1478 = vmatprep.subr.bf16.mxu0 0
    %1479 = vmatpush1.bf16.msra.mxu0 0
    %1480 = vmatprep.subr.bf16.mxu0 0
    %1481 = vmatpush1.bf16.msra.mxu0 0
    %1482 = vmatprep.subr.bf16.mxu0 0
    %1483 = vmatpush1.bf16.msra.mxu0 0
    %1484 = vmatprep.subr.bf16.mxu0 0
    %1485 = vmatpush1.bf16.msra.mxu0 0
    %1486 = vmatprep.subr.bf16.mxu0 0
    %1487 = vmatpush1.bf16.msra.mxu0 0
    %1488 = vmatprep.subr.bf16.mxu0 0
    %1489 = vmatpush1.bf16.msra.mxu0 0
    %1490 = vmatprep.subr.bf16.mxu0 0
    %1491 = vmatpush1.bf16.msra.mxu0 0
    %1492 = vmatprep.subr.bf16.mxu0 0
    %1493 = vmatpush1.bf16.msra.mxu0 0
    %1494 = vmatprep.subr.bf16.mxu0 0
    %1495 = vmatpush1.bf16.msra.mxu0 0
    %1496 = vmatprep.subr.bf16.mxu0 0
    %1497 = vmatpush1.bf16.msra.mxu0 0
    %1498 = vmatprep.subr.bf16.mxu0 0
    %1499 = vmatpush1.bf16.msra.mxu0 0
    %1500 = vmatprep.subr.bf16.mxu0 0
    %1501 = vmatpush1.bf16.msra.mxu0 0
    %1502 = vmatprep.subr.bf16.mxu0 0
    %1503 = vmatpush1.bf16.msra.mxu0 0
    %1504 = vmatprep.mubr.bf16.mxu0 0
    %1505 = vmatmul.mubr.bf16.gmra.mrb[0].mxu0 %v1461
    %v1506 = vpop.f32.mrb[0].mxu0
    %v1507 = vadd.f32 0.0, %v1506
    %v1508 = vpop.f32.mrb[0].mxu0
    %v1509 = vpop.f32.mrb[0].mxu0
    %v1510 = vadd.f32 0.0, %v1509
    %v1511 = vpop.f32.mrb[0].mxu0
    %1512 = vmatprep.mubr.bf16.mxu0 0
    %1513 = vmatmul.mubr.bf16.gmra.mrb[0].mxu0 %v1464
    %v1514 = vpop.f32.mrb[0].mxu0
    %v1515 = vadd.f32 0.0, %v1514
    %v1516 = vpop.f32.mrb[0].mxu0
    %v1517 = vpop.f32.mrb[0].mxu0
    %v1518 = vadd.f32 0.0, %v1517
    %v1519 = vpop.f32.mrb[0].mxu0
    %1520 = vmatprep.mubr.bf16.mxu0 0
    %1521 = vmatmul.mubr.bf16.gmra.mrb[0].mxu0 %v1467
    %v1522 = vpop.f32.mrb[0].mxu0
    %v1523 = vadd.f32 0.0, %v1522
    %v1524 = vpop.f32.mrb[0].mxu0
    %v1525 = vpop.f32.mrb[0].mxu0
    %v1526 = vpop.f32.mrb[0].mxu0
    %1527 = vdwg.mxu0
    %v1528 = vld [vmem:[#allocation2] sm:$0xff]
    %v1529 = vld [vmem:[#allocation2 + $0x8] sm:$0xff]
    %v1530 = vld [vmem:[#allocation2 + $0x10] sm:$0xff]
    %v1531 = vld [vmem:[#allocation2 + $0x18] sm:$0xff]
    %v1532 = vld [vmem:[#allocation2 + $0x20] sm:$0x7]
    %v1533 = vadd.f32 %v1528, %v1507
    %v1534 = vadd.f32 %v1529, %v1510
    %v1535 = vadd.f32 %v1530, %v1515
    %v1536 = vadd.f32 %v1531, %v1518
    %v1537 = vadd.f32 %v1532, %v1523
    %1538 = vst.msk [vmem:[#allocation2] sm:$0xff] %vm438, %v1533
    %1539 = vst.msk [vmem:[#allocation2 + $0x8] sm:$0xff] %vm438, %v1534
    %1540 = vst.msk [vmem:[#allocation2 + $0x10] sm:$0xff] %vm438, %v1535
    %1541 = vst.msk [vmem:[#allocation2 + $0x18] sm:$0xff] %vm438, %v1536
    %1542 = vst.msk [vmem:[#allocation2 + $0x20] sm:$0x7] %vm443, %v1537
    %v1543 = vcombine.high %v929, %v929
    %v1544 = vcombine.high %v952, %v952
    %v1545 = vcombine.high %v975, %v975
    %v1546 = vcombine.high %v998, %v998
    %v1547 = vcombine.high %v1021, %v1021
    %v1548 = vcombine.high %v1044, %v1044
    %v1549 = vcombine.high %v1067, %v1067
    %v1550 = vunpack.i.l.s16 %v1543
    %v1551 = vunpack.i.l.s16 %v1544
    %v1552 = vunpack.i.l.s16 %v1545
    %v1553 = vunpack.i.l.s16 %v1546
    %v1554 = vunpack.i.l.s16 %v1547
    %v1555 = vunpack.i.l.s16 %v1548
    %v1556 = vunpack.i.l.s16 %v1549
    %s1557 = scalar_lea.vmem %s1, 20
    %v1558 = vld [vmem:[%s1557] sm:$0x7]
    %v1559 = vpack.i.b16 %v1320, %v1073
    %v1560 = vpack.i.b16 %v1076, %v1550
    %v1561 = vpack.i.b16 %v1551, %v1321
    %v1562 = vpack.i.b16 %v1322, %v1083
    %v1563 = vpack.i.b16 %v1086, %v1552
    %v1564 = vpack.i.b16 %v1553, %v1323
    %v1565 = vpack.i.b16 %v1324, %v1093
    %v1566 = vpack.i.b16 %v1096, %v1554
    %v1567 = vpack.i.b16 %v1555, %v1325
    %v1568 = vpack.i.b16 %v1326, %v1103
    %v1570 = vcombine.low %v1107, %v1559
    %v1571 = vcombine.low %v1560, %v1110
    %v1572 = vcombine.low %v1561, %v1112
    %v1573 = vcombine.low %v1562, %v1563
    %v1575 = vunpack.c.l.s4 1966171168
    %v1576 = vunpack.c.0.s8 %v1575
    %v1577 = vlaneseq
    %v1578 = vshrl.u32 %v1577, 7
    %v1579 = vsub.s32 %v1576, %v1578
    %v1580 = vrot.slane %v1570, %v1579
    %v1582 = vunpack.c.l.s4 1966171168
    %v1583 = vunpack.c.0.s8 %v1582
    %v1584 = vlaneseq
    %v1585 = vshrl.u32 %v1584, 7
    %v1586 = vsub.s32 %v1583, %v1585
    %v1587 = vrot.slane %v1571, %v1586
    %v1589 = vunpack.c.l.s4 1966171168
    %v1590 = vunpack.c.0.s8 %v1589
    %v1591 = vlaneseq
    %v1592 = vshrl.u32 %v1591, 7
    %v1593 = vsub.s32 %v1590, %v1592
    %v1594 = vrot.slane %v1572, %v1593
    %v1596 = vunpack.c.l.s4 1966171168
    %v1597 = vunpack.c.0.s8 %v1596
    %v1598 = vlaneseq
    %v1599 = vshrl.u32 %v1598, 7
    %v1600 = vsub.s32 %v1597, %v1599
    %v1601 = vrot.slane %v1573, %v1600
    %v1602 = vcombine.low %v1580, %v1587
    %v1603 = vcombine.low %v1594, %v1601
    %v1605 = vunpack.c.l.s4 1966171168
    %v1606 = vunpack.c.0.s8 %v1605
    %v1607 = vlaneseq
    %v1608 = vshrl.u32 %v1607, 7
    %v1609 = vsub.s32 %v1606, %v1608
    %v1610 = vrot.slane %v1602, %v1609
    %v1612 = vunpack.c.l.s4 1966171168
    %v1613 = vunpack.c.0.s8 %v1612
    %v1614 = vlaneseq
    %v1615 = vshrl.u32 %v1614, 7
    %v1616 = vsub.s32 %v1613, %v1615
    %v1617 = vrot.slane %v1603, %v1616
    %v1618 = vcombine.low %v1610, %v1617
    %v1619 = vcombine.low %v1115, %v1564
    %v1620 = vcombine.low %v1117, %v1565
    %v1621 = vcombine.low %v1566, %v1120
    %v1622 = vcombine.low %v1567, %v1122
    %v1624 = vunpack.c.l.s4 1966171168
    %v1625 = vunpack.c.0.s8 %v1624
    %v1626 = vlaneseq
    %v1627 = vshrl.u32 %v1626, 7
    %v1628 = vsub.s32 %v1625, %v1627
    %v1629 = vrot.slane %v1619, %v1628
    %v1631 = vunpack.c.l.s4 1966171168
    %v1632 = vunpack.c.0.s8 %v1631
    %v1633 = vlaneseq
    %v1634 = vshrl.u32 %v1633, 7
    %v1635 = vsub.s32 %v1632, %v1634
    %v1636 = vrot.slane %v1620, %v1635
    %v1638 = vunpack.c.l.s4 1966171168
    %v1639 = vunpack.c.0.s8 %v1638
    %v1640 = vlaneseq
    %v1641 = vshrl.u32 %v1640, 7
    %v1642 = vsub.s32 %v1639, %v1641
    %v1643 = vrot.slane %v1621, %v1642
    %v1645 = vunpack.c.l.s4 1966171168
    %v1646 = vunpack.c.0.s8 %v1645
    %v1647 = vlaneseq
    %v1648 = vshrl.u32 %v1647, 7
    %v1649 = vsub.s32 %v1646, %v1648
    %v1650 = vrot.slane %v1622, %v1649
    %v1651 = vcombine.low %v1629, %v1636
    %v1652 = vcombine.low %v1643, %v1650
    %v1654 = vunpack.c.l.s4 1966171168
    %v1655 = vunpack.c.0.s8 %v1654
    %v1656 = vlaneseq
    %v1657 = vshrl.u32 %v1656, 7
    %v1658 = vsub.s32 %v1655, %v1657
    %v1659 = vrot.slane %v1651, %v1658
    %v1661 = vunpack.c.l.s4 1966171168
    %v1662 = vunpack.c.0.s8 %v1661
    %v1663 = vlaneseq
    %v1664 = vshrl.u32 %v1663, 7
    %v1665 = vsub.s32 %v1662, %v1664
    %v1666 = vrot.slane %v1652, %v1665
    %v1667 = vcombine.low %v1659, %v1666
    %v1668 = vcombine.low %v1568, %v1556
    %v1670 = vunpack.c.l.s4 1966171168
    %v1671 = vunpack.c.0.s8 %v1670
    %v1672 = vlaneseq
    %v1673 = vshrl.u32 %v1672, 7
    %v1674 = vsub.s32 %v1671, %v1673
    %v1675 = vrot.slane %v1668, %v1674
    %v1677 = vunpack.c.l.s4 1966171168
    %v1678 = vunpack.c.0.s8 %v1677
    %v1679 = vlaneseq
    %v1680 = vshrl.u32 %v1679, 7
    %v1681 = vsub.s32 %v1678, %v1680
    %v1682 = vrot.slane %v1675, %v1681
    %v1684 = vsel %vm365, %v1618, 0
    %v1687 = vsel %vm365, %v1667, 0
    %v1690 = vsel %vm365, %v1682, 0
    %v1693 = vand.u32 %v1558, %v378
    %1695 = vmatprep.subr.bf16.mxu0 0
    %1696 = vmatpush1.bf16.msra.mxu0 %v1693
    %1697 = vmatprep.subr.bf16.mxu0 0
    %1698 = vmatpush1.bf16.msra.mxu0 0
    %1699 = vmatprep.subr.bf16.mxu0 0
    %1700 = vmatpush1.bf16.msra.mxu0 0
    %1701 = vmatprep.subr.bf16.mxu0 0
    %1702 = vmatpush1.bf16.msra.mxu0 0
    %1703 = vmatprep.subr.bf16.mxu0 0
    %1704 = vmatpush1.bf16.msra.mxu0 0
    %1705 = vmatprep.subr.bf16.mxu0 0
    %1706 = vmatpush1.bf16.msra.mxu0 0
    %1707 = vmatprep.subr.bf16.mxu0 0
    %1708 = vmatpush1.bf16.msra.mxu0 0
    %1709 = vmatprep.subr.bf16.mxu0 0
    %1710 = vmatpush1.bf16.msra.mxu0 0
    %1711 = vmatprep.subr.bf16.mxu0 0
    %1712 = vmatpush1.bf16.msra.mxu0 0
    %1713 = vmatprep.subr.bf16.mxu0 0
    %1714 = vmatpush1.bf16.msra.mxu0 0
    %1715 = vmatprep.subr.bf16.mxu0 0
    %1716 = vmatpush1.bf16.msra.mxu0 0
    %1717 = vmatprep.subr.bf16.mxu0 0
    %1718 = vmatpush1.bf16.msra.mxu0 0
    %1719 = vmatprep.subr.bf16.mxu0 0
    %1720 = vmatpush1.bf16.msra.mxu0 0
    %1721 = vmatprep.subr.bf16.mxu0 0
    %1722 = vmatpush1.bf16.msra.mxu0 0
    %1723 = vmatprep.subr.bf16.mxu0 0
    %1724 = vmatpush1.bf16.msra.mxu0 0
    %1725 = vmatprep.subr.bf16.mxu0 0
    %1726 = vmatpush1.bf16.msra.mxu0 0
    %1727 = vmatprep.mubr.bf16.mxu0 0
    %1728 = vmatmul.mubr.bf16.gmra.mrb[0].mxu0 %v1684
    %v1729 = vpop.f32.mrb[0].mxu0
    %v1730 = vadd.f32 0.0, %v1729
    %v1731 = vpop.f32.mrb[0].mxu0
    %v1732 = vpop.f32.mrb[0].mxu0
    %v1733 = vadd.f32 0.0, %v1732
    %v1734 = vpop.f32.mrb[0].mxu0
    %1735 = vmatprep.mubr.bf16.mxu0 0
    %1736 = vmatmul.mubr.bf16.gmra.mrb[0].mxu0 %v1687
    %v1737 = vpop.f32.mrb[0].mxu0
    %v1738 = vadd.f32 0.0, %v1737
    %v1739 = vpop.f32.mrb[0].mxu0
    %v1740 = vpop.f32.mrb[0].mxu0
    %v1741 = vadd.f32 0.0, %v1740
    %v1742 = vpop.f32.mrb[0].mxu0
    %1743 = vmatprep.mubr.bf16.mxu0 0
    %1744 = vmatmul.mubr.bf16.gmra.mrb[0].mxu0 %v1690
    %v1745 = vpop.f32.mrb[0].mxu0
    %v1746 = vadd.f32 0.0, %v1745
    %v1747 = vpop.f32.mrb[0].mxu0
    %v1748 = vpop.f32.mrb[0].mxu0
    %v1749 = vpop.f32.mrb[0].mxu0
    %1750 = vdwg.mxu0
    %v1751 = vld [vmem:[#allocation2] sm:$0xff]
    %v1752 = vld [vmem:[#allocation2 + $0x8] sm:$0xff]
    %v1753 = vld [vmem:[#allocation2 + $0x10] sm:$0xff]
    %v1754 = vld [vmem:[#allocation2 + $0x18] sm:$0xff]
    %v1755 = vld [vmem:[#allocation2 + $0x20] sm:$0x7]
    %v1756 = vadd.f32 %v1751, %v1730
    %v1757 = vadd.f32 %v1752, %v1733
    %v1758 = vadd.f32 %v1753, %v1738
    %v1759 = vadd.f32 %v1754, %v1741
    %v1760 = vadd.f32 %v1755, %v1746
    %1761 = vst.msk [vmem:[#allocation2] sm:$0xff] %vm438, %v1756
    %1762 = vst.msk [vmem:[#allocation2 + $0x8] sm:$0xff] %vm438, %v1757
    %1763 = vst.msk [vmem:[#allocation2 + $0x10] sm:$0xff] %vm438, %v1758
    %1764 = vst.msk [vmem:[#allocation2 + $0x18] sm:$0xff] %vm438, %v1759
    %1765 = vst.msk [vmem:[#allocation2 + $0x20] sm:$0x7] %vm443, %v1760
    %s1766 = sadd.s32 %s20, 2
    %s1767 = smul.addr %s1766, 4
    %s1768 = scalar_lea.vmem %s0, %s1767
    %v1769 = vld [vmem:[%s1768] sm:$0xf]
    %v1770 = vld [vmem:[%s1768 + $0x4] sm:$0xf]
    %v1771 = vld [vmem:[%s1768 + $0x8] sm:$0xf]
    %v1772 = vld [vmem:[%s1768 + $0xc] sm:$0xf]
    %v1773 = vld [vmem:[%s1768 + $0x10] sm:$0xf]
    %v1774 = vld [vmem:[%s1768 + $0x14] sm:$0xf]
    %v1775 = vld [vmem:[%s1768 + $0x18] sm:$0xf]
    %v1784 = vunpack.c.l.s4 1966171168
    %v1785 = vunpack.c.0.s8 %v1784
    %v1786 = vlaneseq
    %v1787 = vshrl.u32 %v1786, 7
    %v1788 = vsub.s32 %v1785, %v1787
    %v1789 = vrot.slane %v1769, %v1788
    %v1790 = vcombine.high %v1789, %v1789
    %v1792 = vunpack.c.l.s4 1966171168
    %v1793 = vunpack.c.0.s8 %v1792
    %v1794 = vlaneseq
    %v1795 = vshrl.u32 %v1794, 7
    %v1796 = vsub.s32 %v1793, %v1795
    %v1797 = vrot.slane %v1789, %v1796
    %v1799 = vunpack.c.l.s4 1966171168
    %v1800 = vunpack.c.0.s8 %v1799
    %v1801 = vlaneseq
    %v1802 = vshrl.u32 %v1801, 7
    %v1803 = vsub.s32 %v1800, %v1802
    %v1804 = vrot.slane %v1790, %v1803
    %v1805 = vcombine.high %v1797, %v1797
    %v1807 = vunpack.c.l.s4 1966171168
    %v1808 = vunpack.c.0.s8 %v1807
    %v1809 = vlaneseq
    %v1810 = vshrl.u32 %v1809, 7
    %v1811 = vsub.s32 %v1808, %v1810
    %v1812 = vrot.slane %v1770, %v1811
    %v1813 = vcombine.high %v1812, %v1812
    %v1815 = vunpack.c.l.s4 1966171168
    %v1816 = vunpack.c.0.s8 %v1815
    %v1817 = vlaneseq
    %v1818 = vshrl.u32 %v1817, 7
    %v1819 = vsub.s32 %v1816, %v1818
    %v1820 = vrot.slane %v1812, %v1819
    %v1822 = vunpack.c.l.s4 1966171168
    %v1823 = vunpack.c.0.s8 %v1822
    %v1824 = vlaneseq
    %v1825 = vshrl.u32 %v1824, 7
    %v1826 = vsub.s32 %v1823, %v1825
    %v1827 = vrot.slane %v1813, %v1826
    %v1828 = vcombine.high %v1820, %v1820
    %v1830 = vunpack.c.l.s4 1966171168
    %v1831 = vunpack.c.0.s8 %v1830
    %v1832 = vlaneseq
    %v1833 = vshrl.u32 %v1832, 7
    %v1834 = vsub.s32 %v1831, %v1833
    %v1835 = vrot.slane %v1771, %v1834
    %v1836 = vcombine.high %v1835, %v1835
    %v1838 = vunpack.c.l.s4 1966171168
    %v1839 = vunpack.c.0.s8 %v1838
    %v1840 = vlaneseq
    %v1841 = vshrl.u32 %v1840, 7
    %v1842 = vsub.s32 %v1839, %v1841
    %v1843 = vrot.slane %v1835, %v1842
    %v1845 = vunpack.c.l.s4 1966171168
    %v1846 = vunpack.c.0.s8 %v1845
    %v1847 = vlaneseq
    %v1848 = vshrl.u32 %v1847, 7
    %v1849 = vsub.s32 %v1846, %v1848
    %v1850 = vrot.slane %v1836, %v1849
    %v1851 = vcombine.high %v1843, %v1843
    %v1853 = vunpack.c.l.s4 1966171168
    %v1854 = vunpack.c.0.s8 %v1853
    %v1855 = vlaneseq
    %v1856 = vshrl.u32 %v1855, 7
    %v1857 = vsub.s32 %v1854, %v1856
    %v1858 = vrot.slane %v1772, %v1857
    %v1859 = vcombine.high %v1858, %v1858
    %v1861 = vunpack.c.l.s4 1966171168
    %v1862 = vunpack.c.0.s8 %v1861
    %v1863 = vlaneseq
    %v1864 = vshrl.u32 %v1863, 7
    %v1865 = vsub.s32 %v1862, %v1864
    %v1866 = vrot.slane %v1858, %v1865
    %v1868 = vunpack.c.l.s4 1966171168
    %v1869 = vunpack.c.0.s8 %v1868
    %v1870 = vlaneseq
    %v1871 = vshrl.u32 %v1870, 7
    %v1872 = vsub.s32 %v1869, %v1871
    %v1873 = vrot.slane %v1859, %v1872
    %v1874 = vcombine.high %v1866, %v1866
    %v1876 = vunpack.c.l.s4 1966171168
    %v1877 = vunpack.c.0.s8 %v1876
    %v1878 = vlaneseq
    %v1879 = vshrl.u32 %v1878, 7
    %v1880 = vsub.s32 %v1877, %v1879
    %v1881 = vrot.slane %v1773, %v1880
    %v1882 = vcombine.high %v1881, %v1881
    %v1884 = vunpack.c.l.s4 1966171168
    %v1885 = vunpack.c.0.s8 %v1884
    %v1886 = vlaneseq
    %v1887 = vshrl.u32 %v1886, 7
    %v1888 = vsub.s32 %v1885, %v1887
    %v1889 = vrot.slane %v1881, %v1888
    %v1891 = vunpack.c.l.s4 1966171168
    %v1892 = vunpack.c.0.s8 %v1891
    %v1893 = vlaneseq
    %v1894 = vshrl.u32 %v1893, 7
    %v1895 = vsub.s32 %v1892, %v1894
    %v1896 = vrot.slane %v1882, %v1895
    %v1897 = vcombine.high %v1889, %v1889
    %v1899 = vunpack.c.l.s4 1966171168
    %v1900 = vunpack.c.0.s8 %v1899
    %v1901 = vlaneseq
    %v1902 = vshrl.u32 %v1901, 7
    %v1903 = vsub.s32 %v1900, %v1902
    %v1904 = vrot.slane %v1774, %v1903
    %v1905 = vcombine.high %v1904, %v1904
    %v1907 = vunpack.c.l.s4 1966171168
    %v1908 = vunpack.c.0.s8 %v1907
    %v1909 = vlaneseq
    %v1910 = vshrl.u32 %v1909, 7
    %v1911 = vsub.s32 %v1908, %v1910
    %v1912 = vrot.slane %v1904, %v1911
    %v1914 = vunpack.c.l.s4 1966171168
    %v1915 = vunpack.c.0.s8 %v1914
    %v1916 = vlaneseq
    %v1917 = vshrl.u32 %v1916, 7
    %v1918 = vsub.s32 %v1915, %v1917
    %v1919 = vrot.slane %v1905, %v1918
    %v1920 = vcombine.high %v1912, %v1912
    %v1922 = vunpack.c.l.s4 1966171168
    %v1923 = vunpack.c.0.s8 %v1922
    %v1924 = vlaneseq
    %v1925 = vshrl.u32 %v1924, 7
    %v1926 = vsub.s32 %v1923, %v1925
    %v1927 = vrot.slane %v1775, %v1926
    %v1928 = vcombine.high %v1927, %v1927
    %v1930 = vunpack.c.l.s4 1966171168
    %v1931 = vunpack.c.0.s8 %v1930
    %v1932 = vlaneseq
    %v1933 = vshrl.u32 %v1932, 7
    %v1934 = vsub.s32 %v1931, %v1933
    %v1935 = vrot.slane %v1927, %v1934
    %v1937 = vunpack.c.l.s4 1966171168
    %v1938 = vunpack.c.0.s8 %v1937
    %v1939 = vlaneseq
    %v1940 = vshrl.u32 %v1939, 7
    %v1941 = vsub.s32 %v1938, %v1940
    %v1942 = vrot.slane %v1928, %v1941
    %v1943 = vcombine.high %v1935, %v1935
    %v1944 = vunpack.i.l.s16 %v1797
    %v1945 = vunpack.i.h.s16 %v1797
    %v1946 = vunpack.i.l.s16 %v1804
    %v1947 = vunpack.i.h.s16 %v1804
    %v1948 = vunpack.i.l.s16 %v1805
    %v1949 = vunpack.i.l.s16 %v1820
    %v1950 = vunpack.i.h.s16 %v1820
    %v1951 = vunpack.i.l.s16 %v1827
    %v1952 = vunpack.i.h.s16 %v1827
    %v1953 = vunpack.i.l.s16 %v1828
    %v1954 = vunpack.i.l.s16 %v1843
    %v1955 = vunpack.i.h.s16 %v1843
    %v1956 = vunpack.i.l.s16 %v1850
    %v1957 = vunpack.i.h.s16 %v1850
    %v1958 = vunpack.i.l.s16 %v1851
    %v1959 = vunpack.i.l.s16 %v1866
    %v1960 = vunpack.i.h.s16 %v1866
    %v1961 = vunpack.i.l.s16 %v1873
    %v1962 = vunpack.i.h.s16 %v1873
    %v1963 = vunpack.i.l.s16 %v1874
    %v1964 = vunpack.i.l.s16 %v1889
    %v1965 = vunpack.i.h.s16 %v1889
    %v1966 = vunpack.i.l.s16 %v1896
    %v1967 = vunpack.i.h.s16 %v1896
    %v1968 = vunpack.i.l.s16 %v1897
    %v1969 = vunpack.i.l.s16 %v1912
    %v1970 = vunpack.i.h.s16 %v1912
    %v1971 = vunpack.i.l.s16 %v1919
    %v1972 = vunpack.i.h.s16 %v1919
    %v1973 = vunpack.i.l.s16 %v1920
    %v1974 = vunpack.i.l.s16 %v1935
    %v1975 = vunpack.i.h.s16 %v1935
    %v1976 = vunpack.i.l.s16 %v1942
    %v1977 = vunpack.i.h.s16 %v1942
    %v1978 = vunpack.i.l.s16 %v1943
    %s1979 = scalar_lea.vmem %s1, 24
    %v1980 = vld [vmem:[%s1979] sm:$0x7]
    %v1981 = vpack.i.b16 %v1945, %v1944
    %v1982 = vpack.i.b16 %v1947, %v1946
    %v1983 = vpack.i.b16 %v1949, %v1948
    %v1984 = vpack.i.b16 %v1951, %v1950
    %v1985 = vpack.i.b16 %v1953, %v1952
    %v1986 = vpack.i.b16 %v1955, %v1954
    %v1987 = vpack.i.b16 %v1957, %v1956
    %v1988 = vpack.i.b16 %v1959, %v1958
    %v1989 = vpack.i.b16 %v1961, %v1960
    %v1990 = vpack.i.b16 %v1963, %v1962
    %v1991 = vpack.i.b16 %v1965, %v1964
    %v1992 = vpack.i.b16 %v1967, %v1966
    %v1993 = vpack.i.b16 %v1969, %v1968
    %v1994 = vpack.i.b16 %v1971, %v1970
    %v1995 = vpack.i.b16 %v1973, %v1972
    %v1996 = vpack.i.b16 %v1975, %v1974
    %v1997 = vpack.i.b16 %v1977, %v1976
    %v1999 = vcombine.low %v1981, %v1982
    %v2000 = vcombine.low %v1983, %v1984
    %v2001 = vcombine.low %v1985, %v1986
    %v2002 = vcombine.low %v1987, %v1988
    %v2004 = vunpack.c.l.s4 1966171168
    %v2005 = vunpack.c.0.s8 %v2004
    %v2006 = vlaneseq
    %v2007 = vshrl.u32 %v2006, 7
    %v2008 = vsub.s32 %v2005, %v2007
    %v2009 = vrot.slane %v1999, %v2008
    %v2011 = vunpack.c.l.s4 1966171168
    %v2012 = vunpack.c.0.s8 %v2011
    %v2013 = vlaneseq
    %v2014 = vshrl.u32 %v2013, 7
    %v2015 = vsub.s32 %v2012, %v2014
    %v2016 = vrot.slane %v2000, %v2015
    %v2018 = vunpack.c.l.s4 1966171168
    %v2019 = vunpack.c.0.s8 %v2018
    %v2020 = vlaneseq
    %v2021 = vshrl.u32 %v2020, 7
    %v2022 = vsub.s32 %v2019, %v2021
    %v2023 = vrot.slane %v2001, %v2022
    %v2025 = vunpack.c.l.s4 1966171168
    %v2026 = vunpack.c.0.s8 %v2025
    %v2027 = vlaneseq
    %v2028 = vshrl.u32 %v2027, 7
    %v2029 = vsub.s32 %v2026, %v2028
    %v2030 = vrot.slane %v2002, %v2029
    %v2031 = vcombine.low %v2009, %v2016
    %v2032 = vcombine.low %v2023, %v2030
    %v2034 = vunpack.c.l.s4 1966171168
    %v2035 = vunpack.c.0.s8 %v2034
    %v2036 = vlaneseq
    %v2037 = vshrl.u32 %v2036, 7
    %v2038 = vsub.s32 %v2035, %v2037
    %v2039 = vrot.slane %v2031, %v2038
    %v2041 = vunpack.c.l.s4 1966171168
    %v2042 = vunpack.c.0.s8 %v2041
    %v2043 = vlaneseq
    %v2044 = vshrl.u32 %v2043, 7
    %v2045 = vsub.s32 %v2042, %v2044
    %v2046 = vrot.slane %v2032, %v2045
    %v2047 = vcombine.low %v2039, %v2046
    %v2048 = vcombine.low %v1989, %v1990
    %v2049 = vcombine.low %v1991, %v1992
    %v2050 = vcombine.low %v1993, %v1994
    %v2051 = vcombine.low %v1995, %v1996
    %v2053 = vunpack.c.l.s4 1966171168
    %v2054 = vunpack.c.0.s8 %v2053
    %v2055 = vlaneseq
    %v2056 = vshrl.u32 %v2055, 7
    %v2057 = vsub.s32 %v2054, %v2056
    %v2058 = vrot.slane %v2048, %v2057
    %v2060 = vunpack.c.l.s4 1966171168
    %v2061 = vunpack.c.0.s8 %v2060
    %v2062 = vlaneseq
    %v2063 = vshrl.u32 %v2062, 7
    %v2064 = vsub.s32 %v2061, %v2063
    %v2065 = vrot.slane %v2049, %v2064
    %v2067 = vunpack.c.l.s4 1966171168
    %v2068 = vunpack.c.0.s8 %v2067
    %v2069 = vlaneseq
    %v2070 = vshrl.u32 %v2069, 7
    %v2071 = vsub.s32 %v2068, %v2070
    %v2072 = vrot.slane %v2050, %v2071
    %v2074 = vunpack.c.l.s4 1966171168
    %v2075 = vunpack.c.0.s8 %v2074
    %v2076 = vlaneseq
    %v2077 = vshrl.u32 %v2076, 7
    %v2078 = vsub.s32 %v2075, %v2077
    %v2079 = vrot.slane %v2051, %v2078
    %v2080 = vcombine.low %v2058, %v2065
    %v2081 = vcombine.low %v2072, %v2079
    %v2083 = vunpack.c.l.s4 1966171168
    %v2084 = vunpack.c.0.s8 %v2083
    %v2085 = vlaneseq
    %v2086 = vshrl.u32 %v2085, 7
    %v2087 = vsub.s32 %v2084, %v2086
    %v2088 = vrot.slane %v2080, %v2087
    %v2090 = vunpack.c.l.s4 1966171168
    %v2091 = vunpack.c.0.s8 %v2090
    %v2092 = vlaneseq
    %v2093 = vshrl.u32 %v2092, 7
    %v2094 = vsub.s32 %v2091, %v2093
    %v2095 = vrot.slane %v2081, %v2094
    %v2096 = vcombine.low %v2088, %v2095
    %v2097 = vcombine.low %v1997, %v1978
    %v2099 = vunpack.c.l.s4 1966171168
    %v2100 = vunpack.c.0.s8 %v2099
    %v2101 = vlaneseq
    %v2102 = vshrl.u32 %v2101, 7
    %v2103 = vsub.s32 %v2100, %v2102
    %v2104 = vrot.slane %v2097, %v2103
    %v2106 = vunpack.c.l.s4 1966171168
    %v2107 = vunpack.c.0.s8 %v2106
    %v2108 = vlaneseq
    %v2109 = vshrl.u32 %v2108, 7
    %v2110 = vsub.s32 %v2107, %v2109
    %v2111 = vrot.slane %v2104, %v2110
    %v2113 = vsel %vm365, %v2047, 0
    %v2116 = vsel %vm365, %v2096, 0
    %v2119 = vsel %vm365, %v2111, 0
    %v2122 = vand.u32 %v1980, %v378
    %2124 = vmatprep.subr.bf16.mxu0 0
    %2125 = vmatpush1.bf16.msra.mxu0 %v2122
    %2126 = vmatprep.subr.bf16.mxu0 0
    %2127 = vmatpush1.bf16.msra.mxu0 0
    %2128 = vmatprep.subr.bf16.mxu0 0
    %2129 = vmatpush1.bf16.msra.mxu0 0
    %2130 = vmatprep.subr.bf16.mxu0 0
    %2131 = vmatpush1.bf16.msra.mxu0 0
    %2132 = vmatprep.subr.bf16.mxu0 0
    %2133 = vmatpush1.bf16.msra.mxu0 0
    %2134 = vmatprep.subr.bf16.mxu0 0
    %2135 = vmatpush1.bf16.msra.mxu0 0
    %2136 = vmatprep.subr.bf16.mxu0 0
    %2137 = vmatpush1.bf16.msra.mxu0 0
    %2138 = vmatprep.subr.bf16.mxu0 0
    %2139 = vmatpush1.bf16.msra.mxu0 0
    %2140 = vmatprep.subr.bf16.mxu0 0
    %2141 = vmatpush1.bf16.msra.mxu0 0
    %2142 = vmatprep.subr.bf16.mxu0 0
    %2143 = vmatpush1.bf16.msra.mxu0 0
    %2144 = vmatprep.subr.bf16.mxu0 0
    %2145 = vmatpush1.bf16.msra.mxu0 0
    %2146 = vmatprep.subr.bf16.mxu0 0
    %2147 = vmatpush1.bf16.msra.mxu0 0
    %2148 = vmatprep.subr.bf16.mxu0 0
    %2149 = vmatpush1.bf16.msra.mxu0 0
    %2150 = vmatprep.subr.bf16.mxu0 0
    %2151 = vmatpush1.bf16.msra.mxu0 0
    %2152 = vmatprep.subr.bf16.mxu0 0
    %2153 = vmatpush1.bf16.msra.mxu0 0
    %2154 = vmatprep.subr.bf16.mxu0 0
    %2155 = vmatpush1.bf16.msra.mxu0 0
    %2156 = vmatprep.mubr.bf16.mxu0 0
    %2157 = vmatmul.mubr.bf16.gmra.mrb[0].mxu0 %v2113
    %v2158 = vpop.f32.mrb[0].mxu0
    %v2159 = vadd.f32 0.0, %v2158
    %v2160 = vpop.f32.mrb[0].mxu0
    %v2161 = vpop.f32.mrb[0].mxu0
    %v2162 = vadd.f32 0.0, %v2161
    %v2163 = vpop.f32.mrb[0].mxu0
    %2164 = vmatprep.mubr.bf16.mxu0 0
    %2165 = vmatmul.mubr.bf16.gmra.mrb[0].mxu0 %v2116
    %v2166 = vpop.f32.mrb[0].mxu0
    %v2167 = vadd.f32 0.0, %v2166
    %v2168 = vpop.f32.mrb[0].mxu0
    %v2169 = vpop.f32.mrb[0].mxu0
    %v2170 = vadd.f32 0.0, %v2169
    %v2171 = vpop.f32.mrb[0].mxu0
    %2172 = vmatprep.mubr.bf16.mxu0 0
    %2173 = vmatmul.mubr.bf16.gmra.mrb[0].mxu0 %v2119
    %v2174 = vpop.f32.mrb[0].mxu0
    %v2175 = vadd.f32 0.0, %v2174
    %v2176 = vpop.f32.mrb[0].mxu0
    %v2177 = vpop.f32.mrb[0].mxu0
    %v2178 = vpop.f32.mrb[0].mxu0
    %2179 = vdwg.mxu0
    %v2180 = vld [vmem:[#allocation2] sm:$0xff]
    %v2181 = vld [vmem:[#allocation2 + $0x8] sm:$0xff]
    %v2182 = vld [vmem:[#allocation2 + $0x10] sm:$0xff]
    %v2183 = vld [vmem:[#allocation2 + $0x18] sm:$0xff]
    %v2184 = vld [vmem:[#allocation2 + $0x20] sm:$0x7]
    %v2185 = vadd.f32 %v2180, %v2159
    %v2186 = vadd.f32 %v2181, %v2162
    %v2187 = vadd.f32 %v2182, %v2167
    %v2188 = vadd.f32 %v2183, %v2170
    %v2189 = vadd.f32 %v2184, %v2175
    %2190 = vst.msk [vmem:[#allocation2] sm:$0xff] %vm438, %v2185
    %2191 = vst.msk [vmem:[#allocation2 + $0x8] sm:$0xff] %vm438, %v2186
    %2192 = vst.msk [vmem:[#allocation2 + $0x10] sm:$0xff] %vm438, %v2187
    %2193 = vst.msk [vmem:[#allocation2 + $0x18] sm:$0xff] %vm438, %v2188
    %2194 = vst.msk [vmem:[#allocation2 + $0x20] sm:$0x7] %vm443, %v2189
    %v2195 = vunpack.i.h.s16 %v1805
    %v2196 = vunpack.i.h.s16 %v1828
    %v2197 = vunpack.i.h.s16 %v1851
    %v2198 = vunpack.i.h.s16 %v1874
    %v2199 = vunpack.i.h.s16 %v1897
    %v2200 = vunpack.i.h.s16 %v1920
    %v2201 = vunpack.i.h.s16 %v1943
    %s2202 = scalar_lea.vmem %s1, 28
    %v2203 = vld [vmem:[%s2202] sm:$0x7]
    %v2204 = vpack.i.b16 %v1946, %v1945
    %v2205 = vpack.i.b16 %v1948, %v1947
    %v2206 = vpack.i.b16 %v1950, %v2195
    %v2207 = vpack.i.b16 %v1952, %v1951
    %v2208 = vpack.i.b16 %v2196, %v1953
    %v2209 = vpack.i.b16 %v1956, %v1955
    %v2210 = vpack.i.b16 %v1958, %v1957
    %v2211 = vpack.i.b16 %v1960, %v2197
    %v2212 = vpack.i.b16 %v1962, %v1961
    %v2213 = vpack.i.b16 %v2198, %v1963
    %v2214 = vpack.i.b16 %v1966, %v1965
    %v2215 = vpack.i.b16 %v1968, %v1967
    %v2216 = vpack.i.b16 %v1970, %v2199
    %v2217 = vpack.i.b16 %v1972, %v1971
    %v2218 = vpack.i.b16 %v2200, %v1973
    %v2219 = vpack.i.b16 %v1976, %v1975
    %v2220 = vpack.i.b16 %v1978, %v1977
    %v2222 = vcombine.low %v2204, %v2205
    %v2223 = vcombine.low %v2206, %v2207
    %v2224 = vcombine.low %v2208, %v2209
    %v2225 = vcombine.low %v2210, %v2211
    %v2227 = vunpack.c.l.s4 1966171168
    %v2228 = vunpack.c.0.s8 %v2227
    %v2229 = vlaneseq
    %v2230 = vshrl.u32 %v2229, 7
    %v2231 = vsub.s32 %v2228, %v2230
    %v2232 = vrot.slane %v2222, %v2231
    %v2234 = vunpack.c.l.s4 1966171168
    %v2235 = vunpack.c.0.s8 %v2234
    %v2236 = vlaneseq
    %v2237 = vshrl.u32 %v2236, 7
    %v2238 = vsub.s32 %v2235, %v2237
    %v2239 = vrot.slane %v2223, %v2238
    %v2241 = vunpack.c.l.s4 1966171168
    %v2242 = vunpack.c.0.s8 %v2241
    %v2243 = vlaneseq
    %v2244 = vshrl.u32 %v2243, 7
    %v2245 = vsub.s32 %v2242, %v2244
    %v2246 = vrot.slane %v2224, %v2245
    %v2248 = vunpack.c.l.s4 1966171168
    %v2249 = vunpack.c.0.s8 %v2248
    %v2250 = vlaneseq
    %v2251 = vshrl.u32 %v2250, 7
    %v2252 = vsub.s32 %v2249, %v2251
    %v2253 = vrot.slane %v2225, %v2252
    %v2254 = vcombine.low %v2232, %v2239
    %v2255 = vcombine.low %v2246, %v2253
    %v2257 = vunpack.c.l.s4 1966171168
    %v2258 = vunpack.c.0.s8 %v2257
    %v2259 = vlaneseq
    %v2260 = vshrl.u32 %v2259, 7
    %v2261 = vsub.s32 %v2258, %v2260
    %v2262 = vrot.slane %v2254, %v2261
    %v2264 = vunpack.c.l.s4 1966171168
    %v2265 = vunpack.c.0.s8 %v2264
    %v2266 = vlaneseq
    %v2267 = vshrl.u32 %v2266, 7
    %v2268 = vsub.s32 %v2265, %v2267
    %v2269 = vrot.slane %v2255, %v2268
    %v2270 = vcombine.low %v2262, %v2269
    %v2271 = vcombine.low %v2212, %v2213
    %v2272 = vcombine.low %v2214, %v2215
    %v2273 = vcombine.low %v2216, %v2217
    %v2274 = vcombine.low %v2218, %v2219
    %v2276 = vunpack.c.l.s4 1966171168
    %v2277 = vunpack.c.0.s8 %v2276
    %v2278 = vlaneseq
    %v2279 = vshrl.u32 %v2278, 7
    %v2280 = vsub.s32 %v2277, %v2279
    %v2281 = vrot.slane %v2271, %v2280
    %v2283 = vunpack.c.l.s4 1966171168
    %v2284 = vunpack.c.0.s8 %v2283
    %v2285 = vlaneseq
    %v2286 = vshrl.u32 %v2285, 7
    %v2287 = vsub.s32 %v2284, %v2286
    %v2288 = vrot.slane %v2272, %v2287
    %v2290 = vunpack.c.l.s4 1966171168
    %v2291 = vunpack.c.0.s8 %v2290
    %v2292 = vlaneseq
    %v2293 = vshrl.u32 %v2292, 7
    %v2294 = vsub.s32 %v2291, %v2293
    %v2295 = vrot.slane %v2273, %v2294
    %v2297 = vunpack.c.l.s4 1966171168
    %v2298 = vunpack.c.0.s8 %v2297
    %v2299 = vlaneseq
    %v2300 = vshrl.u32 %v2299, 7
    %v2301 = vsub.s32 %v2298, %v2300
    %v2302 = vrot.slane %v2274, %v2301
    %v2303 = vcombine.low %v2281, %v2288
    %v2304 = vcombine.low %v2295, %v2302
    %v2306 = vunpack.c.l.s4 1966171168
    %v2307 = vunpack.c.0.s8 %v2306
    %v2308 = vlaneseq
    %v2309 = vshrl.u32 %v2308, 7
    %v2310 = vsub.s32 %v2307, %v2309
    %v2311 = vrot.slane %v2303, %v2310
    %v2313 = vunpack.c.l.s4 1966171168
    %v2314 = vunpack.c.0.s8 %v2313
    %v2315 = vlaneseq
    %v2316 = vshrl.u32 %v2315, 7
    %v2317 = vsub.s32 %v2314, %v2316
    %v2318 = vrot.slane %v2304, %v2317
    %v2319 = vcombine.low %v2311, %v2318
    %v2320 = vcombine.low %v2220, %v2201
    %v2322 = vunpack.c.l.s4 1966171168
    %v2323 = vunpack.c.0.s8 %v2322
    %v2324 = vlaneseq
    %v2325 = vshrl.u32 %v2324, 7
    %v2326 = vsub.s32 %v2323, %v2325
    %v2327 = vrot.slane %v2320, %v2326
    %v2329 = vunpack.c.l.s4 1966171168
    %v2330 = vunpack.c.0.s8 %v2329
    %v2331 = vlaneseq
    %v2332 = vshrl.u32 %v2331, 7
    %v2333 = vsub.s32 %v2330, %v2332
    %v2334 = vrot.slane %v2327, %v2333
    %v2336 = vsel %vm365, %v2270, 0
    %v2339 = vsel %vm365, %v2319, 0
    %v2342 = vsel %vm365, %v2334, 0
    %v2345 = vand.u32 %v2203, %v378
    %2347 = vmatprep.subr.bf16.mxu0 0
    %2348 = vmatpush1.bf16.msra.mxu0 %v2345
    %2349 = vmatprep.subr.bf16.mxu0 0
    %2350 = vmatpush1.bf16.msra.mxu0 0
    %2351 = vmatprep.subr.bf16.mxu0 0
    %2352 = vmatpush1.bf16.msra.mxu0 0
    %2353 = vmatprep.subr.bf16.mxu0 0
    %2354 = vmatpush1.bf16.msra.mxu0 0
    %2355 = vmatprep.subr.bf16.mxu0 0
    %2356 = vmatpush1.bf16.msra.mxu0 0
    %2357 = vmatprep.subr.bf16.mxu0 0
    %2358 = vmatpush1.bf16.msra.mxu0 0
    %2359 = vmatprep.subr.bf16.mxu0 0
    %2360 = vmatpush1.bf16.msra.mxu0 0
    %2361 = vmatprep.subr.bf16.mxu0 0
    %2362 = vmatpush1.bf16.msra.mxu0 0
    %2363 = vmatprep.subr.bf16.mxu0 0
    %2364 = vmatpush1.bf16.msra.mxu0 0
    %2365 = vmatprep.subr.bf16.mxu0 0
    %2366 = vmatpush1.bf16.msra.mxu0 0
    %2367 = vmatprep.subr.bf16.mxu0 0
    %2368 = vmatpush1.bf16.msra.mxu0 0
    %2369 = vmatprep.subr.bf16.mxu0 0
    %2370 = vmatpush1.bf16.msra.mxu0 0
    %2371 = vmatprep.subr.bf16.mxu0 0
    %2372 = vmatpush1.bf16.msra.mxu0 0
    %2373 = vmatprep.subr.bf16.mxu0 0
    %2374 = vmatpush1.bf16.msra.mxu0 0
    %2375 = vmatprep.subr.bf16.mxu0 0
    %2376 = vmatpush1.bf16.msra.mxu0 0
    %2377 = vmatprep.subr.bf16.mxu0 0
    %2378 = vmatpush1.bf16.msra.mxu0 0
    %2379 = vmatprep.mubr.bf16.mxu0 0
    %2380 = vmatmul.mubr.bf16.gmra.mrb[0].mxu0 %v2336
    %v2381 = vpop.f32.mrb[0].mxu0
    %v2382 = vadd.f32 0.0, %v2381
    %v2383 = vpop.f32.mrb[0].mxu0
    %v2384 = vpop.f32.mrb[0].mxu0
    %v2385 = vadd.f32 0.0, %v2384
    %v2386 = vpop.f32.mrb[0].mxu0
    %2387 = vmatprep.mubr.bf16.mxu0 0
    %2388 = vmatmul.mubr.bf16.gmra.mrb[0].mxu0 %v2339
    %v2389 = vpop.f32.mrb[0].mxu0
    %v2390 = vadd.f32 0.0, %v2389
    %v2391 = vpop.f32.mrb[0].mxu0
    %v2392 = vpop.f32.mrb[0].mxu0
    %v2393 = vadd.f32 0.0, %v2392
    %v2394 = vpop.f32.mrb[0].mxu0
    %2395 = vmatprep.mubr.bf16.mxu0 0
    %2396 = vmatmul.mubr.bf16.gmra.mrb[0].mxu0 %v2342
    %v2397 = vpop.f32.mrb[0].mxu0
    %v2398 = vadd.f32 0.0, %v2397
    %v2399 = vpop.f32.mrb[0].mxu0
    %v2400 = vpop.f32.mrb[0].mxu0
    %v2401 = vpop.f32.mrb[0].mxu0
    %2402 = vdwg.mxu0
    %v2403 = vld [vmem:[#allocation2] sm:$0xff]
    %v2404 = vld [vmem:[#allocation2 + $0x8] sm:$0xff]
    %v2405 = vld [vmem:[#allocation2 + $0x10] sm:$0xff]
    %v2406 = vld [vmem:[#allocation2 + $0x18] sm:$0xff]
    %v2407 = vld [vmem:[#allocation2 + $0x20] sm:$0x7]
    %v2408 = vadd.f32 %v2403, %v2382
    %v2409 = vadd.f32 %v2404, %v2385
    %v2410 = vadd.f32 %v2405, %v2390
    %v2411 = vadd.f32 %v2406, %v2393
    %v2412 = vadd.f32 %v2407, %v2398
    %2413 = vst.msk [vmem:[#allocation2] sm:$0xff] %vm438, %v2408
    %2414 = vst.msk [vmem:[#allocation2 + $0x8] sm:$0xff] %vm438, %v2409
    %2415 = vst.msk [vmem:[#allocation2 + $0x10] sm:$0xff] %vm438, %v2410
    %2416 = vst.msk [vmem:[#allocation2 + $0x18] sm:$0xff] %vm438, %v2411
    %2417 = vst.msk [vmem:[#allocation2 + $0x20] sm:$0x7] %vm443, %v2412
    %v2418 = vcombine.high %v1804, %v1804
    %v2419 = vcombine.high %v1827, %v1827
    %v2420 = vcombine.high %v1850, %v1850
    %v2421 = vcombine.high %v1873, %v1873
    %v2422 = vcombine.high %v1896, %v1896
    %v2423 = vcombine.high %v1919, %v1919
    %v2424 = vcombine.high %v1942, %v1942
    %v2425 = vunpack.i.l.s16 %v2418
    %v2426 = vunpack.i.l.s16 %v2419
    %v2427 = vunpack.i.l.s16 %v2420
    %v2428 = vunpack.i.l.s16 %v2421
    %v2429 = vunpack.i.l.s16 %v2422
    %v2430 = vunpack.i.l.s16 %v2423
    %v2431 = vunpack.i.l.s16 %v2424
    %s2432 = scalar_lea.vmem %s1, 32
    %v2433 = vld [vmem:[%s2432] sm:$0x7]
    %v2434 = vpack.i.b16 %v2195, %v1948
    %v2435 = vpack.i.b16 %v1951, %v2425
    %v2436 = vpack.i.b16 %v2426, %v2196
    %v2437 = vpack.i.b16 %v2197, %v1958
    %v2438 = vpack.i.b16 %v1961, %v2427
    %v2439 = vpack.i.b16 %v2428, %v2198
    %v2440 = vpack.i.b16 %v2199, %v1968
    %v2441 = vpack.i.b16 %v1971, %v2429
    %v2442 = vpack.i.b16 %v2430, %v2200
    %v2443 = vpack.i.b16 %v2201, %v1978
    %v2445 = vcombine.low %v1982, %v2434
    %v2446 = vcombine.low %v2435, %v1985
    %v2447 = vcombine.low %v2436, %v1987
    %v2448 = vcombine.low %v2437, %v2438
    %v2450 = vunpack.c.l.s4 1966171168
    %v2451 = vunpack.c.0.s8 %v2450
    %v2452 = vlaneseq
    %v2453 = vshrl.u32 %v2452, 7
    %v2454 = vsub.s32 %v2451, %v2453
    %v2455 = vrot.slane %v2445, %v2454
    %v2457 = vunpack.c.l.s4 1966171168
    %v2458 = vunpack.c.0.s8 %v2457
    %v2459 = vlaneseq
    %v2460 = vshrl.u32 %v2459, 7
    %v2461 = vsub.s32 %v2458, %v2460
    %v2462 = vrot.slane %v2446, %v2461
    %v2464 = vunpack.c.l.s4 1966171168
    %v2465 = vunpack.c.0.s8 %v2464
    %v2466 = vlaneseq
    %v2467 = vshrl.u32 %v2466, 7
    %v2468 = vsub.s32 %v2465, %v2467
    %v2469 = vrot.slane %v2447, %v2468
    %v2471 = vunpack.c.l.s4 1966171168
    %v2472 = vunpack.c.0.s8 %v2471
    %v2473 = vlaneseq
    %v2474 = vshrl.u32 %v2473, 7
    %v2475 = vsub.s32 %v2472, %v2474
    %v2476 = vrot.slane %v2448, %v2475
    %v2477 = vcombine.low %v2455, %v2462
    %v2478 = vcombine.low %v2469, %v2476
    %v2480 = vunpack.c.l.s4 1966171168
    %v2481 = vunpack.c.0.s8 %v2480
    %v2482 = vlaneseq
    %v2483 = vshrl.u32 %v2482, 7
    %v2484 = vsub.s32 %v2481, %v2483
    %v2485 = vrot.slane %v2477, %v2484
    %v2487 = vunpack.c.l.s4 1966171168
    %v2488 = vunpack.c.0.s8 %v2487
    %v2489 = vlaneseq
    %v2490 = vshrl.u32 %v2489, 7
    %v2491 = vsub.s32 %v2488, %v2490
    %v2492 = vrot.slane %v2478, %v2491
    %v2493 = vcombine.low %v2485, %v2492
    %v2494 = vcombine.low %v1990, %v2439
    %v2495 = vcombine.low %v1992, %v2440
    %v2496 = vcombine.low %v2441, %v1995
    %v2497 = vcombine.low %v2442, %v1997
    %v2499 = vunpack.c.l.s4 1966171168
    %v2500 = vunpack.c.0.s8 %v2499
    %v2501 = vlaneseq
    %v2502 = vshrl.u32 %v2501, 7
    %v2503 = vsub.s32 %v2500, %v2502
    %v2504 = vrot.slane %v2494, %v2503
    %v2506 = vunpack.c.l.s4 1966171168
    %v2507 = vunpack.c.0.s8 %v2506
    %v2508 = vlaneseq
    %v2509 = vshrl.u32 %v2508, 7
    %v2510 = vsub.s32 %v2507, %v2509
    %v2511 = vrot.slane %v2495, %v2510
    %v2513 = vunpack.c.l.s4 1966171168
    %v2514 = vunpack.c.0.s8 %v2513
    %v2515 = vlaneseq
    %v2516 = vshrl.u32 %v2515, 7
    %v2517 = vsub.s32 %v2514, %v2516
    %v2518 = vrot.slane %v2496, %v2517
    %v2520 = vunpack.c.l.s4 1966171168
    %v2521 = vunpack.c.0.s8 %v2520
    %v2522 = vlaneseq
    %v2523 = vshrl.u32 %v2522, 7
    %v2524 = vsub.s32 %v2521, %v2523
    %v2525 = vrot.slane %v2497, %v2524
    %v2526 = vcombine.low %v2504, %v2511
    %v2527 = vcombine.low %v2518, %v2525
    %v2529 = vunpack.c.l.s4 1966171168
    %v2530 = vunpack.c.0.s8 %v2529
    %v2531 = vlaneseq
    %v2532 = vshrl.u32 %v2531, 7
    %v2533 = vsub.s32 %v2530, %v2532
    %v2534 = vrot.slane %v2526, %v2533
    %v2536 = vunpack.c.l.s4 1966171168
    %v2537 = vunpack.c.0.s8 %v2536
    %v2538 = vlaneseq
    %v2539 = vshrl.u32 %v2538, 7
    %v2540 = vsub.s32 %v2537, %v2539
    %v2541 = vrot.slane %v2527, %v2540
    %v2542 = vcombine.low %v2534, %v2541
    %v2543 = vcombine.low %v2443, %v2431
    %v2545 = vunpack.c.l.s4 1966171168
    %v2546 = vunpack.c.0.s8 %v2545
    %v2547 = vlaneseq
    %v2548 = vshrl.u32 %v2547, 7
    %v2549 = vsub.s32 %v2546, %v2548
    %v2550 = vrot.slane %v2543, %v2549
    %v2552 = vunpack.c.l.s4 1966171168
    %v2553 = vunpack.c.0.s8 %v2552
    %v2554 = vlaneseq
    %v2555 = vshrl.u32 %v2554, 7
    %v2556 = vsub.s32 %v2553, %v2555
    %v2557 = vrot.slane %v2550, %v2556
    %v2559 = vsel %vm365, %v2493, 0
    %v2562 = vsel %vm365, %v2542, 0
    %v2565 = vsel %vm365, %v2557, 0
    %v2568 = vand.u32 %v2433, %v378
    %2570 = vmatprep.subr.bf16.mxu0 0
    %2571 = vmatpush1.bf16.msra.mxu0 %v2568
    %2572 = vmatprep.subr.bf16.mxu0 0
    %2573 = vmatpush1.bf16.msra.mxu0 0
    %2574 = vmatprep.subr.bf16.mxu0 0
    %2575 = vmatpush1.bf16.msra.mxu0 0
    %2576 = vmatprep.subr.bf16.mxu0 0
    %2577 = vmatpush1.bf16.msra.mxu0 0
    %2578 = vmatprep.subr.bf16.mxu0 0
    %2579 = vmatpush1.bf16.msra.mxu0 0
    %2580 = vmatprep.subr.bf16.mxu0 0
    %2581 = vmatpush1.bf16.msra.mxu0 0
    %2582 = vmatprep.subr.bf16.mxu0 0
    %2583 = vmatpush1.bf16.msra.mxu0 0
    %2584 = vmatprep.subr.bf16.mxu0 0
    %2585 = vmatpush1.bf16.msra.mxu0 0
    %2586 = vmatprep.subr.bf16.mxu0 0
    %2587 = vmatpush1.bf16.msra.mxu0 0
    %2588 = vmatprep.subr.bf16.mxu0 0
    %2589 = vmatpush1.bf16.msra.mxu0 0
    %2590 = vmatprep.subr.bf16.mxu0 0
    %2591 = vmatpush1.bf16.msra.mxu0 0
    %2592 = vmatprep.subr.bf16.mxu0 0
    %2593 = vmatpush1.bf16.msra.mxu0 0
    %2594 = vmatprep.subr.bf16.mxu0 0
    %2595 = vmatpush1.bf16.msra.mxu0 0
    %2596 = vmatprep.subr.bf16.mxu0 0
    %2597 = vmatpush1.bf16.msra.mxu0 0
    %2598 = vmatprep.subr.bf16.mxu0 0
    %2599 = vmatpush1.bf16.msra.mxu0 0
    %2600 = vmatprep.subr.bf16.mxu0 0
    %2601 = vmatpush1.bf16.msra.mxu0 0
    %2602 = vmatprep.mubr.bf16.mxu0 0
    %2603 = vmatmul.mubr.bf16.gmra.mrb[0].mxu0 %v2559
    %v2604 = vpop.f32.mrb[0].mxu0
    %v2605 = vadd.f32 0.0, %v2604
    %v2606 = vpop.f32.mrb[0].mxu0
    %v2607 = vpop.f32.mrb[0].mxu0
    %v2608 = vadd.f32 0.0, %v2607
    %v2609 = vpop.f32.mrb[0].mxu0
    %2610 = vmatprep.mubr.bf16.mxu0 0
    %2611 = vmatmul.mubr.bf16.gmra.mrb[0].mxu0 %v2562
    %v2612 = vpop.f32.mrb[0].mxu0
    %v2613 = vadd.f32 0.0, %v2612
    %v2614 = vpop.f32.mrb[0].mxu0
    %v2615 = vpop.f32.mrb[0].mxu0
    %v2616 = vadd.f32 0.0, %v2615
    %v2617 = vpop.f32.mrb[0].mxu0
    %2618 = vmatprep.mubr.bf16.mxu0 0
    %2619 = vmatmul.mubr.bf16.gmra.mrb[0].mxu0 %v2565
    %v2620 = vpop.f32.mrb[0].mxu0
    %v2621 = vadd.f32 0.0, %v2620
    %v2622 = vpop.f32.mrb[0].mxu0
    %v2623 = vpop.f32.mrb[0].mxu0
    %v2624 = vpop.f32.mrb[0].mxu0
    %2625 = vdwg.mxu0
    %v2626 = vld [vmem:[#allocation2] sm:$0xff]
    %v2627 = vld [vmem:[#allocation2 + $0x8] sm:$0xff]
    %v2628 = vld [vmem:[#allocation2 + $0x10] sm:$0xff]
    %v2629 = vld [vmem:[#allocation2 + $0x18] sm:$0xff]
    %v2630 = vld [vmem:[#allocation2 + $0x20] sm:$0x7]
    %v2631 = vadd.f32 %v2626, %v2605
    %v2632 = vadd.f32 %v2627, %v2608
    %v2633 = vadd.f32 %v2628, %v2613
    %v2634 = vadd.f32 %v2629, %v2616
    %v2635 = vadd.f32 %v2630, %v2621
    %2636 = vst.msk [vmem:[#allocation2] sm:$0xff] %vm438, %v2631
    %2637 = vst.msk [vmem:[#allocation2 + $0x8] sm:$0xff] %vm438, %v2632
    %2638 = vst.msk [vmem:[#allocation2 + $0x10] sm:$0xff] %vm438, %v2633
    %2639 = vst.msk [vmem:[#allocation2 + $0x18] sm:$0xff] %vm438, %v2634
    %2640 = vst.msk [vmem:[#allocation2 + $0x20] sm:$0x7] %vm443, %v2635
    %v2641 = vld [vmem:[#allocation2] sm:$0xff]
    %v2642 = vld [vmem:[#allocation2 + $0x8] sm:$0xff]
    %v2643 = vld [vmem:[#allocation2 + $0x10] sm:$0xff]
    %v2644 = vld [vmem:[#allocation2 + $0x18] sm:$0xff]
    %v2645 = vld [vmem:[#allocation2 + $0x20] sm:$0x7]
    %v2646 = vld [vmem:[%s2] sm:$0x1]
    %v2648 = vlaneseq
    %v2649 = vshrl.u32 %v2648, 7
    %v2650 = vsub.s32 0, %v2649
    %v2651 = vrot.slane %v2646, %v2650
    %v2653 = vadd.f32 %v2641, %v2651
    %v2654 = vadd.f32 %v2642, %v2651
    %v2655 = vadd.f32 %v2643, %v2651
    %v2656 = vadd.f32 %v2644, %v2651
    %v2657 = vadd.f32 %v2645, %v2651
    %v2658 = vsel %vm438, %v2653, 0.0
    %v2659 = vsel %vm438, %v2654, 0.0
    %v2660 = vadd.f32 %v2658, %v2659
    %v2661 = vsel %vm438, %v2655, 0.0
    %v2662 = vadd.f32 %v2660, %v2661
    %v2663 = vsel %vm438, %v2656, 0.0
    %v2664 = vadd.f32 %v2662, %v2663
    %v2665 = vsel %vm443, %v2657, 0.0
    %v2666 = vadd.f32 %v2664, %v2665
    %v2667 = vrot.slane %v2666, 4
    %v2668 = vadd.f32 %v2666, %v2667
    %v2669 = vrot.slane %v2668, 2
    %v2670 = vadd.f32 %v2668, %v2669
    %v2671 = vrot.slane %v2670, 1
    %v2672 = vadd.f32 %v2670, %v2671
    %vm2673 = vcmask 40960
    %2674 = vst.msk [vmem:[#allocation3] sm:$0x1] %vm2673, %v2672
    %v2675 = vmul.f32 %v2653, %v2653
    %v2676 = vmul.f32 %v2654, %v2654
    %v2677 = vmul.f32 %v2655, %v2655
    %v2678 = vmul.f32 %v2656, %v2656
    %v2679 = vmul.f32 %v2657, %v2657
    %v2680 = vsel %vm438, %v2675, 0.0
    %v2681 = vsel %vm438, %v2676, 0.0
    %v2682 = vadd.f32 %v2680, %v2681
    %v2683 = vsel %vm438, %v2677, 0.0
    %v2684 = vadd.f32 %v2682, %v2683
    %v2685 = vsel %vm438, %v2678, 0.0
    %v2686 = vadd.f32 %v2684, %v2685
    %v2687 = vsel %vm443, %v2679, 0.0
    %v2688 = vadd.f32 %v2686, %v2687
    %v2689 = vrot.slane %v2688, 4
    %v2690 = vadd.f32 %v2688, %v2689
    %v2691 = vrot.slane %v2690, 2
    %v2692 = vadd.f32 %v2690, %v2691
    %v2693 = vrot.slane %v2692, 1
    %v2694 = vadd.f32 %v2692, %v2693
    %2695 = vst.msk [vmem:[#allocation5] sm:$0x1] %vm2673, %v2694
    %v2701 = vcombine.high %v2653, %v2653
    %v2703 = vunpack.c.l.s4 1966171168
    %v2704 = vunpack.c.0.s8 %v2703
    %v2705 = vlaneseq
    %v2706 = vshrl.u32 %v2705, 7
    %v2707 = vsub.s32 %v2704, %v2706
    %v2708 = vrot.slane %v2653, %v2707
    %v2710 = vunpack.c.l.s4 1966171168
    %v2711 = vunpack.c.0.s8 %v2710
    %v2712 = vlaneseq
    %v2713 = vshrl.u32 %v2712, 7
    %v2714 = vsub.s32 %v2711, %v2713
    %v2715 = vrot.slane %v2701, %v2714
    %v2716 = vcombine.high %v2708, %v2708
    %v2717 = vcombine.high %v2715, %v2715
    %v2719 = vunpack.c.l.s4 1966171168
    %v2720 = vunpack.c.0.s8 %v2719
    %v2721 = vlaneseq
    %v2722 = vshrl.u32 %v2721, 7
    %v2723 = vsub.s32 %v2720, %v2722
    %v2724 = vrot.slane %v2708, %v2723
    %v2726 = vunpack.c.l.s4 1966171168
    %v2727 = vunpack.c.0.s8 %v2726
    %v2728 = vlaneseq
    %v2729 = vshrl.u32 %v2728, 7
    %v2730 = vsub.s32 %v2727, %v2729
    %v2731 = vrot.slane %v2715, %v2730
    %v2733 = vunpack.c.l.s4 1966171168
    %v2734 = vunpack.c.0.s8 %v2733
    %v2735 = vlaneseq
    %v2736 = vshrl.u32 %v2735, 7
    %v2737 = vsub.s32 %v2734, %v2736
    %v2738 = vrot.slane %v2716, %v2737
    %v2740 = vunpack.c.l.s4 1966171168
    %v2741 = vunpack.c.0.s8 %v2740
    %v2742 = vlaneseq
    %v2743 = vshrl.u32 %v2742, 7
    %v2744 = vsub.s32 %v2741, %v2743
    %v2745 = vrot.slane %v2717, %v2744
    %v2746 = vcombine.high %v2724, %v2724
    %v2747 = vcombine.high %v2731, %v2731
    %v2748 = vcombine.high %v2738, %v2738
    %v2749 = vcombine.high %v2745, %v2745
    %v2750 = vcombine.high %v2654, %v2654
    %v2752 = vunpack.c.l.s4 1966171168
    %v2753 = vunpack.c.0.s8 %v2752
    %v2754 = vlaneseq
    %v2755 = vshrl.u32 %v2754, 7
    %v2756 = vsub.s32 %v2753, %v2755
    %v2757 = vrot.slane %v2654, %v2756
    %v2759 = vunpack.c.l.s4 1966171168
    %v2760 = vunpack.c.0.s8 %v2759
    %v2761 = vlaneseq
    %v2762 = vshrl.u32 %v2761, 7
    %v2763 = vsub.s32 %v2760, %v2762
    %v2764 = vrot.slane %v2750, %v2763
    %v2765 = vcombine.high %v2757, %v2757
    %v2766 = vcombine.high %v2764, %v2764
    %v2768 = vunpack.c.l.s4 1966171168
    %v2769 = vunpack.c.0.s8 %v2768
    %v2770 = vlaneseq
    %v2771 = vshrl.u32 %v2770, 7
    %v2772 = vsub.s32 %v2769, %v2771
    %v2773 = vrot.slane %v2757, %v2772
    %v2775 = vunpack.c.l.s4 1966171168
    %v2776 = vunpack.c.0.s8 %v2775
    %v2777 = vlaneseq
    %v2778 = vshrl.u32 %v2777, 7
    %v2779 = vsub.s32 %v2776, %v2778
    %v2780 = vrot.slane %v2764, %v2779
    %v2782 = vunpack.c.l.s4 1966171168
    %v2783 = vunpack.c.0.s8 %v2782
    %v2784 = vlaneseq
    %v2785 = vshrl.u32 %v2784, 7
    %v2786 = vsub.s32 %v2783, %v2785
    %v2787 = vrot.slane %v2765, %v2786
    %v2789 = vunpack.c.l.s4 1966171168
    %v2790 = vunpack.c.0.s8 %v2789
    %v2791 = vlaneseq
    %v2792 = vshrl.u32 %v2791, 7
    %v2793 = vsub.s32 %v2790, %v2792
    %v2794 = vrot.slane %v2766, %v2793
    %v2795 = vcombine.high %v2773, %v2773
    %v2796 = vcombine.high %v2780, %v2780
    %v2797 = vcombine.high %v2787, %v2787
    %v2798 = vcombine.high %v2794, %v2794
    %v2799 = vcombine.high %v2655, %v2655
    %v2801 = vunpack.c.l.s4 1966171168
    %v2802 = vunpack.c.0.s8 %v2801
    %v2803 = vlaneseq
    %v2804 = vshrl.u32 %v2803, 7
    %v2805 = vsub.s32 %v2802, %v2804
    %v2806 = vrot.slane %v2655, %v2805
    %v2808 = vunpack.c.l.s4 1966171168
    %v2809 = vunpack.c.0.s8 %v2808
    %v2810 = vlaneseq
    %v2811 = vshrl.u32 %v2810, 7
    %v2812 = vsub.s32 %v2809, %v2811
    %v2813 = vrot.slane %v2799, %v2812
    %v2814 = vcombine.high %v2806, %v2806
    %v2815 = vcombine.high %v2813, %v2813
    %v2817 = vunpack.c.l.s4 1966171168
    %v2818 = vunpack.c.0.s8 %v2817
    %v2819 = vlaneseq
    %v2820 = vshrl.u32 %v2819, 7
    %v2821 = vsub.s32 %v2818, %v2820
    %v2822 = vrot.slane %v2806, %v2821
    %v2824 = vunpack.c.l.s4 1966171168
    %v2825 = vunpack.c.0.s8 %v2824
    %v2826 = vlaneseq
    %v2827 = vshrl.u32 %v2826, 7
    %v2828 = vsub.s32 %v2825, %v2827
    %v2829 = vrot.slane %v2813, %v2828
    %v2831 = vunpack.c.l.s4 1966171168
    %v2832 = vunpack.c.0.s8 %v2831
    %v2833 = vlaneseq
    %v2834 = vshrl.u32 %v2833, 7
    %v2835 = vsub.s32 %v2832, %v2834
    %v2836 = vrot.slane %v2814, %v2835
    %v2838 = vunpack.c.l.s4 1966171168
    %v2839 = vunpack.c.0.s8 %v2838
    %v2840 = vlaneseq
    %v2841 = vshrl.u32 %v2840, 7
    %v2842 = vsub.s32 %v2839, %v2841
    %v2843 = vrot.slane %v2815, %v2842
    %v2844 = vcombine.high %v2822, %v2822
    %v2845 = vcombine.high %v2829, %v2829
    %v2846 = vcombine.high %v2836, %v2836
    %v2847 = vcombine.high %v2843, %v2843
    %v2848 = vcombine.high %v2656, %v2656
    %v2850 = vunpack.c.l.s4 1966171168
    %v2851 = vunpack.c.0.s8 %v2850
    %v2852 = vlaneseq
    %v2853 = vshrl.u32 %v2852, 7
    %v2854 = vsub.s32 %v2851, %v2853
    %v2855 = vrot.slane %v2656, %v2854
    %v2857 = vunpack.c.l.s4 1966171168
    %v2858 = vunpack.c.0.s8 %v2857
    %v2859 = vlaneseq
    %v2860 = vshrl.u32 %v2859, 7
    %v2861 = vsub.s32 %v2858, %v2860
    %v2862 = vrot.slane %v2848, %v2861
    %v2863 = vcombine.high %v2855, %v2855
    %v2864 = vcombine.high %v2862, %v2862
    %v2866 = vunpack.c.l.s4 1966171168
    %v2867 = vunpack.c.0.s8 %v2866
    %v2868 = vlaneseq
    %v2869 = vshrl.u32 %v2868, 7
    %v2870 = vsub.s32 %v2867, %v2869
    %v2871 = vrot.slane %v2855, %v2870
    %v2873 = vunpack.c.l.s4 1966171168
    %v2874 = vunpack.c.0.s8 %v2873
    %v2875 = vlaneseq
    %v2876 = vshrl.u32 %v2875, 7
    %v2877 = vsub.s32 %v2874, %v2876
    %v2878 = vrot.slane %v2862, %v2877
    %v2880 = vunpack.c.l.s4 1966171168
    %v2881 = vunpack.c.0.s8 %v2880
    %v2882 = vlaneseq
    %v2883 = vshrl.u32 %v2882, 7
    %v2884 = vsub.s32 %v2881, %v2883
    %v2885 = vrot.slane %v2863, %v2884
    %v2887 = vunpack.c.l.s4 1966171168
    %v2888 = vunpack.c.0.s8 %v2887
    %v2889 = vlaneseq
    %v2890 = vshrl.u32 %v2889, 7
    %v2891 = vsub.s32 %v2888, %v2890
    %v2892 = vrot.slane %v2864, %v2891
    %v2893 = vcombine.high %v2871, %v2871
    %v2894 = vcombine.high %v2878, %v2878
    %v2895 = vcombine.high %v2885, %v2885
    %v2896 = vcombine.high %v2892, %v2892
    %v2898 = vunpack.c.l.s4 1966171168
    %v2899 = vunpack.c.0.s8 %v2898
    %v2900 = vlaneseq
    %v2901 = vshrl.u32 %v2900, 7
    %v2902 = vsub.s32 %v2899, %v2901
    %v2903 = vrot.slane %v2657, %v2902
    %v2904 = vcombine.high %v2903, %v2903
    %v2906 = vunpack.c.l.s4 1966171168
    %v2907 = vunpack.c.0.s8 %v2906
    %v2908 = vlaneseq
    %v2909 = vshrl.u32 %v2908, 7
    %v2910 = vsub.s32 %v2907, %v2909
    %v2911 = vrot.slane %v2903, %v2910
    %v2913 = vunpack.c.l.s4 1966171168
    %v2914 = vunpack.c.0.s8 %v2913
    %v2915 = vlaneseq
    %v2916 = vshrl.u32 %v2915, 7
    %v2917 = vsub.s32 %v2914, %v2916
    %v2918 = vrot.slane %v2904, %v2917
    %v2919 = vcombine.high %v2911, %v2911
    %v2920 = vcombine.low %v2724, %v2738
    %v2921 = vcombine.low %v2746, %v2748
    %v2923 = vunpack.c.l.s4 1966171168
    %v2924 = vunpack.c.0.s8 %v2923
    %v2925 = vlaneseq
    %v2926 = vshrl.u32 %v2925, 7
    %v2927 = vsub.s32 %v2924, %v2926
    %v2928 = vrot.slane %v2920, %v2927
    %v2930 = vunpack.c.l.s4 1966171168
    %v2931 = vunpack.c.0.s8 %v2930
    %v2932 = vlaneseq
    %v2933 = vshrl.u32 %v2932, 7
    %v2934 = vsub.s32 %v2931, %v2933
    %v2935 = vrot.slane %v2921, %v2934
    %v2937 = vunpack.c.l.s4 1966171168
    %v2938 = vunpack.c.0.s8 %v2937
    %v2939 = vlaneseq
    %v2940 = vshrl.u32 %v2939, 7
    %v2941 = vsub.s32 %v2938, %v2940
    %v2942 = vrot.slane %v2731, %v2941
    %v2943 = vcombine.low %v2928, %v2935
    %v2945 = vunpack.c.l.s4 1966171168
    %v2946 = vunpack.c.0.s8 %v2945
    %v2947 = vlaneseq
    %v2948 = vshrl.u32 %v2947, 7
    %v2949 = vsub.s32 %v2946, %v2948
    %v2950 = vrot.slane %v2943, %v2949
    %v2952 = vunpack.c.l.s4 1966171168
    %v2953 = vunpack.c.0.s8 %v2952
    %v2954 = vlaneseq
    %v2955 = vshrl.u32 %v2954, 7
    %v2956 = vsub.s32 %v2953, %v2955
    %v2957 = vrot.slane %v2942, %v2956
    %v2958 = vcombine.low %v2950, %v2957
    %v2959 = vcombine.low %v2745, %v2747
    %v2960 = vcombine.low %v2749, %v2773
    %v2962 = vunpack.c.l.s4 1966171168
    %v2963 = vunpack.c.0.s8 %v2962
    %v2964 = vlaneseq
    %v2965 = vshrl.u32 %v2964, 7
    %v2966 = vsub.s32 %v2963, %v2965
    %v2967 = vrot.slane %v2959, %v2966
    %v2969 = vunpack.c.l.s4 1966171168
    %v2970 = vunpack.c.0.s8 %v2969
    %v2971 = vlaneseq
    %v2972 = vshrl.u32 %v2971, 7
    %v2973 = vsub.s32 %v2970, %v2972
    %v2974 = vrot.slane %v2960, %v2973
    %v2976 = vunpack.c.l.s4 1966171168
    %v2977 = vunpack.c.0.s8 %v2976
    %v2978 = vlaneseq
    %v2979 = vshrl.u32 %v2978, 7
    %v2980 = vsub.s32 %v2977, %v2979
    %v2981 = vrot.slane %v2787, %v2980
    %v2982 = vcombine.low %v2967, %v2974
    %v2984 = vunpack.c.l.s4 1966171168
    %v2985 = vunpack.c.0.s8 %v2984
    %v2986 = vlaneseq
    %v2987 = vshrl.u32 %v2986, 7
    %v2988 = vsub.s32 %v2985, %v2987
    %v2989 = vrot.slane %v2982, %v2988
    %v2991 = vunpack.c.l.s4 1966171168
    %v2992 = vunpack.c.0.s8 %v2991
    %v2993 = vlaneseq
    %v2994 = vshrl.u32 %v2993, 7
    %v2995 = vsub.s32 %v2992, %v2994
    %v2996 = vrot.slane %v2981, %v2995
    %v2997 = vcombine.low %v2989, %v2996
    %v2998 = vcombine.low %v2795, %v2797
    %v2999 = vcombine.low %v2780, %v2794
    %v3001 = vunpack.c.l.s4 1966171168
    %v3002 = vunpack.c.0.s8 %v3001
    %v3003 = vlaneseq
    %v3004 = vshrl.u32 %v3003, 7
    %v3005 = vsub.s32 %v3002, %v3004
    %v3006 = vrot.slane %v2998, %v3005
    %v3008 = vunpack.c.l.s4 1966171168
    %v3009 = vunpack.c.0.s8 %v3008
    %v3010 = vlaneseq
    %v3011 = vshrl.u32 %v3010, 7
    %v3012 = vsub.s32 %v3009, %v3011
    %v3013 = vrot.slane %v2999, %v3012
    %v3015 = vunpack.c.l.s4 1966171168
    %v3016 = vunpack.c.0.s8 %v3015
    %v3017 = vlaneseq
    %v3018 = vshrl.u32 %v3017, 7
    %v3019 = vsub.s32 %v3016, %v3018
    %v3020 = vrot.slane %v2796, %v3019
    %v3021 = vcombine.low %v3006, %v3013
    %v3023 = vunpack.c.l.s4 1966171168
    %v3024 = vunpack.c.0.s8 %v3023
    %v3025 = vlaneseq
    %v3026 = vshrl.u32 %v3025, 7
    %v3027 = vsub.s32 %v3024, %v3026
    %v3028 = vrot.slane %v3021, %v3027
    %v3030 = vunpack.c.l.s4 1966171168
    %v3031 = vunpack.c.0.s8 %v3030
    %v3032 = vlaneseq
    %v3033 = vshrl.u32 %v3032, 7
    %v3034 = vsub.s32 %v3031, %v3033
    %v3035 = vrot.slane %v3020, %v3034
    %v3036 = vcombine.low %v3028, %v3035
    %v3037 = vcombine.low %v2798, %v2822
    %v3038 = vcombine.low %v2836, %v2844
    %v3040 = vunpack.c.l.s4 1966171168
    %v3041 = vunpack.c.0.s8 %v3040
    %v3042 = vlaneseq
    %v3043 = vshrl.u32 %v3042, 7
    %v3044 = vsub.s32 %v3041, %v3043
    %v3045 = vrot.slane %v3037, %v3044
    %v3047 = vunpack.c.l.s4 1966171168
    %v3048 = vunpack.c.0.s8 %v3047
    %v3049 = vlaneseq
    %v3050 = vshrl.u32 %v3049, 7
    %v3051 = vsub.s32 %v3048, %v3050
    %v3052 = vrot.slane %v3038, %v3051
    %v3054 = vunpack.c.l.s4 1966171168
    %v3055 = vunpack.c.0.s8 %v3054
    %v3056 = vlaneseq
    %v3057 = vshrl.u32 %v3056, 7
    %v3058 = vsub.s32 %v3055, %v3057
    %v3059 = vrot.slane %v2846, %v3058
    %v3060 = vcombine.low %v3045, %v3052
    %v3062 = vunpack.c.l.s4 1966171168
    %v3063 = vunpack.c.0.s8 %v3062
    %v3064 = vlaneseq
    %v3065 = vshrl.u32 %v3064, 7
    %v3066 = vsub.s32 %v3063, %v3065
    %v3067 = vrot.slane %v3060, %v3066
    %v3069 = vunpack.c.l.s4 1966171168
    %v3070 = vunpack.c.0.s8 %v3069
    %v3071 = vlaneseq
    %v3072 = vshrl.u32 %v3071, 7
    %v3073 = vsub.s32 %v3070, %v3072
    %v3074 = vrot.slane %v3059, %v3073
    %v3075 = vcombine.low %v3067, %v3074
    %v3076 = vcombine.low %v2829, %v2843
    %v3077 = vcombine.low %v2845, %v2847
    %v3079 = vunpack.c.l.s4 1966171168
    %v3080 = vunpack.c.0.s8 %v3079
    %v3081 = vlaneseq
    %v3082 = vshrl.u32 %v3081, 7
    %v3083 = vsub.s32 %v3080, %v3082
    %v3084 = vrot.slane %v3076, %v3083
    %v3086 = vunpack.c.l.s4 1966171168
    %v3087 = vunpack.c.0.s8 %v3086
    %v3088 = vlaneseq
    %v3089 = vshrl.u32 %v3088, 7
    %v3090 = vsub.s32 %v3087, %v3089
    %v3091 = vrot.slane %v3077, %v3090
    %v3093 = vunpack.c.l.s4 1966171168
    %v3094 = vunpack.c.0.s8 %v3093
    %v3095 = vlaneseq
    %v3096 = vshrl.u32 %v3095, 7
    %v3097 = vsub.s32 %v3094, %v3096
    %v3098 = vrot.slane %v2871, %v3097
    %v3099 = vcombine.low %v3084, %v3091
    %v3101 = vunpack.c.l.s4 1966171168
    %v3102 = vunpack.c.0.s8 %v3101
    %v3103 = vlaneseq
    %v3104 = vshrl.u32 %v3103, 7
    %v3105 = vsub.s32 %v3102, %v3104
    %v3106 = vrot.slane %v3099, %v3105
    %v3108 = vunpack.c.l.s4 1966171168
    %v3109 = vunpack.c.0.s8 %v3108
    %v3110 = vlaneseq
    %v3111 = vshrl.u32 %v3110, 7
    %v3112 = vsub.s32 %v3109, %v3111
    %v3113 = vrot.slane %v3098, %v3112
    %v3114 = vcombine.low %v3106, %v3113
    %v3115 = vcombine.low %v2885, %v2893
    %v3116 = vcombine.low %v2895, %v2878
    %v3118 = vunpack.c.l.s4 1966171168
    %v3119 = vunpack.c.0.s8 %v3118
    %v3120 = vlaneseq
    %v3121 = vshrl.u32 %v3120, 7
    %v3122 = vsub.s32 %v3119, %v3121
    %v3123 = vrot.slane %v3115, %v3122
    %v3125 = vunpack.c.l.s4 1966171168
    %v3126 = vunpack.c.0.s8 %v3125
    %v3127 = vlaneseq
    %v3128 = vshrl.u32 %v3127, 7
    %v3129 = vsub.s32 %v3126, %v3128
    %v3130 = vrot.slane %v3116, %v3129
    %v3132 = vunpack.c.l.s4 1966171168
    %v3133 = vunpack.c.0.s8 %v3132
    %v3134 = vlaneseq
    %v3135 = vshrl.u32 %v3134, 7
    %v3136 = vsub.s32 %v3133, %v3135
    %v3137 = vrot.slane %v2892, %v3136
    %v3138 = vcombine.low %v3123, %v3130
    %v3140 = vunpack.c.l.s4 1966171168
    %v3141 = vunpack.c.0.s8 %v3140
    %v3142 = vlaneseq
    %v3143 = vshrl.u32 %v3142, 7
    %v3144 = vsub.s32 %v3141, %v3143
    %v3145 = vrot.slane %v3138, %v3144
    %v3147 = vunpack.c.l.s4 1966171168
    %v3148 = vunpack.c.0.s8 %v3147
    %v3149 = vlaneseq
    %v3150 = vshrl.u32 %v3149, 7
    %v3151 = vsub.s32 %v3148, %v3150
    %v3152 = vrot.slane %v3137, %v3151
    %v3153 = vcombine.low %v3145, %v3152
    %v3154 = vcombine.low %v2894, %v2896
    %v3155 = vcombine.low %v2911, %v2918
    %v3157 = vunpack.c.l.s4 1966171168
    %v3158 = vunpack.c.0.s8 %v3157
    %v3159 = vlaneseq
    %v3160 = vshrl.u32 %v3159, 7
    %v3161 = vsub.s32 %v3158, %v3160
    %v3162 = vrot.slane %v3154, %v3161
    %v3164 = vunpack.c.l.s4 1966171168
    %v3165 = vunpack.c.0.s8 %v3164
    %v3166 = vlaneseq
    %v3167 = vshrl.u32 %v3166, 7
    %v3168 = vsub.s32 %v3165, %v3167
    %v3169 = vrot.slane %v3155, %v3168
    %v3171 = vunpack.c.l.s4 1966171168
    %v3172 = vunpack.c.0.s8 %v3171
    %v3173 = vlaneseq
    %v3174 = vshrl.u32 %v3173, 7
    %v3175 = vsub.s32 %v3172, %v3174
    %v3176 = vrot.slane %v2919, %v3175
    %v3177 = vcombine.low %v3162, %v3169
    %v3179 = vunpack.c.l.s4 1966171168
    %v3180 = vunpack.c.0.s8 %v3179
    %v3181 = vlaneseq
    %v3182 = vshrl.u32 %v3181, 7
    %v3183 = vsub.s32 %v3180, %v3182
    %v3184 = vrot.slane %v3177, %v3183
    %v3186 = vunpack.c.l.s4 1966171168
    %v3187 = vunpack.c.0.s8 %v3186
    %v3188 = vlaneseq
    %v3189 = vshrl.u32 %v3188, 7
    %v3190 = vsub.s32 %v3187, %v3189
    %v3191 = vrot.slane %v3176, %v3190
    %v3192 = vcombine.low %v3184, %v3191
    %v3200 = vpack.c.bf16 %v2958, %v2958
    %v3201 = vpack.c.bf16 %v2997, %v2997
    %v3202 = vpack.c.bf16 %v3036, %v3036
    %v3203 = vpack.c.bf16 %v3075, %v3075
    %v3204 = vpack.c.bf16 %v3114, %v3114
    %v3205 = vpack.c.bf16 %v3153, %v3153
    %v3206 = vpack.c.bf16 %v3192, %v3192
    %vm3207 = vcmask 43008
    %vm3208 = vsmask.f32 2304
    %vm3209 = vmand %vm3207, %vm3208
    %v3210 = vld [vmem:[%s3] sm:$0x7]
    %v3211 = vsel %vm3209, %v3200, %v3210
    %3212 = vst [vmem:[%s3] sm:$0x7] %v3211
    %v3213 = vld [vmem:[%s3 + $0x4] sm:$0x7]
    %v3214 = vsel %vm3209, %v3201, %v3213
    %3215 = vst [vmem:[%s3 + $0x4] sm:$0x7] %v3214
    %v3216 = vld [vmem:[%s3 + $0x8] sm:$0x7]
    %v3217 = vsel %vm3209, %v3202, %v3216
    %3218 = vst [vmem:[%s3 + $0x8] sm:$0x7] %v3217
    %v3219 = vld [vmem:[%s3 + $0xc] sm:$0x7]
    %v3220 = vsel %vm3209, %v3203, %v3219
    %3221 = vst [vmem:[%s3 + $0xc] sm:$0x7] %v3220
    %v3222 = vld [vmem:[%s3 + $0x10] sm:$0x7]
    %v3223 = vsel %vm3209, %v3204, %v3222
    %3224 = vst [vmem:[%s3 + $0x10] sm:$0x7] %v3223
    %v3225 = vld [vmem:[%s3 + $0x14] sm:$0x7]
    %v3226 = vsel %vm3209, %v3205, %v3225
    %3227 = vst [vmem:[%s3 + $0x14] sm:$0x7] %v3226
    %v3228 = vld [vmem:[%s3 + $0x18] sm:$0x7]
    %v3229 = vsel %vm3209, %v3206, %v3228
    %3230 = vst [vmem:[%s3 + $0x18] sm:$0x7] %v3229
    // Predicated region
    $region14: #{tpu_custom_call.1} parent=1 // pred_check
      _
    $region15: #{tpu_custom_call.1} parent=1 // pred_check_branch
      %3232 = sbr.rel (0) target = $region17
    $region16: #{tpu_custom_call.1} parent=1 // pred_region
      _
    $region17: #{tpu_custom_call.1} parent=1 // pred_fallthru
      _
    // Predicated region
    $region18: #{tpu_custom_call.1} parent=1 // pred_check
      _
    $region19: #{tpu_custom_call.1} parent=1 // pred_check_branch
      %3234 = sbr.rel (0) target = $region21
    $region20: #{tpu_custom_call.1} parent=1 // pred_region
      %s3236 = ssub.s32 16, 16
      %3237 = vsyncadd [#allocation4], %s3236
      %s3239 = sshll.u32 [#allocation3], 4
      %s3240 = int_to_ptr.vmem [resolvable:$true] %s3239
      %3242 = dma.vmem_to_hbm [thread:$0]  %s3240, 16, %s4, [#allocation4]
    $region21: #{tpu_custom_call.1} parent=1 // pred_fallthru
      _
    // Predicated region
    $region22: #{tpu_custom_call.1} parent=1 // pred_check
      _
    $region23: #{tpu_custom_call.1} parent=1 // pred_check_branch
      %3244 = sbr.rel (0) target = $region25
    $region24: #{tpu_custom_call.1} parent=1 // pred_region
      %s3246 = ssub.s32 16, 16
      %3247 = vsyncadd [#allocation6], %s3246
      %s3249 = sshll.u32 [#allocation5], 4
      %s3250 = int_to_ptr.vmem [resolvable:$true] %s3249
      %3252 = dma.vmem_to_hbm [thread:$0]  %s3250, 16, %s5, [#allocation6]
    $region25: #{tpu_custom_call.1} parent=1 // pred_fallthru
      _
    // Predicated region
    $region26: #{tpu_custom_call.1} parent=1 // pred_check
      _
    $region27: #{tpu_custom_call.1} parent=1 // pred_check_branch
      %3254 = sbr.rel (0) target = $region29
    $region28: #{tpu_custom_call.1} parent=1 // pred_region
      _
    $region29: #{tpu_custom_call.1} parent=1 // pred_fallthru
      _
    // Predicated region
    $region30: #{tpu_custom_call.1} parent=1 // pred_check
      _
    $region31: #{tpu_custom_call.1} parent=1 // pred_check_branch
      %3256 = sbr.rel (0) target = $region33
    $region32: #{tpu_custom_call.1} parent=1 // pred_region
      %3257 = dma.done [#allocation4], 16
    $region33: #{tpu_custom_call.1} parent=1 // pred_fallthru
      _
    // Predicated region
    $region34: #{tpu_custom_call.1} parent=1 // pred_check
      _
    $region35: #{tpu_custom_call.1} parent=1 // pred_check_branch
      %3259 = sbr.rel (0) target = $region37
    $region36: #{tpu_custom_call.1} parent=1 // pred_region
      %3260 = dma.done [#allocation6], 16
    $region37: #{tpu_custom_call.1} parent=1 // pred_fallthru
      _
    %3261 = vsyncpa [#allocation4], 1
    %3262 = vsyncpa [#allocation6], 1

</llo_original>
